<compile_context>
chip_gen: v6e
topology: v6e:2x2x1
jax: 0.10.0
libtpu: 0.0.40
codegen_flags: <defaults>
</compile_context>

<pallas_src>
import jax
import jax.numpy as jnp
from jax.experimental import pallas as pl
from jax.experimental.pallas import tpu as pltpu


# ------------------------------ fused kernel --------------------------------

def _cnn_kernel(slab_ref, cw1_ref, pv1_ref, ph1_ref, sel2_ref, cw2_ref,
                pv2_ref, ph2_ref, selh_ref, fw1_ref, fw2_ref, bias_ref,
                out_ref):
    f32 = jnp.float32
    bf16 = jnp.bfloat16

    def mm(a, b):
        return jnp.dot(a, b, preferred_element_type=f32)

    bias = bias_ref[...]                                     # (4, 192) f32

    # conv1 (K-merged, batch-stacked): (NB*24,140)@(140,192) + bias + relu
    y1 = jnp.maximum(mm(slab_ref[...], cw1_ref[...]) + bias[0:1, :],
                     0.0).astype(bf16)                       # (NB*24, 192)

    # maxpool1: vertical = block-diag row selections, horizontal = lane sel.
    v1 = jnp.maximum(mm(pv1_ref[0], y1), mm(pv1_ref[1], y1)).astype(bf16)
    z1 = jnp.maximum(mm(v1, ph1_ref[0]), mm(v1, ph1_ref[1])).astype(bf16)
    # z1: (NB*12, 128) -- lanes 96..127 are zero padding.

    # conv2: build K-merged slab via 5 row-window selections, one K=640 dot.
    slab2 = jnp.concatenate(
        [mm(sel2_ref[k], z1).astype(bf16) for k in range(5)], axis=-1)
    y2 = jnp.maximum(mm(slab2, cw2_ref[...]) + bias[1:2, :128],
                     0.0).astype(bf16)                       # (NB*8, 128)

    # maxpool2
    v2 = jnp.maximum(mm(pv2_ref[0], y2), mm(pv2_ref[1], y2)).astype(bf16)
    z2 = jnp.maximum(mm(v2, ph2_ref[0]), mm(v2, ph2_ref[1])).astype(bf16)
    # z2: (NB*4, 128) -- lanes 64..127 zero.

    # flatten (torch (c,h,w) order folded into fw1) -> (NB, 512), one fc1 dot.
    fcin = jnp.concatenate(
        [mm(selh_ref[h], z2).astype(bf16) for h in range(4)], axis=-1)
    h1 = jnp.maximum(mm(fcin, fw1_ref[...]) + bias[2:3, :32],
                     0.0).astype(bf16)                       # (NB, 32)

    # fc2 padded to 128 output lanes (cols 10..127 of fw2/bias are zero).
    out_ref[...] = jnp.maximum(mm(h1, fw2_ref[...]) + bias[3:4, :128], 0.0)


# -------------------- one-time weight / constant preparation ----------------

def _rowsel_bd(nb, rows_out, rows_in, stride, offset):
    """Block-diagonal 0/1 matrix (nb*rows_out, nb*rows_in):
    out row b*rows_out+i selects in row b*rows_in + stride*i + offset."""
    r_out = jnp.arange(nb * rows_out)
    tgt = (r_out // rows_out) * rows_in + stride * (r_out % rows_out) + offset
    r_in = jnp.arange(nb * rows_in)
    return (r_in[None, :] == tgt[:, None]).astype(jnp.bfloat16)


def _lane_pool_sel(lanes_in, group, offset, lanes_out, real_out):
    """(lanes_in, lanes_out) 0/1 matrix: out lane w*group+c (< real_out) picks
    in lane (2*w+offset)*group + c; padded output lanes are all-zero."""
    l_in = jnp.arange(lanes_in)[:, None]
    l_out = jnp.arange(lanes_out)[None, :]
    tgt = (2 * (l_out // group) + offset) * group + (l_out % group)
    m = (l_in == tgt) & (l_out < real_out)
    return m.astype(jnp.bfloat16)


def prepare_params(params, nb):
    """Rearrange torch-layout params into MXU-friendly bf16 kernel operands.
    Done once, outside the jitted forward. `nb` = images per grid step."""
    f32, bf16 = jnp.float32, jnp.bfloat16

    # conv1 banded weights, K-merged: cw1m[ki*28 + w_in, ow*8 + co]
    w1r = params["w1"].reshape(8, 5, 5).transpose(1, 2, 0).astype(f32)
    m1 = (jnp.arange(28)[None, :, None] ==
          jnp.arange(24)[None, None, :] + jnp.arange(5)[:, None, None]
          ).astype(f32)
    cw1m = jnp.einsum("jwo,ijc->iwoc", m1, w1r).reshape(140, 192).astype(bf16)

    # conv2 banded weights, K-merged (each ki block padded 96->128 lanes):
    # cw2m[ki*128 + w_in*8 + ci, ow*16 + co]
    w2r = params["w2"].transpose(2, 3, 1, 0).astype(f32)
    m2 = (jnp.arange(12)[None, :, None] ==
          jnp.arange(8)[None, None, :] + jnp.arange(5)[:, None, None]
          ).astype(f32)
    cw2 = jnp.einsum("jwo,ijcd->iwcod", m2, w2r).reshape(5, 96, 128)
    cw2m = jnp.pad(cw2, ((0, 0), (0, 32), (0, 0))).reshape(640, 128).astype(bf16)

    # pooling / row-window selection matrices (exact 0/1)
    pv1 = jnp.stack([_rowsel_bd(nb, 12, 24, 2, 0),
                     _rowsel_bd(nb, 12, 24, 2, 1)])           # (2, nb*12, nb*24)
    ph1 = jnp.stack([_lane_pool_sel(192, 8, 0, 128, 96),
                     _lane_pool_sel(192, 8, 1, 128, 96)])     # (2, 192, 128)
    sel2 = jnp.stack([_rowsel_bd(nb, 8, 12, 1, k) for k in range(5)])
    pv2 = jnp.stack([_rowsel_bd(nb, 4, 8, 2, 0),
                     _rowsel_bd(nb, 4, 8, 2, 1)])             # (2, nb*4, nb*8)
    ph2 = jnp.stack([_lane_pool_sel(128, 16, 0, 128, 64),
                     _lane_pool_sel(128, 16, 1, 128, 64)])    # (2, 128, 128)
    selh = jnp.stack([_rowsel_bd(nb, 1, 4, 1, h) for h in range(4)])

    # fc1: torch (c,h,w) flatten order folded into fw1m[h*128 + w*16 + c, j]
    fw1 = (params["fc1_w"].astype(f32).reshape(32, 16, 4, 4)
           .transpose(2, 3, 1, 0).reshape(4, 64, 32))
    fw1m = jnp.pad(fw1, ((0, 0), (0, 64), (0, 0))).reshape(512, 32).astype(bf16)

    # fc2 padded to 128 output lanes
    fw2p = jnp.zeros((32, 128), f32).at[:, :10].set(
        params["fc2_w"].astype(f32).T).astype(bf16)

    # all biases in one f32 slab
    bias = jnp.zeros((4, 192), f32)
    bias = bias.at[0, :192].set(jnp.tile(params["b1"].astype(f32), 24))
    bias = bias.at[1, :128].set(jnp.tile(params["b2"].astype(f32), 8))
    bias = bias.at[2, :32].set(params["fc1_b"].astype(f32))
    bias = bias.at[3, :10].set(params["fc2_b"].astype(f32))

    return (cw1m, pv1, ph1, sel2, cw2m, pv2, ph2, selh, fw1m, fw2p, bias)


# --------------------------------- forward ----------------------------------

def cnn_net0_forward(x_nchw, prep, nb=8):
    """x_nchw: (B, 1, 28, 28) float32 (PyTorch NCHW). Returns (B, 10)."""
    B, C, H, W = x_nchw.shape
    assert (C, H, W) == (1, 28, 28)
    x = x_nchw.reshape(B, 28, 28).astype(jnp.float32)

    Bp = ((B + nb - 1) // nb) * nb
    if Bp != B:
        x = jnp.pad(x, ((0, Bp - B), (0, 0), (0, 0)))

    # K-merged conv1 input slab: row b*24+oh, lane ki*28+w = x[b, oh+ki, w]
    slab = jnp.concatenate([x[:, ki:ki + 24, :] for ki in range(5)], axis=2)
    slab = slab.reshape(Bp * 24, 140).astype(jnp.bfloat16)

    grid = (Bp // nb,)
    in_specs = [pl.BlockSpec((nb * 24, 140), lambda b: (b, 0))]
    for arr in prep:   # full-array, grid-invariant blocks (stay VMEM-resident)
        in_specs.append(
            pl.BlockSpec(arr.shape, lambda b, _nd=arr.ndim: (0,) * _nd))

    flops_step = 2 * ((nb * 24) * 140 * 192            # conv1
                      + 2 * (nb * 12) * (nb * 24) * 192   # pool1 vertical
                      + 2 * (nb * 12) * 192 * 128          # pool1 horizontal
                      + 5 * (nb * 8) * (nb * 12) * 128     # conv2 row windows
                      + (nb * 8) * 640 * 128               # conv2
                      + 2 * (nb * 4) * (nb * 8) * 128      # pool2 vertical
                      + 2 * (nb * 4) * 128 * 128           # pool2 horizontal
                      + 4 * nb * (nb * 4) * 128            # fc1 row gather
                      + nb * 512 * 32 + nb * 32 * 128)     # fc1, fc2
    flops = flops_step * (Bp // nb)
    bytes_accessed = (slab.size * 2
                      + sum(int(a.size) * a.dtype.itemsize for a in prep)
                      + Bp * 128 * 4)

    out = pl.pallas_call(
        _cnn_kernel,
        out_shape=jax.ShapeDtypeStruct((Bp, 128), jnp.float32),
        grid=grid,
        in_specs=in_specs,
        out_specs=pl.BlockSpec((nb, 128), lambda b: (b, 0)),
        compiler_params=pltpu.CompilerParams(
            dimension_semantics=("parallel",)),
        cost_estimate=pl.CostEstimate(
            flops=flops, transcendentals=0, bytes_accessed=bytes_accessed),
    )(slab, *prep)
    return out[:B, :10]


# ---------------------------- parameter init --------------------------------

def init_params(key):
    """Deterministic torch-style init (uniform +-1/sqrt(fan_in)), torch layouts."""
    ks = jax.random.split(key, 8)

    def u(k, shape, fan_in):
        bound = 1.0 / (fan_in ** 0.5)
        return jax.random.uniform(k, shape, jnp.float32, -bound, bound)

    return {
        "w1": u(ks[0], (8, 1, 5, 5), 1 * 5 * 5),
        "b1": u(ks[1], (8,), 1 * 5 * 5),
        "w2": u(ks[2], (16, 8, 5, 5), 8 * 5 * 5),
        "b2": u(ks[3], (16,), 8 * 5 * 5),
        "fc1_w": u(ks[4], (32, 256), 256),
        "fc1_b": u(ks[5], (32,), 256),
        "fc2_w": u(ks[6], (10, 32), 32),
        "fc2_b": u(ks[7], (32,), 32)[:10] * 0 + u(ks[7], (10,), 32),
    }


# ----------------------------------- main ------------------------------------

if __name__ == "__main__":
    key = jax.random.PRNGKey(0)
    k_param, k_x = jax.random.split(key)

    params = init_params(k_param)
    NB = 8                                   # images per grid step
    prep = prepare_params(params, NB)        # one-time weight re-layout

    # CNN_Net0's fc1 (16*4*4 inputs) implies a 28x28 single-channel input.
    x = jax.random.normal(k_x, (2, 1, 28, 28), dtype=jnp.float32)

    fwd = jax.jit(cnn_net0_forward)
    out = jax.block_until_ready(fwd(x, prep))
    assert out.shape == (2, 10) and out.dtype == jnp.float32
    assert bool(jnp.all(jnp.isfinite(out)))
    print("KERNEL_OK")
</pallas_src>

<mosaic_0001>
module attributes {stable_mosaic.version = 11 : i64} {
  func.func @_cnn_kernel(%arg0: i32, %arg1: memref<192x140xbf16, #tpu.memory_space<vmem>>, %arg2: memref<140x192xbf16, #tpu.memory_space<vmem>>, %arg3: memref<2x96x192xbf16, #tpu.memory_space<vmem>>, %arg4: memref<2x192x128xbf16, #tpu.memory_space<vmem>>, %arg5: memref<5x64x96xbf16, #tpu.memory_space<vmem>>, %arg6: memref<640x128xbf16, #tpu.memory_space<vmem>>, %arg7: memref<2x32x64xbf16, #tpu.memory_space<vmem>>, %arg8: memref<2x128x128xbf16, #tpu.memory_space<vmem>>, %arg9: memref<4x8x32xbf16, #tpu.memory_space<vmem>>, %arg10: memref<512x32xbf16, #tpu.memory_space<vmem>>, %arg11: memref<32x128xbf16, #tpu.memory_space<vmem>>, %arg12: memref<4x192xf32, #tpu.memory_space<vmem>>, %arg13: memref<8x128xf32, #tpu.memory_space<vmem>>) attributes {dimension_semantics = [#tpu.dimension_semantics<parallel>], iteration_bounds = array<i64: 1>, scalar_prefetch = 0 : i64, scratch_operands = 0 : i64, tpu.core_type = #tpu.core_type<tc>, window_params = [{transform_indices = @transform_0, window_bounds = array<i64: 192, 140>}, {pipeline_mode = #tpu.pipeline_mode<synchronous>, transform_indices = @transform_1, window_bounds = array<i64: 140, 192>}, {pipeline_mode = #tpu.pipeline_mode<synchronous>, transform_indices = @transform_2, window_bounds = array<i64: 2, 96, 192>}, {pipeline_mode = #tpu.pipeline_mode<synchronous>, transform_indices = @transform_3, window_bounds = array<i64: 2, 192, 128>}, {pipeline_mode = #tpu.pipeline_mode<synchronous>, transform_indices = @transform_4, window_bounds = array<i64: 5, 64, 96>}, {pipeline_mode = #tpu.pipeline_mode<synchronous>, transform_indices = @transform_5, window_bounds = array<i64: 640, 128>}, {pipeline_mode = #tpu.pipeline_mode<synchronous>, transform_indices = @transform_6, window_bounds = array<i64: 2, 32, 64>}, {pipeline_mode = #tpu.pipeline_mode<synchronous>, transform_indices = @transform_7, window_bounds = array<i64: 2, 128, 128>}, {pipeline_mode = #tpu.pipeline_mode<synchronous>, transform_indices = @transform_8, window_bounds = array<i64: 4, 8, 32>}, {pipeline_mode = #tpu.pipeline_mode<synchronous>, transform_indices = @transform_9, window_bounds = array<i64: 512, 32>}, {pipeline_mode = #tpu.pipeline_mode<synchronous>, transform_indices = @transform_10, window_bounds = array<i64: 32, 128>}, {pipeline_mode = #tpu.pipeline_mode<synchronous>, transform_indices = @transform_11, window_bounds = array<i64: 4, 192>}, {transform_indices = @transform_12, window_bounds = array<i64: 8, 128>}]} {
    %c0 = arith.constant 0 : index
    %c0_0 = arith.constant 0 : index
    %0 = vector.load %arg12[%c0, %c0_0] : memref<4x192xf32, #tpu.memory_space<vmem>>, vector<4x192xf32>
    %c0_1 = arith.constant 0 : index
    %c0_2 = arith.constant 0 : index
    %1 = vector.load %arg1[%c0_1, %c0_2] : memref<192x140xbf16, #tpu.memory_space<vmem>>, vector<192x140xbf16>
    %c0_3 = arith.constant 0 : index
    %c0_4 = arith.constant 0 : index
    %2 = vector.load %arg2[%c0_3, %c0_4] : memref<140x192xbf16, #tpu.memory_space<vmem>>, vector<140x192xbf16>
    %cst = arith.constant dense<0.000000e+00> : vector<192x192xf32>
    %3 = tpu.matmul %1, %2, %cst {dimension_numbers = #tpu.dot_dimension_numbers<[1], [0], [0], [1], [0, 0, 1, 1], [], []>} : vector<192x140xbf16>, vector<140x192xbf16>, vector<192x192xf32> -> vector<192x192xf32>
    %4 = vector.extract_strided_slice %0 {offsets = [0, 0], sizes = [1, 192], strides = [1, 1]} : vector<4x192xf32> to vector<1x192xf32>
    %5 = vector.broadcast %4 : vector<1x192xf32> to vector<192x192xf32>
    %6 = arith.addf %3, %5 : vector<192x192xf32>
    %cst_5 = arith.constant 0.000000e+00 : f32
    %7 = vector.broadcast %cst_5 : f32 to vector<192x192xf32>
    %8 = arith.maximumf %6, %7 : vector<192x192xf32>
    %9 = arith.truncf %8 : vector<192x192xf32> to vector<192x192xbf16>
    %c0_6 = arith.constant 0 : index
    %c0_7 = arith.constant 0 : index
    %c0_8 = arith.constant 0 : index
    %10 = vector.load %arg3[%c0_6, %c0_7, %c0_8] : memref<2x96x192xbf16, #tpu.memory_space<vmem>>, vector<1x96x192xbf16>
    %11 = vector.shape_cast %10 : vector<1x96x192xbf16> to vector<96x192xbf16>
    %cst_9 = arith.constant dense<0.000000e+00> : vector<96x192xf32>
    %12 = tpu.matmul %11, %9, %cst_9 {dimension_numbers = #tpu.dot_dimension_numbers<[1], [0], [0], [1], [0, 0, 1, 1], [], []>} : vector<96x192xbf16>, vector<192x192xbf16>, vector<96x192xf32> -> vector<96x192xf32>
    %c1 = arith.constant 1 : index
    %c0_10 = arith.constant 0 : index
    %c0_11 = arith.constant 0 : index
    %13 = vector.load %arg3[%c1, %c0_10, %c0_11] : memref<2x96x192xbf16, #tpu.memory_space<vmem>>, vector<1x96x192xbf16>
    %14 = vector.shape_cast %13 : vector<1x96x192xbf16> to vector<96x192xbf16>
    %cst_12 = arith.constant dense<0.000000e+00> : vector<96x192xf32>
    %15 = tpu.matmul %14, %9, %cst_12 {dimension_numbers = #tpu.dot_dimension_numbers<[1], [0], [0], [1], [0, 0, 1, 1], [], []>} : vector<96x192xbf16>, vector<192x192xbf16>, vector<96x192xf32> -> vector<96x192xf32>
    %16 = arith.maximumf %12, %15 : vector<96x192xf32>
    %17 = arith.truncf %16 : vector<96x192xf32> to vector<96x192xbf16>
    %c0_13 = arith.constant 0 : index
    %c0_14 = arith.constant 0 : index
    %c0_15 = arith.constant 0 : index
    %18 = vector.load %arg4[%c0_13, %c0_14, %c0_15] : memref<2x192x128xbf16, #tpu.memory_space<vmem>>, vector<1x192x128xbf16>
    %19 = vector.shape_cast %18 : vector<1x192x128xbf16> to vector<192x128xbf16>
    %cst_16 = arith.constant dense<0.000000e+00> : vector<96x128xf32>
    %20 = tpu.matmul %17, %19, %cst_16 {dimension_numbers = #tpu.dot_dimension_numbers<[1], [0], [0], [1], [0, 0, 1, 1], [], []>} : vector<96x192xbf16>, vector<192x128xbf16>, vector<96x128xf32> -> vector<96x128xf32>
    %c1_17 = arith.constant 1 : index
    %c0_18 = arith.constant 0 : index
    %c0_19 = arith.constant 0 : index
    %21 = vector.load %arg4[%c1_17, %c0_18, %c0_19] : memref<2x192x128xbf16, #tpu.memory_space<vmem>>, vector<1x192x128xbf16>
    %22 = vector.shape_cast %21 : vector<1x192x128xbf16> to vector<192x128xbf16>
    %cst_20 = arith.constant dense<0.000000e+00> : vector<96x128xf32>
    %23 = tpu.matmul %17, %22, %cst_20 {dimension_numbers = #tpu.dot_dimension_numbers<[1], [0], [0], [1], [0, 0, 1, 1], [], []>} : vector<96x192xbf16>, vector<192x128xbf16>, vector<96x128xf32> -> vector<96x128xf32>
    %24 = arith.maximumf %20, %23 : vector<96x128xf32>
    %25 = arith.truncf %24 : vector<96x128xf32> to vector<96x128xbf16>
    %c0_21 = arith.constant 0 : index
    %c0_22 = arith.constant 0 : index
    %c0_23 = arith.constant 0 : index
    %26 = vector.load %arg5[%c0_21, %c0_22, %c0_23] : memref<5x64x96xbf16, #tpu.memory_space<vmem>>, vector<1x64x96xbf16>
    %27 = vector.shape_cast %26 : vector<1x64x96xbf16> to vector<64x96xbf16>
    %cst_24 = arith.constant dense<0.000000e+00> : vector<64x128xf32>
    %28 = tpu.matmul %27, %25, %cst_24 {dimension_numbers = #tpu.dot_dimension_numbers<[1], [0], [0], [1], [0, 0, 1, 1], [], []>} : vector<64x96xbf16>, vector<96x128xbf16>, vector<64x128xf32> -> vector<64x128xf32>
    %29 = arith.truncf %28 : vector<64x128xf32> to vector<64x128xbf16>
    %c1_25 = arith.constant 1 : index
    %c0_26 = arith.constant 0 : index
    %c0_27 = arith.constant 0 : index
    %30 = vector.load %arg5[%c1_25, %c0_26, %c0_27] : memref<5x64x96xbf16, #tpu.memory_space<vmem>>, vector<1x64x96xbf16>
    %31 = vector.shape_cast %30 : vector<1x64x96xbf16> to vector<64x96xbf16>
    %cst_28 = arith.constant dense<0.000000e+00> : vector<64x128xf32>
    %32 = tpu.matmul %31, %25, %cst_28 {dimension_numbers = #tpu.dot_dimension_numbers<[1], [0], [0], [1], [0, 0, 1, 1], [], []>} : vector<64x96xbf16>, vector<96x128xbf16>, vector<64x128xf32> -> vector<64x128xf32>
    %33 = arith.truncf %32 : vector<64x128xf32> to vector<64x128xbf16>
    %c2 = arith.constant 2 : index
    %c0_29 = arith.constant 0 : index
    %c0_30 = arith.constant 0 : index
    %34 = vector.load %arg5[%c2, %c0_29, %c0_30] : memref<5x64x96xbf16, #tpu.memory_space<vmem>>, vector<1x64x96xbf16>
    %35 = vector.shape_cast %34 : vector<1x64x96xbf16> to vector<64x96xbf16>
    %cst_31 = arith.constant dense<0.000000e+00> : vector<64x128xf32>
    %36 = tpu.matmul %35, %25, %cst_31 {dimension_numbers = #tpu.dot_dimension_numbers<[1], [0], [0], [1], [0, 0, 1, 1], [], []>} : vector<64x96xbf16>, vector<96x128xbf16>, vector<64x128xf32> -> vector<64x128xf32>
    %37 = arith.truncf %36 : vector<64x128xf32> to vector<64x128xbf16>
    %c3 = arith.constant 3 : index
    %c0_32 = arith.constant 0 : index
    %c0_33 = arith.constant 0 : index
    %38 = vector.load %arg5[%c3, %c0_32, %c0_33] : memref<5x64x96xbf16, #tpu.memory_space<vmem>>, vector<1x64x96xbf16>
    %39 = vector.shape_cast %38 : vector<1x64x96xbf16> to vector<64x96xbf16>
    %cst_34 = arith.constant dense<0.000000e+00> : vector<64x128xf32>
    %40 = tpu.matmul %39, %25, %cst_34 {dimension_numbers = #tpu.dot_dimension_numbers<[1], [0], [0], [1], [0, 0, 1, 1], [], []>} : vector<64x96xbf16>, vector<96x128xbf16>, vector<64x128xf32> -> vector<64x128xf32>
    %41 = arith.truncf %40 : vector<64x128xf32> to vector<64x128xbf16>
    %c4 = arith.constant 4 : index
    %c0_35 = arith.constant 0 : index
    %c0_36 = arith.constant 0 : index
    %42 = vector.load %arg5[%c4, %c0_35, %c0_36] : memref<5x64x96xbf16, #tpu.memory_space<vmem>>, vector<1x64x96xbf16>
    %43 = vector.shape_cast %42 : vector<1x64x96xbf16> to vector<64x96xbf16>
    %cst_37 = arith.constant dense<0.000000e+00> : vector<64x128xf32>
    %44 = tpu.matmul %43, %25, %cst_37 {dimension_numbers = #tpu.dot_dimension_numbers<[1], [0], [0], [1], [0, 0, 1, 1], [], []>} : vector<64x96xbf16>, vector<96x128xbf16>, vector<64x128xf32> -> vector<64x128xf32>
    %45 = arith.truncf %44 : vector<64x128xf32> to vector<64x128xbf16>
    %46 = tpu.concatenate %29, %33, %37, %41, %45 in 1 : vector<64x128xbf16>, vector<64x128xbf16>, vector<64x128xbf16>, vector<64x128xbf16>, vector<64x128xbf16> -> vector<64x640xbf16>
    %c0_38 = arith.constant 0 : index
    %c0_39 = arith.constant 0 : index
    %47 = vector.load %arg6[%c0_38, %c0_39] : memref<640x128xbf16, #tpu.memory_space<vmem>>, vector<640x128xbf16>
    %cst_40 = arith.constant dense<0.000000e+00> : vector<64x128xf32>
    %48 = tpu.matmul %46, %47, %cst_40 {dimension_numbers = #tpu.dot_dimension_numbers<[1], [0], [0], [1], [0, 0, 1, 1], [], []>} : vector<64x640xbf16>, vector<640x128xbf16>, vector<64x128xf32> -> vector<64x128xf32>
    %49 = vector.extract_strided_slice %0 {offsets = [1, 0], sizes = [1, 128], strides = [1, 1]} : vector<4x192xf32> to vector<1x128xf32>
    %50 = vector.broadcast %49 : vector<1x128xf32> to vector<64x128xf32>
    %51 = arith.addf %48, %50 : vector<64x128xf32>
    %cst_41 = arith.constant 0.000000e+00 : f32
    %52 = vector.broadcast %cst_41 : f32 to vector<64x128xf32>
    %53 = arith.maximumf %51, %52 : vector<64x128xf32>
    %54 = arith.truncf %53 : vector<64x128xf32> to vector<64x128xbf16>
    %c0_42 = arith.constant 0 : index
    %c0_43 = arith.constant 0 : index
    %c0_44 = arith.constant 0 : index
    %55 = vector.load %arg7[%c0_42, %c0_43, %c0_44] : memref<2x32x64xbf16, #tpu.memory_space<vmem>>, vector<1x32x64xbf16>
    %56 = vector.shape_cast %55 : vector<1x32x64xbf16> to vector<32x64xbf16>
    %cst_45 = arith.constant dense<0.000000e+00> : vector<32x128xf32>
    %57 = tpu.matmul %56, %54, %cst_45 {dimension_numbers = #tpu.dot_dimension_numbers<[1], [0], [0], [1], [0, 0, 1, 1], [], []>} : vector<32x64xbf16>, vector<64x128xbf16>, vector<32x128xf32> -> vector<32x128xf32>
    %c1_46 = arith.constant 1 : index
    %c0_47 = arith.constant 0 : index
    %c0_48 = arith.constant 0 : index
    %58 = vector.load %arg7[%c1_46, %c0_47, %c0_48] : memref<2x32x64xbf16, #tpu.memory_space<vmem>>, vector<1x32x64xbf16>
    %59 = vector.shape_cast %58 : vector<1x32x64xbf16> to vector<32x64xbf16>
    %cst_49 = arith.constant dense<0.000000e+00> : vector<32x128xf32>
    %60 = tpu.matmul %59, %54, %cst_49 {dimension_numbers = #tpu.dot_dimension_numbers<[1], [0], [0], [1], [0, 0, 1, 1], [], []>} : vector<32x64xbf16>, vector<64x128xbf16>, vector<32x128xf32> -> vector<32x128xf32>
    %61 = arith.maximumf %57, %60 : vector<32x128xf32>
    %62 = arith.truncf %61 : vector<32x128xf32> to vector<32x128xbf16>
    %c0_50 = arith.constant 0 : index
    %c0_51 = arith.constant 0 : index
    %c0_52 = arith.constant 0 : index
    %63 = vector.load %arg8[%c0_50, %c0_51, %c0_52] : memref<2x128x128xbf16, #tpu.memory_space<vmem>>, vector<1x128x128xbf16>
    %64 = vector.shape_cast %63 : vector<1x128x128xbf16> to vector<128x128xbf16>
    %cst_53 = arith.constant dense<0.000000e+00> : vector<32x128xf32>
    %65 = tpu.matmul %62, %64, %cst_53 {dimension_numbers = #tpu.dot_dimension_numbers<[1], [0], [0], [1], [0, 0, 1, 1], [], []>} : vector<32x128xbf16>, vector<128x128xbf16>, vector<32x128xf32> -> vector<32x128xf32>
    %c1_54 = arith.constant 1 : index
    %c0_55 = arith.constant 0 : index
    %c0_56 = arith.constant 0 : index
    %66 = vector.load %arg8[%c1_54, %c0_55, %c0_56] : memref<2x128x128xbf16, #tpu.memory_space<vmem>>, vector<1x128x128xbf16>
    %67 = vector.shape_cast %66 : vector<1x128x128xbf16> to vector<128x128xbf16>
    %cst_57 = arith.constant dense<0.000000e+00> : vector<32x128xf32>
    %68 = tpu.matmul %62, %67, %cst_57 {dimension_numbers = #tpu.dot_dimension_numbers<[1], [0], [0], [1], [0, 0, 1, 1], [], []>} : vector<32x128xbf16>, vector<128x128xbf16>, vector<32x128xf32> -> vector<32x128xf32>
    %69 = arith.maximumf %65, %68 : vector<32x128xf32>
    %70 = arith.truncf %69 : vector<32x128xf32> to vector<32x128xbf16>
    %c0_58 = arith.constant 0 : index
    %c0_59 = arith.constant 0 : index
    %c0_60 = arith.constant 0 : index
    %71 = vector.load %arg9[%c0_58, %c0_59, %c0_60] : memref<4x8x32xbf16, #tpu.memory_space<vmem>>, vector<1x8x32xbf16>
    %72 = vector.shape_cast %71 : vector<1x8x32xbf16> to vector<8x32xbf16>
    %cst_61 = arith.constant dense<0.000000e+00> : vector<8x128xf32>
    %73 = tpu.matmul %72, %70, %cst_61 {dimension_numbers = #tpu.dot_dimension_numbers<[1], [0], [0], [1], [0, 0, 1, 1], [], []>} : vector<8x32xbf16>, vector<32x128xbf16>, vector<8x128xf32> -> vector<8x128xf32>
    %74 = arith.truncf %73 : vector<8x128xf32> to vector<8x128xbf16>
    %c1_62 = arith.constant 1 : index
    %c0_63 = arith.constant 0 : index
    %c0_64 = arith.constant 0 : index
    %75 = vector.load %arg9[%c1_62, %c0_63, %c0_64] : memref<4x8x32xbf16, #tpu.memory_space<vmem>>, vector<1x8x32xbf16>
    %76 = vector.shape_cast %75 : vector<1x8x32xbf16> to vector<8x32xbf16>
    %cst_65 = arith.constant dense<0.000000e+00> : vector<8x128xf32>
    %77 = tpu.matmul %76, %70, %cst_65 {dimension_numbers = #tpu.dot_dimension_numbers<[1], [0], [0], [1], [0, 0, 1, 1], [], []>} : vector<8x32xbf16>, vector<32x128xbf16>, vector<8x128xf32> -> vector<8x128xf32>
    %78 = arith.truncf %77 : vector<8x128xf32> to vector<8x128xbf16>
    %c2_66 = arith.constant 2 : index
    %c0_67 = arith.constant 0 : index
    %c0_68 = arith.constant 0 : index
    %79 = vector.load %arg9[%c2_66, %c0_67, %c0_68] : memref<4x8x32xbf16, #tpu.memory_space<vmem>>, vector<1x8x32xbf16>
    %80 = vector.shape_cast %79 : vector<1x8x32xbf16> to vector<8x32xbf16>
    %cst_69 = arith.constant dense<0.000000e+00> : vector<8x128xf32>
    %81 = tpu.matmul %80, %70, %cst_69 {dimension_numbers = #tpu.dot_dimension_numbers<[1], [0], [0], [1], [0, 0, 1, 1], [], []>} : vector<8x32xbf16>, vector<32x128xbf16>, vector<8x128xf32> -> vector<8x128xf32>
    %82 = arith.truncf %81 : vector<8x128xf32> to vector<8x128xbf16>
    %c3_70 = arith.constant 3 : index
    %c0_71 = arith.constant 0 : index
    %c0_72 = arith.constant 0 : index
    %83 = vector.load %arg9[%c3_70, %c0_71, %c0_72] : memref<4x8x32xbf16, #tpu.memory_space<vmem>>, vector<1x8x32xbf16>
    %84 = vector.shape_cast %83 : vector<1x8x32xbf16> to vector<8x32xbf16>
    %cst_73 = arith.constant dense<0.000000e+00> : vector<8x128xf32>
    %85 = tpu.matmul %84, %70, %cst_73 {dimension_numbers = #tpu.dot_dimension_numbers<[1], [0], [0], [1], [0, 0, 1, 1], [], []>} : vector<8x32xbf16>, vector<32x128xbf16>, vector<8x128xf32> -> vector<8x128xf32>
    %86 = arith.truncf %85 : vector<8x128xf32> to vector<8x128xbf16>
    %87 = tpu.concatenate %74, %78, %82, %86 in 1 : vector<8x128xbf16>, vector<8x128xbf16>, vector<8x128xbf16>, vector<8x128xbf16> -> vector<8x512xbf16>
    %c0_74 = arith.constant 0 : index
    %c0_75 = arith.constant 0 : index
    %88 = vector.load %arg10[%c0_74, %c0_75] : memref<512x32xbf16, #tpu.memory_space<vmem>>, vector<512x32xbf16>
    %cst_76 = arith.constant dense<0.000000e+00> : vector<8x32xf32>
    %89 = tpu.matmul %87, %88, %cst_76 {dimension_numbers = #tpu.dot_dimension_numbers<[1], [0], [0], [1], [0, 0, 1, 1], [], []>} : vector<8x512xbf16>, vector<512x32xbf16>, vector<8x32xf32> -> vector<8x32xf32>
    %90 = vector.extract_strided_slice %0 {offsets = [2, 0], sizes = [1, 32], strides = [1, 1]} : vector<4x192xf32> to vector<1x32xf32>
    %91 = vector.broadcast %90 : vector<1x32xf32> to vector<8x32xf32>
    %92 = arith.addf %89, %91 : vector<8x32xf32>
    %cst_77 = arith.constant 0.000000e+00 : f32
    %93 = vector.broadcast %cst_77 : f32 to vector<8x32xf32>
    %94 = arith.maximumf %92, %93 : vector<8x32xf32>
    %95 = arith.truncf %94 : vector<8x32xf32> to vector<8x32xbf16>
    %c0_78 = arith.constant 0 : index
    %c0_79 = arith.constant 0 : index
    %96 = vector.load %arg11[%c0_78, %c0_79] : memref<32x128xbf16, #tpu.memory_space<vmem>>, vector<32x128xbf16>
    %cst_80 = arith.constant dense<0.000000e+00> : vector<8x128xf32>
    %97 = tpu.matmul %95, %96, %cst_80 {dimension_numbers = #tpu.dot_dimension_numbers<[1], [0], [0], [1], [0, 0, 1, 1], [], []>} : vector<8x32xbf16>, vector<32x128xbf16>, vector<8x128xf32> -> vector<8x128xf32>
    %98 = vector.extract_strided_slice %0 {offsets = [3, 0], sizes = [1, 128], strides = [1, 1]} : vector<4x192xf32> to vector<1x128xf32>
    %99 = vector.broadcast %98 : vector<1x128xf32> to vector<8x128xf32>
    %100 = arith.addf %97, %99 : vector<8x128xf32>
    %cst_81 = arith.constant 0.000000e+00 : f32
    %101 = vector.broadcast %cst_81 : f32 to vector<8x128xf32>
    %102 = arith.maximumf %100, %101 : vector<8x128xf32>
    %c0_82 = arith.constant 0 : index
    %c0_83 = arith.constant 0 : index
    %103 = vector.load %arg13[%c0_82, %c0_83] : memref<8x128xf32, #tpu.memory_space<vmem>>, vector<8x128xf32>
    tpu.vector_store %arg13[%c0_82, %c0_83], %102 {strides = array<i32>} : memref<8x128xf32, #tpu.memory_space<vmem>>, vector<8x128xf32>,
    return
  }
  func.func @transform_0(%arg0: i32) -> (i32, i32) {
    %c0_i32 = arith.constant 0 : i32
    %c0_i32_0 = arith.constant 0 : i32
    return %arg0, %c0_i32 : i32, i32
  }
  func.func @transform_1(%arg0: i32) -> (i32, i32) {
    %c0_i32 = arith.constant 0 : i32
    %c0_i32_0 = arith.constant 0 : i32
    %c0_i32_1 = arith.constant 0 : i32
    return %c0_i32, %c0_i32_0 : i32, i32
  }
  func.func @transform_2(%arg0: i32) -> (i32, i32, i32) {
    %c0_i32 = arith.constant 0 : i32
    %c0_i32_0 = arith.constant 0 : i32
    %c0_i32_1 = arith.constant 0 : i32
    %c0_i32_2 = arith.constant 0 : i32
    return %c0_i32, %c0_i32_0, %c0_i32_1 : i32, i32, i32
  }
  func.func @transform_3(%arg0: i32) -> (i32, i32, i32) {
    %c0_i32 = arith.constant 0 : i32
    %c0_i32_0 = arith.constant 0 : i32
    %c0_i32_1 = arith.constant 0 : i32
    %c0_i32_2 = arith.constant 0 : i32
    return %c0_i32, %c0_i32_0, %c0_i32_1 : i32, i32, i32
  }
  func.func @transform_4(%arg0: i32) -> (i32, i32, i32) {
    %c0_i32 = arith.constant 0 : i32
    %c0_i32_0 = arith.constant 0 : i32
    %c0_i32_1 = arith.constant 0 : i32
    %c0_i32_2 = arith.constant 0 : i32
    return %c0_i32, %c0_i32_0, %c0_i32_1 : i32, i32, i32
  }
  func.func @transform_5(%arg0: i32) -> (i32, i32) {
    %c0_i32 = arith.constant 0 : i32
    %c0_i32_0 = arith.constant 0 : i32
    %c0_i32_1 = arith.constant 0 : i32
    return %c0_i32, %c0_i32_0 : i32, i32
  }
  func.func @transform_6(%arg0: i32) -> (i32, i32, i32) {
    %c0_i32 = arith.constant 0 : i32
    %c0_i32_0 = arith.constant 0 : i32
    %c0_i32_1 = arith.constant 0 : i32
    %c0_i32_2 = arith.constant 0 : i32
    return %c0_i32, %c0_i32_0, %c0_i32_1 : i32, i32, i32
  }
  func.func @transform_7(%arg0: i32) -> (i32, i32, i32) {
    %c0_i32 = arith.constant 0 : i32
    %c0_i32_0 = arith.constant 0 : i32
    %c0_i32_1 = arith.constant 0 : i32
    %c0_i32_2 = arith.constant 0 : i32
    return %c0_i32, %c0_i32_0, %c0_i32_1 : i32, i32, i32
  }
  func.func @transform_8(%arg0: i32) -> (i32, i32, i32) {
    %c0_i32 = arith.constant 0 : i32
    %c0_i32_0 = arith.constant 0 : i32
    %c0_i32_1 = arith.constant 0 : i32
    %c0_i32_2 = arith.constant 0 : i32
    return %c0_i32, %c0_i32_0, %c0_i32_1 : i32, i32, i32
  }
  func.func @transform_9(%arg0: i32) -> (i32, i32) {
    %c0_i32 = arith.constant 0 : i32
    %c0_i32_0 = arith.constant 0 : i32
    %c0_i32_1 = arith.constant 0 : i32
    return %c0_i32, %c0_i32_0 : i32, i32
  }
  func.func @transform_10(%arg0: i32) -> (i32, i32) {
    %c0_i32 = arith.constant 0 : i32
    %c0_i32_0 = arith.constant 0 : i32
    %c0_i32_1 = arith.constant 0 : i32
    return %c0_i32, %c0_i32_0 : i32, i32
  }
  func.func @transform_11(%arg0: i32) -> (i32, i32) {
    %c0_i32 = arith.constant 0 : i32
    %c0_i32_0 = arith.constant 0 : i32
    %c0_i32_1 = arith.constant 0 : i32
    return %c0_i32, %c0_i32_0 : i32, i32
  }
  func.func @transform_12(%arg0: i32) -> (i32, i32) {
    %c0_i32 = arith.constant 0 : i32
    %c0_i32_0 = arith.constant 0 : i32
    return %arg0, %c0_i32 : i32, i32
  }
}

</mosaic_0001>

<llo_original>
// kernel: cnn_net0_forward.1
$region0: #{cnn_net0_forward.1}
  #allocation0 [shape = 'u32[]', space=smem, size = 0x4, offset = 0x4, fixed_abs, tag = 'smem constant byte address 0x4 - core index']
  #allocation1 [shape = 'u32[144,128]{1,0:T(1,128)}', space=vmem, size = 0x12000, scoped, tag = 'internal scratch']
  %s0 = inlined_call_operand.vmem [shape: bf16[192,140], index: 0, kind: input, shape index: {}]
  %s1 = inlined_call_operand.vmem [shape: bf16[140,192], index: 1, kind: input, shape index: {}]
  %s2 = inlined_call_operand.vmem [shape: bf16[2,96,192], index: 2, kind: input, shape index: {}]
  %s3 = inlined_call_operand.vmem [shape: bf16[2,192,128], index: 3, kind: input, shape index: {}]
  %s4 = inlined_call_operand.vmem [shape: bf16[5,64,96], index: 4, kind: input, shape index: {}]
  %s5 = inlined_call_operand.vmem [shape: bf16[640,128], index: 5, kind: input, shape index: {}]
  %s6 = inlined_call_operand.vmem [shape: bf16[2,32,64], index: 6, kind: input, shape index: {}]
  %s7 = inlined_call_operand.vmem [shape: bf16[2,128,128], index: 7, kind: input, shape index: {}]
  %s8 = inlined_call_operand.vmem [shape: bf16[4,8,32], index: 8, kind: input, shape index: {}]
  %s9 = inlined_call_operand.vmem [shape: bf16[512,32], index: 9, kind: input, shape index: {}]
  %s10 = inlined_call_operand.vmem [shape: bf16[32,128], index: 10, kind: input, shape index: {}]
  %s11 = inlined_call_operand.vmem [shape: f32[4,192], index: 11, kind: input, shape index: {}]
  %s12 = inlined_call_operand.vmem [shape: f32[8,128], index: 12, kind: output, shape index: {}]
  %s13 = sld [smem:[#allocation0]]
  $region58: #{cnn_net0_forward.1} parent=0
    _
  %s15 = ssub.s32 1, %s13
  %s16 = scalar_select 0, %s15, %s13
  // Predicated region
  $region2: #{cnn_net0_forward.1} parent=0 // pred_check
    _
  $region3: #{cnn_net0_forward.1} parent=0 // pred_check_branch
    %18 = sbr.rel (0) target = $region5
  $region4: #{cnn_net0_forward.1} parent=0 // pred_region
    _
  $region5: #{cnn_net0_forward.1} parent=0 // pred_fallthru
    _
  // Predicated region
  $region6: #{cnn_net0_forward.1} parent=0 // pred_check
    _
  $region7: #{cnn_net0_forward.1} parent=0 // pred_check_branch
    %20 = sbr.rel (0) target = $region9
  $region8: #{cnn_net0_forward.1} parent=0 // pred_region
    _
  $region9: #{cnn_net0_forward.1} parent=0 // pred_fallthru
    _
  // Predicated region
  $region10: #{cnn_net0_forward.1} parent=0 // pred_check
    _
  $region11: #{cnn_net0_forward.1} parent=0 // pred_check_branch
    %22 = sbr.rel (0) target = $region13
  $region12: #{cnn_net0_forward.1} parent=0 // pred_region
    _
  $region13: #{cnn_net0_forward.1} parent=0 // pred_fallthru
    _
  // Predicated region
  $region14: #{cnn_net0_forward.1} parent=0 // pred_check
    _
  $region15: #{cnn_net0_forward.1} parent=0 // pred_check_branch
    %24 = sbr.rel (0) target = $region17
  $region16: #{cnn_net0_forward.1} parent=0 // pred_region
    _
  $region17: #{cnn_net0_forward.1} parent=0 // pred_fallthru
    _
  // Predicated region
  $region18: #{cnn_net0_forward.1} parent=0 // pred_check
    _
  $region19: #{cnn_net0_forward.1} parent=0 // pred_check_branch
    %26 = sbr.rel (0) target = $region21
  $region20: #{cnn_net0_forward.1} parent=0 // pred_region
    _
  $region21: #{cnn_net0_forward.1} parent=0 // pred_fallthru
    _
  // Predicated region
  $region22: #{cnn_net0_forward.1} parent=0 // pred_check
    _
  $region23: #{cnn_net0_forward.1} parent=0 // pred_check_branch
    %28 = sbr.rel (0) target = $region25
  $region24: #{cnn_net0_forward.1} parent=0 // pred_region
    _
  $region25: #{cnn_net0_forward.1} parent=0 // pred_fallthru
    _
  // Predicated region
  $region26: #{cnn_net0_forward.1} parent=0 // pred_check
    _
  $region27: #{cnn_net0_forward.1} parent=0 // pred_check_branch
    %30 = sbr.rel (0) target = $region29
  $region28: #{cnn_net0_forward.1} parent=0 // pred_region
    _
  $region29: #{cnn_net0_forward.1} parent=0 // pred_fallthru
    _
  // Predicated region
  $region30: #{cnn_net0_forward.1} parent=0 // pred_check
    _
  $region31: #{cnn_net0_forward.1} parent=0 // pred_check_branch
    %32 = sbr.rel (0) target = $region33
  $region32: #{cnn_net0_forward.1} parent=0 // pred_region
    _
  $region33: #{cnn_net0_forward.1} parent=0 // pred_fallthru
    _
  // Predicated region
  $region34: #{cnn_net0_forward.1} parent=0 // pred_check
    _
  $region35: #{cnn_net0_forward.1} parent=0 // pred_check_branch
    %34 = sbr.rel (0) target = $region37
  $region36: #{cnn_net0_forward.1} parent=0 // pred_region
    _
  $region37: #{cnn_net0_forward.1} parent=0 // pred_fallthru
    _
  // Predicated region
  $region38: #{cnn_net0_forward.1} parent=0 // pred_check
    _
  $region39: #{cnn_net0_forward.1} parent=0 // pred_check_branch
    %36 = sbr.rel (0) target = $region41
  $region40: #{cnn_net0_forward.1} parent=0 // pred_region
    _
  $region41: #{cnn_net0_forward.1} parent=0 // pred_fallthru
    _
  // Predicated region
  $region42: #{cnn_net0_forward.1} parent=0 // pred_check
    _
  $region43: #{cnn_net0_forward.1} parent=0 // pred_check_branch
    %38 = sbr.rel (0) target = $region45
  $region44: #{cnn_net0_forward.1} parent=0 // pred_region
    _
  $region45: #{cnn_net0_forward.1} parent=0 // pred_fallthru
    _
  // Predicated region
  $region46: #{cnn_net0_forward.1} parent=0 // pred_check
    _
  $region47: #{cnn_net0_forward.1} parent=0 // pred_check_branch
    %40 = sbr.rel (0) target = $region49
  $region48: #{cnn_net0_forward.1} parent=0 // pred_region
    _
  $region49: #{cnn_net0_forward.1} parent=0 // pred_fallthru
    _
  %v42 = vld [vmem:[%s11] sm:$0xff]
  %v43 = vld [vmem:[%s0] sm:$0xff]
  %v44 = vld [vmem:[%s0 + $0x8] sm:$0xff]
  %v45 = vld [vmem:[%s0 + $0x10] sm:$0xff]
  %v46 = vld [vmem:[%s0 + $0x18] sm:$0xff]
  %v47 = vld [vmem:[%s0 + $0x20] sm:$0xff]
  %v48 = vld [vmem:[%s0 + $0x28] sm:$0xff]
  %v49 = vld [vmem:[%s0 + $0x30] sm:$0xff]
  %v50 = vld [vmem:[%s0 + $0x38] sm:$0xff]
  %v51 = vld [vmem:[%s0 + $0x40] sm:$0xff]
  %v52 = vld [vmem:[%s0 + $0x48] sm:$0xff]
  %v53 = vld [vmem:[%s0 + $0x50] sm:$0xff]
  %v54 = vld [vmem:[%s0 + $0x58] sm:$0xff]
  %v55 = vld [vmem:[%s0 + $0x60] sm:$0xff]
  %v56 = vld [vmem:[%s0 + $0x68] sm:$0xff]
  %v57 = vld [vmem:[%s0 + $0x70] sm:$0xff]
  %v58 = vld [vmem:[%s0 + $0x78] sm:$0xff]
  %v59 = vld [vmem:[%s0 + $0x80] sm:$0xff]
  %v60 = vld [vmem:[%s0 + $0x88] sm:$0xff]
  %v61 = vld [vmem:[%s0 + $0x90] sm:$0xff]
  %v62 = vld [vmem:[%s0 + $0x98] sm:$0xff]
  %v63 = vld [vmem:[%s0 + $0xa0] sm:$0xff]
  %v64 = vld [vmem:[%s0 + $0xa8] sm:$0xff]
  %v65 = vld [vmem:[%s0 + $0xb0] sm:$0xff]
  %v66 = vld [vmem:[%s0 + $0xb8] sm:$0xff]
  %v67 = vld [vmem:[%s1] sm:$0xff]
  %v68 = vld [vmem:[%s1 + $0x8] sm:$0xff]
  %v69 = vld [vmem:[%s1 + $0x10] sm:$0xff]
  %v70 = vld [vmem:[%s1 + $0x18] sm:$0xff]
  %v71 = vld [vmem:[%s1 + $0x20] sm:$0xff]
  %v72 = vld [vmem:[%s1 + $0x28] sm:$0xff]
  %v73 = vld [vmem:[%s1 + $0x30] sm:$0xff]
  %v74 = vld [vmem:[%s1 + $0x38] sm:$0xff]
  %v75 = vld [vmem:[%s1 + $0x40] sm:$0xff]
  %v76 = vld [vmem:[%s1 + $0x48] sm:$0xff]
  %v77 = vld [vmem:[%s1 + $0x50] sm:$0xff]
  %v78 = vld [vmem:[%s1 + $0x58] sm:$0xff]
  %v79 = vld [vmem:[%s1 + $0x60] sm:$0xff]
  %v80 = vld [vmem:[%s1 + $0x68] sm:$0xff]
  %v81 = vld [vmem:[%s1 + $0x70] sm:$0xff]
  %v82 = vld [vmem:[%s1 + $0x78] sm:$0xff]
  %v83 = vld [vmem:[%s1 + $0x80] sm:$0xff]
  %v84 = vld [vmem:[%s1 + $0x88] sm:$0x33]
  %v86 = vlaneseq
  %v87 = vshrl.u32 %v86, 7
  %v88 = vsub.s32 0, %v87
  %v89 = vrot.slane %v42, %v88
  %v90 = vlaneseq
  %v91 = vshrl.u32 %v90, 7
  %v92 = vsub.s32 4, %v91
  %v93 = vrot.slane %v42, %v92
  %v96 = vlaneseq
  %v97 = vshrl.u32 %v96, 7
  %v98 = vsub.s32 0, %v97
  %v99 = vrot.slane %v89, %v98
  %v100 = vlaneseq
  %v101 = vshrl.u32 %v100, 7
  %v102 = vsub.s32 0, %v101
  %v103 = vrot.slane %v93, %v102
  %v128 = vunpack.c.l.b16 %v43
  %v129 = vunpack.c.h.b16 %v43
  %v130 = vunpack.c.l.b16 %v44
  %v131 = vunpack.c.h.b16 %v44
  %v132 = vunpack.c.l.b16 %v45
  %v133 = vunpack.c.h.b16 %v45
  %v134 = vunpack.c.l.b16 %v46
  %v135 = vunpack.c.h.b16 %v46
  %v136 = vunpack.c.l.b16 %v47
  %v137 = vunpack.c.h.b16 %v47
  %v138 = vunpack.c.l.b16 %v48
  %v139 = vunpack.c.h.b16 %v48
  %v140 = vunpack.c.l.b16 %v49
  %v141 = vunpack.c.h.b16 %v49
  %v142 = vunpack.c.l.b16 %v50
  %v143 = vunpack.c.h.b16 %v50
  %v144 = vunpack.c.l.b16 %v51
  %v145 = vunpack.c.h.b16 %v51
  %v146 = vunpack.c.l.b16 %v52
  %v147 = vunpack.c.h.b16 %v52
  %v148 = vunpack.c.l.b16 %v53
  %v149 = vunpack.c.h.b16 %v53
  %v150 = vunpack.c.l.b16 %v54
  %v151 = vunpack.c.h.b16 %v54
  %v152 = vunpack.c.l.b16 %v55
  %v153 = vunpack.c.h.b16 %v55
  %v154 = vunpack.c.l.b16 %v56
  %v155 = vunpack.c.h.b16 %v56
  %v156 = vunpack.c.l.b16 %v57
  %v157 = vunpack.c.h.b16 %v57
  %v158 = vunpack.c.l.b16 %v58
  %v159 = vunpack.c.h.b16 %v58
  %v160 = vunpack.c.l.b16 %v59
  %v161 = vunpack.c.h.b16 %v59
  %v162 = vunpack.c.l.b16 %v60
  %v163 = vunpack.c.h.b16 %v60
  %v164 = vunpack.c.l.b16 %v61
  %v165 = vunpack.c.h.b16 %v61
  %v166 = vunpack.c.l.b16 %v62
  %v167 = vunpack.c.h.b16 %v62
  %v168 = vunpack.c.l.b16 %v63
  %v169 = vunpack.c.h.b16 %v63
  %v170 = vunpack.c.l.b16 %v64
  %v171 = vunpack.c.h.b16 %v64
  %v172 = vunpack.c.l.b16 %v65
  %v173 = vunpack.c.h.b16 %v65
  %v174 = vunpack.c.l.b16 %v66
  %v175 = vunpack.c.h.b16 %v66
  %v176 = vpack.c.b16 %v130, %v128
  %v177 = vpack.c.b16 %v131, %v129
  %v178 = vpack.c.b16 %v134, %v132
  %v179 = vpack.c.b16 %v135, %v133
  %v180 = vpack.c.b16 %v138, %v136
  %v181 = vpack.c.b16 %v139, %v137
  %v182 = vpack.c.b16 %v142, %v140
  %v183 = vpack.c.b16 %v143, %v141
  %v184 = vpack.c.b16 %v146, %v144
  %v185 = vpack.c.b16 %v147, %v145
  %v186 = vpack.c.b16 %v150, %v148
  %v187 = vpack.c.b16 %v151, %v149
  %v188 = vpack.c.b16 %v154, %v152
  %v189 = vpack.c.b16 %v155, %v153
  %v190 = vpack.c.b16 %v158, %v156
  %v191 = vpack.c.b16 %v159, %v157
  %v192 = vpack.c.b16 %v162, %v160
  %v193 = vpack.c.b16 %v163, %v161
  %v194 = vpack.c.b16 %v166, %v164
  %v195 = vpack.c.b16 %v167, %v165
  %v196 = vpack.c.b16 %v170, %v168
  %v197 = vpack.c.b16 %v171, %v169
  %v198 = vpack.c.b16 %v174, %v172
  %v199 = vpack.c.b16 %v175, %v173
  %v230 = vunpack.c.l.b16 %v67
  %v231 = vunpack.c.h.b16 %v67
  %v232 = vunpack.c.l.b16 %v68
  %v233 = vunpack.c.h.b16 %v68
  %v234 = vunpack.c.l.b16 %v69
  %v235 = vunpack.c.h.b16 %v69
  %v236 = vunpack.c.l.b16 %v70
  %v237 = vunpack.c.h.b16 %v70
  %v238 = vunpack.c.l.b16 %v71
  %v239 = vunpack.c.h.b16 %v71
  %v240 = vunpack.c.l.b16 %v72
  %v241 = vunpack.c.h.b16 %v72
  %v242 = vunpack.c.l.b16 %v73
  %v243 = vunpack.c.h.b16 %v73
  %v244 = vunpack.c.l.b16 %v74
  %v245 = vunpack.c.h.b16 %v74
  %v246 = vunpack.c.l.b16 %v75
  %v247 = vunpack.c.h.b16 %v75
  %v248 = vunpack.c.l.b16 %v76
  %v249 = vunpack.c.h.b16 %v76
  %v250 = vunpack.c.l.b16 %v77
  %v251 = vunpack.c.h.b16 %v77
  %v252 = vunpack.c.l.b16 %v78
  %v253 = vunpack.c.h.b16 %v78
  %v254 = vunpack.c.l.b16 %v79
  %v255 = vunpack.c.h.b16 %v79
  %v256 = vunpack.c.l.b16 %v80
  %v257 = vunpack.c.h.b16 %v80
  %v258 = vunpack.c.l.b16 %v81
  %v259 = vunpack.c.h.b16 %v81
  %v260 = vunpack.c.l.b16 %v82
  %v261 = vunpack.c.h.b16 %v82
  %v262 = vunpack.c.l.b16 %v83
  %v263 = vunpack.c.h.b16 %v83
  %v264 = vunpack.c.l.b16 %v84
  %v265 = vunpack.c.h.b16 %v84
  %v266 = vpack.c.b16 %v232, %v230
  %v267 = vpack.c.b16 %v233, %v231
  %v268 = vpack.c.b16 %v236, %v234
  %v269 = vpack.c.b16 %v237, %v235
  %v270 = vpack.c.b16 %v240, %v238
  %v271 = vpack.c.b16 %v241, %v239
  %v272 = vpack.c.b16 %v244, %v242
  %v273 = vpack.c.b16 %v245, %v243
  %v274 = vpack.c.b16 %v248, %v246
  %v275 = vpack.c.b16 %v249, %v247
  %v276 = vpack.c.b16 %v252, %v250
  %v277 = vpack.c.b16 %v253, %v251
  %v278 = vpack.c.b16 %v256, %v254
  %v279 = vpack.c.b16 %v257, %v255
  %v280 = vpack.c.b16 %v260, %v258
  %v281 = vpack.c.b16 %v261, %v259
  %v282 = vpack.c.b16 %v264, %v262
  %v283 = vpack.c.b16 %v265, %v263
  %vm300 = vcmask 97280
  %v302 = vsel %vm300, %v177, 0
  %v305 = vsel %vm300, %v179, 0
  %v308 = vsel %vm300, %v181, 0
  %v311 = vsel %vm300, %v183, 0
  %v314 = vsel %vm300, %v185, 0
  %v317 = vsel %vm300, %v187, 0
  %v320 = vsel %vm300, %v189, 0
  %v323 = vsel %vm300, %v191, 0
  %v326 = vsel %vm300, %v193, 0
  %v329 = vsel %vm300, %v195, 0
  %v332 = vsel %vm300, %v197, 0
  %v335 = vsel %vm300, %v199, 0
  %vm337 = vcmask 1045504
  %v339 = vsel %vm337, %v282, 0
  %v342 = vsel %vm337, %v283, 0
  %344 = vmatprep.subr.bf16.mxu0 %v281
  %345 = vmatpush1.bf16.msra.mxu0 %v280
  %346 = vmatprep.subr.bf16.mxu0 %v279
  %347 = vmatpush1.bf16.msra.mxu0 %v278
  %348 = vmatprep.subr.bf16.mxu0 %v277
  %349 = vmatpush1.bf16.msra.mxu0 %v276
  %350 = vmatprep.subr.bf16.mxu0 %v275
  %351 = vmatpush1.bf16.msra.mxu0 %v274
  %352 = vmatprep.subr.bf16.mxu0 %v273
  %353 = vmatpush1.bf16.msra.mxu0 %v272
  %354 = vmatprep.subr.bf16.mxu0 %v271
  %355 = vmatpush1.bf16.msra.mxu0 %v270
  %356 = vmatprep.subr.bf16.mxu0 %v269
  %357 = vmatpush1.bf16.msra.mxu0 %v268
  %358 = vmatprep.subr.bf16.mxu0 %v267
  %359 = vmatpush1.bf16.msra.mxu0 %v266
  %360 = vmatprep.subr.bf16.mxu0 0
  %361 = vmatpush2.bf16.msra.mxu0 0
  %362 = vmatprep.subr.bf16.mxu0 0
  %363 = vmatpush2.bf16.msra.mxu0 0
  %364 = vmatprep.subr.bf16.mxu0 0
  %365 = vmatpush2.bf16.msra.mxu0 0
  %366 = vmatprep.subr.bf16.mxu0 0
  %367 = vmatpush2.bf16.msra.mxu0 0
  %368 = vmatprep.subr.bf16.mxu0 0
  %369 = vmatpush2.bf16.msra.mxu0 0
  %370 = vmatprep.subr.bf16.mxu0 0
  %371 = vmatpush2.bf16.msra.mxu0 0
  %372 = vmatprep.subr.bf16.mxu0 0
  %373 = vmatpush2.bf16.msra.mxu0 0
  %374 = vmatprep.subr.bf16.mxu0 %v342
  %375 = vmatpush2.bf16.msra.mxu0 %v339
  %376 = vmatprep.mubr.bf16.mxu0 %v302
  %377 = vmatmul.mubr.bf16.gmra.mxu0 %v176
  %v378 = vpop.f32.mrf.mxu0
  %v379 = vadd.f32 %v99, %v378
  %v380 = vpop.f32.mrf.mxu0
  %v381 = vadd.f32 %v103, %v380
  %v382 = vpop.f32.mrf.mxu0
  %v383 = vadd.f32 %v99, %v382
  %v384 = vpop.f32.mrf.mxu0
  %v385 = vadd.f32 %v103, %v384
  %386 = vmatprep.mubr.bf16.mxu0 %v305
  %387 = vmatmul.mubr.bf16.gmra.mxu0 %v178
  %v388 = vpop.f32.mrf.mxu0
  %v389 = vadd.f32 %v99, %v388
  %v390 = vpop.f32.mrf.mxu0
  %v391 = vadd.f32 %v103, %v390
  %v392 = vpop.f32.mrf.mxu0
  %v393 = vadd.f32 %v99, %v392
  %v394 = vpop.f32.mrf.mxu0
  %v395 = vadd.f32 %v103, %v394
  %396 = vmatprep.mubr.bf16.mxu0 %v308
  %397 = vmatmul.mubr.bf16.gmra.mxu0 %v180
  %v398 = vpop.f32.mrf.mxu0
  %v399 = vadd.f32 %v99, %v398
  %v400 = vpop.f32.mrf.mxu0
  %v401 = vadd.f32 %v103, %v400
  %v402 = vpop.f32.mrf.mxu0
  %v403 = vadd.f32 %v99, %v402
  %v404 = vpop.f32.mrf.mxu0
  %v405 = vadd.f32 %v103, %v404
  %406 = vmatprep.mubr.bf16.mxu0 %v311
  %407 = vmatmul.mubr.bf16.gmra.mxu0 %v182
  %v408 = vpop.f32.mrf.mxu0
  %v409 = vadd.f32 %v99, %v408
  %v410 = vpop.f32.mrf.mxu0
  %v411 = vadd.f32 %v103, %v410
  %v412 = vpop.f32.mrf.mxu0
  %v413 = vadd.f32 %v99, %v412
  %v414 = vpop.f32.mrf.mxu0
  %v415 = vadd.f32 %v103, %v414
  %416 = vmatprep.mubr.bf16.mxu0 %v314
  %417 = vmatmul.mubr.bf16.gmra.mxu0 %v184
  %v418 = vpop.f32.mrf.mxu0
  %v419 = vadd.f32 %v99, %v418
  %v420 = vpop.f32.mrf.mxu0
  %v421 = vadd.f32 %v103, %v420
  %v422 = vpop.f32.mrf.mxu0
  %v423 = vadd.f32 %v99, %v422
  %v424 = vpop.f32.mrf.mxu0
  %v425 = vadd.f32 %v103, %v424
  %426 = vmatprep.mubr.bf16.mxu0 %v317
  %427 = vmatmul.mubr.bf16.gmra.mxu0 %v186
  %v428 = vpop.f32.mrf.mxu0
  %v429 = vadd.f32 %v99, %v428
  %v430 = vpop.f32.mrf.mxu0
  %v431 = vadd.f32 %v103, %v430
  %v432 = vpop.f32.mrf.mxu0
  %v433 = vadd.f32 %v99, %v432
  %v434 = vpop.f32.mrf.mxu0
  %v435 = vadd.f32 %v103, %v434
  %436 = vmatprep.mubr.bf16.mxu0 %v320
  %437 = vmatmul.mubr.bf16.gmra.mxu0 %v188
  %v438 = vpop.f32.mrf.mxu0
  %v439 = vadd.f32 %v99, %v438
  %v440 = vpop.f32.mrf.mxu0
  %v441 = vadd.f32 %v103, %v440
  %v442 = vpop.f32.mrf.mxu0
  %v443 = vadd.f32 %v99, %v442
  %v444 = vpop.f32.mrf.mxu0
  %v445 = vadd.f32 %v103, %v444
  %446 = vmatprep.mubr.bf16.mxu0 %v323
  %447 = vmatmul.mubr.bf16.gmra.mxu0 %v190
  %v448 = vpop.f32.mrf.mxu0
  %v449 = vadd.f32 %v99, %v448
  %v450 = vpop.f32.mrf.mxu0
  %v451 = vadd.f32 %v103, %v450
  %v452 = vpop.f32.mrf.mxu0
  %v453 = vadd.f32 %v99, %v452
  %v454 = vpop.f32.mrf.mxu0
  %v455 = vadd.f32 %v103, %v454
  %456 = vmatprep.mubr.bf16.mxu0 %v326
  %457 = vmatmul.mubr.bf16.gmra.mxu0 %v192
  %v458 = vpop.f32.mrf.mxu0
  %v459 = vadd.f32 %v99, %v458
  %v460 = vpop.f32.mrf.mxu0
  %v461 = vadd.f32 %v103, %v460
  %v462 = vpop.f32.mrf.mxu0
  %v463 = vadd.f32 %v99, %v462
  %v464 = vpop.f32.mrf.mxu0
  %v465 = vadd.f32 %v103, %v464
  %466 = vmatprep.mubr.bf16.mxu0 %v329
  %467 = vmatmul.mubr.bf16.gmra.mxu0 %v194
  %v468 = vpop.f32.mrf.mxu0
  %v469 = vadd.f32 %v99, %v468
  %v470 = vpop.f32.mrf.mxu0
  %v471 = vadd.f32 %v103, %v470
  %v472 = vpop.f32.mrf.mxu0
  %v473 = vadd.f32 %v99, %v472
  %v474 = vpop.f32.mrf.mxu0
  %v475 = vadd.f32 %v103, %v474
  %476 = vmatprep.mubr.bf16.mxu0 %v332
  %477 = vmatmul.mubr.bf16.gmra.mxu0 %v196
  %v478 = vpop.f32.mrf.mxu0
  %v479 = vadd.f32 %v99, %v478
  %v480 = vpop.f32.mrf.mxu0
  %v481 = vadd.f32 %v103, %v480
  %v482 = vpop.f32.mrf.mxu0
  %v483 = vadd.f32 %v99, %v482
  %v484 = vpop.f32.mrf.mxu0
  %v485 = vadd.f32 %v103, %v484
  %486 = vmatprep.mubr.bf16.mxu0 %v335
  %487 = vmatmul.mubr.bf16.gmra.mxu0 %v198
  %v488 = vpop.f32.mrf.mxu0
  %v489 = vadd.f32 %v99, %v488
  %v490 = vpop.f32.mrf.mxu0
  %v491 = vadd.f32 %v103, %v490
  %v492 = vpop.f32.mrf.mxu0
  %v493 = vadd.f32 %v99, %v492
  %v494 = vpop.f32.mrf.mxu0
  %v495 = vadd.f32 %v103, %v494
  %496 = vdwg.mxu0
  %v497 = vmax.f32 %v379, 0.0
  %v498 = vmax.f32 %v381, 0.0
  %v499 = vmax.f32 %v383, 0.0
  %v500 = vmax.f32 %v385, 0.0
  %v501 = vmax.f32 %v389, 0.0
  %v502 = vmax.f32 %v391, 0.0
  %v503 = vmax.f32 %v393, 0.0
  %v504 = vmax.f32 %v395, 0.0
  %v505 = vmax.f32 %v399, 0.0
  %v506 = vmax.f32 %v401, 0.0
  %v507 = vmax.f32 %v403, 0.0
  %v508 = vmax.f32 %v405, 0.0
  %v509 = vmax.f32 %v409, 0.0
  %v510 = vmax.f32 %v411, 0.0
  %v511 = vmax.f32 %v413, 0.0
  %v512 = vmax.f32 %v415, 0.0
  %v513 = vmax.f32 %v419, 0.0
  %v514 = vmax.f32 %v421, 0.0
  %v515 = vmax.f32 %v423, 0.0
  %v516 = vmax.f32 %v425, 0.0
  %v517 = vmax.f32 %v429, 0.0
  %v518 = vmax.f32 %v431, 0.0
  %v519 = vmax.f32 %v433, 0.0
  %v520 = vmax.f32 %v435, 0.0
  %v521 = vmax.f32 %v439, 0.0
  %v522 = vmax.f32 %v441, 0.0
  %v523 = vmax.f32 %v443, 0.0
  %v524 = vmax.f32 %v445, 0.0
  %v525 = vmax.f32 %v449, 0.0
  %v526 = vmax.f32 %v451, 0.0
  %v527 = vmax.f32 %v453, 0.0
  %v528 = vmax.f32 %v455, 0.0
  %v529 = vmax.f32 %v459, 0.0
  %v530 = vmax.f32 %v461, 0.0
  %v531 = vmax.f32 %v463, 0.0
  %v532 = vmax.f32 %v465, 0.0
  %v533 = vmax.f32 %v469, 0.0
  %v534 = vmax.f32 %v471, 0.0
  %v535 = vmax.f32 %v473, 0.0
  %v536 = vmax.f32 %v475, 0.0
  %v537 = vmax.f32 %v479, 0.0
  %v538 = vmax.f32 %v481, 0.0
  %v539 = vmax.f32 %v483, 0.0
  %v540 = vmax.f32 %v485, 0.0
  %v541 = vmax.f32 %v489, 0.0
  %v542 = vmax.f32 %v491, 0.0
  %v543 = vmax.f32 %v493, 0.0
  %v544 = vmax.f32 %v495, 0.0
  %v545 = vpack.c.bf16 %v499, %v497
  %v546 = vpack.c.bf16 %v500, %v498
  %v547 = vpack.c.bf16 %v503, %v501
  %v548 = vpack.c.bf16 %v504, %v502
  %v549 = vpack.c.bf16 %v507, %v505
  %v550 = vpack.c.bf16 %v508, %v506
  %v551 = vpack.c.bf16 %v511, %v509
  %v552 = vpack.c.bf16 %v512, %v510
  %v553 = vpack.c.bf16 %v515, %v513
  %v554 = vpack.c.bf16 %v516, %v514
  %v555 = vpack.c.bf16 %v519, %v517
  %v556 = vpack.c.bf16 %v520, %v518
  %v557 = vpack.c.bf16 %v523, %v521
  %v558 = vpack.c.bf16 %v524, %v522
  %v559 = vpack.c.bf16 %v527, %v525
  %v560 = vpack.c.bf16 %v528, %v526
  %v561 = vpack.c.bf16 %v531, %v529
  %v562 = vpack.c.bf16 %v532, %v530
  %v563 = vpack.c.bf16 %v535, %v533
  %v564 = vpack.c.bf16 %v536, %v534
  %v565 = vpack.c.bf16 %v539, %v537
  %v566 = vpack.c.bf16 %v540, %v538
  %v567 = vpack.c.bf16 %v543, %v541
  %v568 = vpack.c.bf16 %v544, %v542
  %v569 = vld [vmem:[%s2] sm:$0xff]
  %v570 = vld [vmem:[%s2 + $0x8] sm:$0xff]
  %v571 = vld [vmem:[%s2 + $0x10] sm:$0xff]
  %v572 = vld [vmem:[%s2 + $0x18] sm:$0xff]
  %v573 = vld [vmem:[%s2 + $0x20] sm:$0xff]
  %v574 = vld [vmem:[%s2 + $0x28] sm:$0xff]
  %v575 = vld [vmem:[%s2 + $0x30] sm:$0xff]
  %v576 = vld [vmem:[%s2 + $0x38] sm:$0xff]
  %v577 = vld [vmem:[%s2 + $0x40] sm:$0xff]
  %v578 = vld [vmem:[%s2 + $0x48] sm:$0xff]
  %v579 = vld [vmem:[%s2 + $0x50] sm:$0xff]
  %v580 = vld [vmem:[%s2 + $0x58] sm:$0xff]
  %v593 = vunpack.c.l.b16 %v569
  %v594 = vunpack.c.h.b16 %v569
  %v595 = vunpack.c.l.b16 %v570
  %v596 = vunpack.c.h.b16 %v570
  %v597 = vunpack.c.l.b16 %v571
  %v598 = vunpack.c.h.b16 %v571
  %v599 = vunpack.c.l.b16 %v572
  %v600 = vunpack.c.h.b16 %v572
  %v601 = vunpack.c.l.b16 %v573
  %v602 = vunpack.c.h.b16 %v573
  %v603 = vunpack.c.l.b16 %v574
  %v604 = vunpack.c.h.b16 %v574
  %v605 = vunpack.c.l.b16 %v575
  %v606 = vunpack.c.h.b16 %v575
  %v607 = vunpack.c.l.b16 %v576
  %v608 = vunpack.c.h.b16 %v576
  %v609 = vunpack.c.l.b16 %v577
  %v610 = vunpack.c.h.b16 %v577
  %v611 = vunpack.c.l.b16 %v578
  %v612 = vunpack.c.h.b16 %v578
  %v613 = vunpack.c.l.b16 %v579
  %v614 = vunpack.c.h.b16 %v579
  %v615 = vunpack.c.l.b16 %v580
  %v616 = vunpack.c.h.b16 %v580
  %v617 = vpack.c.b16 %v595, %v593
  %v618 = vpack.c.b16 %v596, %v594
  %v619 = vpack.c.b16 %v599, %v597
  %v620 = vpack.c.b16 %v600, %v598
  %v621 = vpack.c.b16 %v603, %v601
  %v622 = vpack.c.b16 %v604, %v602
  %v623 = vpack.c.b16 %v607, %v605
  %v624 = vpack.c.b16 %v608, %v606
  %v625 = vpack.c.b16 %v611, %v609
  %v626 = vpack.c.b16 %v612, %v610
  %v627 = vpack.c.b16 %v615, %v613
  %v628 = vpack.c.b16 %v616, %v614
  %vm635 = vcmask 523264
  %v637 = vsel %vm635, %v618, 0
  %v640 = vsel %vm635, %v620, 0
  %v643 = vsel %vm635, %v622, 0
  %v646 = vsel %vm635, %v624, 0
  %v649 = vsel %vm635, %v626, 0
  %v652 = vsel %vm635, %v628, 0
  %654 = vmatprep.subr.bf16.mxu0 %v560
  %655 = vmatpush1.bf16.msra.mxu0 %v559
  %656 = vmatprep.subr.bf16.mxu0 %v558
  %657 = vmatpush1.bf16.msra.mxu0 %v557
  %658 = vmatprep.subr.bf16.mxu0 %v556
  %659 = vmatpush1.bf16.msra.mxu0 %v555
  %660 = vmatprep.subr.bf16.mxu0 %v554
  %661 = vmatpush1.bf16.msra.mxu0 %v553
  %662 = vmatprep.subr.bf16.mxu0 %v552
  %663 = vmatpush1.bf16.msra.mxu0 %v551
  %664 = vmatprep.subr.bf16.mxu0 %v550
  %665 = vmatpush1.bf16.msra.mxu0 %v549
  %666 = vmatprep.subr.bf16.mxu0 %v548
  %667 = vmatpush1.bf16.msra.mxu0 %v547
  %668 = vmatprep.subr.bf16.mxu0 %v546
  %669 = vmatpush1.bf16.msra.mxu0 %v545
  %670 = vmatprep.subr.bf16.mxu0 0
  %671 = vmatpush2.bf16.msra.mxu0 0
  %672 = vmatprep.subr.bf16.mxu0 0
  %673 = vmatpush2.bf16.msra.mxu0 0
  %674 = vmatprep.subr.bf16.mxu0 0
  %675 = vmatpush2.bf16.msra.mxu0 0
  %676 = vmatprep.subr.bf16.mxu0 0
  %677 = vmatpush2.bf16.msra.mxu0 0
  %678 = vmatprep.subr.bf16.mxu0 %v568
  %679 = vmatpush2.bf16.msra.mxu0 %v567
  %680 = vmatprep.subr.bf16.mxu0 %v566
  %681 = vmatpush2.bf16.msra.mxu0 %v565
  %682 = vmatprep.subr.bf16.mxu0 %v564
  %683 = vmatpush2.bf16.msra.mxu0 %v563
  %684 = vmatprep.subr.bf16.mxu0 %v562
  %685 = vmatpush2.bf16.msra.mxu0 %v561
  %686 = vmatprep.mubr.bf16.mxu0 %v637
  %687 = vmatmul.mubr.bf16.gmra.mxu0 %v617
  %v688 = vpop.f32.mrf.mxu0
  %v689 = vadd.f32 0.0, %v688
  %v690 = vpop.f32.mrf.mxu0
  %v691 = vadd.f32 0.0, %v690
  %v692 = vpop.f32.mrf.mxu0
  %v693 = vadd.f32 0.0, %v692
  %v694 = vpop.f32.mrf.mxu0
  %v695 = vadd.f32 0.0, %v694
  %696 = vmatprep.mubr.bf16.mxu0 %v640
  %697 = vmatmul.mubr.bf16.gmra.mxu0 %v619
  %v698 = vpop.f32.mrf.mxu0
  %v699 = vadd.f32 0.0, %v698
  %v700 = vpop.f32.mrf.mxu0
  %v701 = vadd.f32 0.0, %v700
  %v702 = vpop.f32.mrf.mxu0
  %v703 = vadd.f32 0.0, %v702
  %v704 = vpop.f32.mrf.mxu0
  %v705 = vadd.f32 0.0, %v704
  %706 = vmatprep.mubr.bf16.mxu0 %v643
  %707 = vmatmul.mubr.bf16.gmra.mxu0 %v621
  %v708 = vpop.f32.mrf.mxu0
  %v709 = vadd.f32 0.0, %v708
  %v710 = vpop.f32.mrf.mxu0
  %v711 = vadd.f32 0.0, %v710
  %v712 = vpop.f32.mrf.mxu0
  %v713 = vadd.f32 0.0, %v712
  %v714 = vpop.f32.mrf.mxu0
  %v715 = vadd.f32 0.0, %v714
  %716 = vmatprep.mubr.bf16.mxu0 %v646
  %717 = vmatmul.mubr.bf16.gmra.mxu0 %v623
  %v718 = vpop.f32.mrf.mxu0
  %v719 = vadd.f32 0.0, %v718
  %v720 = vpop.f32.mrf.mxu0
  %v721 = vadd.f32 0.0, %v720
  %v722 = vpop.f32.mrf.mxu0
  %v723 = vadd.f32 0.0, %v722
  %v724 = vpop.f32.mrf.mxu0
  %v725 = vadd.f32 0.0, %v724
  %726 = vmatprep.mubr.bf16.mxu0 %v649
  %727 = vmatmul.mubr.bf16.gmra.mxu0 %v625
  %v728 = vpop.f32.mrf.mxu0
  %v729 = vadd.f32 0.0, %v728
  %v730 = vpop.f32.mrf.mxu0
  %v731 = vadd.f32 0.0, %v730
  %v732 = vpop.f32.mrf.mxu0
  %v733 = vadd.f32 0.0, %v732
  %v734 = vpop.f32.mrf.mxu0
  %v735 = vadd.f32 0.0, %v734
  %736 = vmatprep.mubr.bf16.mxu0 %v652
  %737 = vmatmul.mubr.bf16.gmra.mxu0 %v627
  %v738 = vpop.f32.mrf.mxu0
  %v739 = vadd.f32 0.0, %v738
  %v740 = vpop.f32.mrf.mxu0
  %v741 = vadd.f32 0.0, %v740
  %v742 = vpop.f32.mrf.mxu0
  %v743 = vadd.f32 0.0, %v742
  %v744 = vpop.f32.mrf.mxu0
  %v745 = vadd.f32 0.0, %v744
  %746 = vdwg.mxu0
  %s747 = scalar_lea.vmem %s2, 96
  %v748 = vld [vmem:[%s747] sm:$0xff]
  %v749 = vld [vmem:[%s747 + $0x8] sm:$0xff]
  %v750 = vld [vmem:[%s747 + $0x10] sm:$0xff]
  %v751 = vld [vmem:[%s747 + $0x18] sm:$0xff]
  %v752 = vld [vmem:[%s747 + $0x20] sm:$0xff]
  %v753 = vld [vmem:[%s747 + $0x28] sm:$0xff]
  %v754 = vld [vmem:[%s747 + $0x30] sm:$0xff]
  %v755 = vld [vmem:[%s747 + $0x38] sm:$0xff]
  %v756 = vld [vmem:[%s747 + $0x40] sm:$0xff]
  %v757 = vld [vmem:[%s747 + $0x48] sm:$0xff]
  %v758 = vld [vmem:[%s747 + $0x50] sm:$0xff]
  %v759 = vld [vmem:[%s747 + $0x58] sm:$0xff]
  %v772 = vunpack.c.l.b16 %v748
  %v773 = vunpack.c.h.b16 %v748
  %v774 = vunpack.c.l.b16 %v749
  %v775 = vunpack.c.h.b16 %v749
  %v776 = vunpack.c.l.b16 %v750
  %v777 = vunpack.c.h.b16 %v750
  %v778 = vunpack.c.l.b16 %v751
  %v779 = vunpack.c.h.b16 %v751
  %v780 = vunpack.c.l.b16 %v752
  %v781 = vunpack.c.h.b16 %v752
  %v782 = vunpack.c.l.b16 %v753
  %v783 = vunpack.c.h.b16 %v753
  %v784 = vunpack.c.l.b16 %v754
  %v785 = vunpack.c.h.b16 %v754
  %v786 = vunpack.c.l.b16 %v755
  %v787 = vunpack.c.h.b16 %v755
  %v788 = vunpack.c.l.b16 %v756
  %v789 = vunpack.c.h.b16 %v756
  %v790 = vunpack.c.l.b16 %v757
  %v791 = vunpack.c.h.b16 %v757
  %v792 = vunpack.c.l.b16 %v758
  %v793 = vunpack.c.h.b16 %v758
  %v794 = vunpack.c.l.b16 %v759
  %v795 = vunpack.c.h.b16 %v759
  %v796 = vpack.c.b16 %v774, %v772
  %v797 = vpack.c.b16 %v775, %v773
  %v798 = vpack.c.b16 %v778, %v776
  %v799 = vpack.c.b16 %v779, %v777
  %v800 = vpack.c.b16 %v782, %v780
  %v801 = vpack.c.b16 %v783, %v781
  %v802 = vpack.c.b16 %v786, %v784
  %v803 = vpack.c.b16 %v787, %v785
  %v804 = vpack.c.b16 %v790, %v788
  %v805 = vpack.c.b16 %v791, %v789
  %v806 = vpack.c.b16 %v794, %v792
  %v807 = vpack.c.b16 %v795, %v793
  %v815 = vsel %vm635, %v797, 0
  %v818 = vsel %vm635, %v799, 0
  %v821 = vsel %vm635, %v801, 0
  %v824 = vsel %vm635, %v803, 0
  %v827 = vsel %vm635, %v805, 0
  %v830 = vsel %vm635, %v807, 0
  %832 = vmatprep.subr.bf16.mxu0 %v560
  %833 = vmatpush1.bf16.msra.mxu0 %v559
  %834 = vmatprep.subr.bf16.mxu0 %v558
  %835 = vmatpush1.bf16.msra.mxu0 %v557
  %836 = vmatprep.subr.bf16.mxu0 %v556
  %837 = vmatpush1.bf16.msra.mxu0 %v555
  %838 = vmatprep.subr.bf16.mxu0 %v554
  %839 = vmatpush1.bf16.msra.mxu0 %v553
  %840 = vmatprep.subr.bf16.mxu0 %v552
  %841 = vmatpush1.bf16.msra.mxu0 %v551
  %842 = vmatprep.subr.bf16.mxu0 %v550
  %843 = vmatpush1.bf16.msra.mxu0 %v549
  %844 = vmatprep.subr.bf16.mxu0 %v548
  %845 = vmatpush1.bf16.msra.mxu0 %v547
  %846 = vmatprep.subr.bf16.mxu0 %v546
  %847 = vmatpush1.bf16.msra.mxu0 %v545
  %848 = vmatprep.subr.bf16.mxu0 0
  %849 = vmatpush2.bf16.msra.mxu0 0
  %850 = vmatprep.subr.bf16.mxu0 0
  %851 = vmatpush2.bf16.msra.mxu0 0
  %852 = vmatprep.subr.bf16.mxu0 0
  %853 = vmatpush2.bf16.msra.mxu0 0
  %854 = vmatprep.subr.bf16.mxu0 0
  %855 = vmatpush2.bf16.msra.mxu0 0
  %856 = vmatprep.subr.bf16.mxu0 %v568
  %857 = vmatpush2.bf16.msra.mxu0 %v567
  %858 = vmatprep.subr.bf16.mxu0 %v566
  %859 = vmatpush2.bf16.msra.mxu0 %v565
  %860 = vmatprep.subr.bf16.mxu0 %v564
  %861 = vmatpush2.bf16.msra.mxu0 %v563
  %862 = vmatprep.subr.bf16.mxu0 %v562
  %863 = vmatpush2.bf16.msra.mxu0 %v561
  %864 = vmatprep.mubr.bf16.mxu0 %v815
  %865 = vmatmul.mubr.bf16.gmra.mxu0 %v796
  %v866 = vpop.f32.mrf.mxu0
  %v867 = vadd.f32 0.0, %v866
  %v868 = vpop.f32.mrf.mxu0
  %v869 = vadd.f32 0.0, %v868
  %v870 = vpop.f32.mrf.mxu0
  %v871 = vadd.f32 0.0, %v870
  %v872 = vpop.f32.mrf.mxu0
  %v873 = vadd.f32 0.0, %v872
  %874 = vmatprep.mubr.bf16.mxu0 %v818
  %875 = vmatmul.mubr.bf16.gmra.mxu0 %v798
  %v876 = vpop.f32.mrf.mxu0
  %v877 = vadd.f32 0.0, %v876
  %v878 = vpop.f32.mrf.mxu0
  %v879 = vadd.f32 0.0, %v878
  %v880 = vpop.f32.mrf.mxu0
  %v881 = vadd.f32 0.0, %v880
  %v882 = vpop.f32.mrf.mxu0
  %v883 = vadd.f32 0.0, %v882
  %884 = vmatprep.mubr.bf16.mxu0 %v821
  %885 = vmatmul.mubr.bf16.gmra.mxu0 %v800
  %v886 = vpop.f32.mrf.mxu0
  %v887 = vadd.f32 0.0, %v886
  %v888 = vpop.f32.mrf.mxu0
  %v889 = vadd.f32 0.0, %v888
  %v890 = vpop.f32.mrf.mxu0
  %v891 = vadd.f32 0.0, %v890
  %v892 = vpop.f32.mrf.mxu0
  %v893 = vadd.f32 0.0, %v892
  %894 = vmatprep.mubr.bf16.mxu0 %v824
  %895 = vmatmul.mubr.bf16.gmra.mxu0 %v802
  %v896 = vpop.f32.mrf.mxu0
  %v897 = vadd.f32 0.0, %v896
  %v898 = vpop.f32.mrf.mxu0
  %v899 = vadd.f32 0.0, %v898
  %v900 = vpop.f32.mrf.mxu0
  %v901 = vadd.f32 0.0, %v900
  %v902 = vpop.f32.mrf.mxu0
  %v903 = vadd.f32 0.0, %v902
  %904 = vmatprep.mubr.bf16.mxu0 %v827
  %905 = vmatmul.mubr.bf16.gmra.mxu0 %v804
  %v906 = vpop.f32.mrf.mxu0
  %v907 = vadd.f32 0.0, %v906
  %v908 = vpop.f32.mrf.mxu0
  %v909 = vadd.f32 0.0, %v908
  %v910 = vpop.f32.mrf.mxu0
  %v911 = vadd.f32 0.0, %v910
  %v912 = vpop.f32.mrf.mxu0
  %v913 = vadd.f32 0.0, %v912
  %914 = vmatprep.mubr.bf16.mxu0 %v830
  %915 = vmatmul.mubr.bf16.gmra.mxu0 %v806
  %v916 = vpop.f32.mrf.mxu0
  %v917 = vadd.f32 0.0, %v916
  %v918 = vpop.f32.mrf.mxu0
  %v919 = vadd.f32 0.0, %v918
  %v920 = vpop.f32.mrf.mxu0
  %v921 = vadd.f32 0.0, %v920
  %v922 = vpop.f32.mrf.mxu0
  %v923 = vadd.f32 0.0, %v922
  %924 = vdwg.mxu0
  %v925 = vmax.f32 %v689, %v867
  %v926 = vmax.f32 %v691, %v869
  %v927 = vmax.f32 %v693, %v871
  %v928 = vmax.f32 %v695, %v873
  %v929 = vmax.f32 %v699, %v877
  %v930 = vmax.f32 %v701, %v879
  %v931 = vmax.f32 %v703, %v881
  %v932 = vmax.f32 %v705, %v883
  %v933 = vmax.f32 %v709, %v887
  %v934 = vmax.f32 %v711, %v889
  %v935 = vmax.f32 %v713, %v891
  %v936 = vmax.f32 %v715, %v893
  %v937 = vmax.f32 %v719, %v897
  %v938 = vmax.f32 %v721, %v899
  %v939 = vmax.f32 %v723, %v901
  %v940 = vmax.f32 %v725, %v903
  %v941 = vmax.f32 %v729, %v907
  %v942 = vmax.f32 %v731, %v909
  %v943 = vmax.f32 %v733, %v911
  %v944 = vmax.f32 %v735, %v913
  %v945 = vmax.f32 %v739, %v917
  %v946 = vmax.f32 %v741, %v919
  %v947 = vmax.f32 %v743, %v921
  %v948 = vmax.f32 %v745, %v923
  %v949 = vpack.c.bf16 %v927, %v925
  %v950 = vpack.c.bf16 %v928, %v926
  %v951 = vpack.c.bf16 %v931, %v929
  %v952 = vpack.c.bf16 %v932, %v930
  %v953 = vpack.c.bf16 %v935, %v933
  %v954 = vpack.c.bf16 %v936, %v934
  %v955 = vpack.c.bf16 %v939, %v937
  %v956 = vpack.c.bf16 %v940, %v938
  %v957 = vpack.c.bf16 %v943, %v941
  %v958 = vpack.c.bf16 %v944, %v942
  %v959 = vpack.c.bf16 %v947, %v945
  %v960 = vpack.c.bf16 %v948, %v946
  %v961 = vld [vmem:[%s3] sm:$0xf]
  %v962 = vld [vmem:[%s3 + $0x4] sm:$0xf]
  %v963 = vld [vmem:[%s3 + $0x8] sm:$0xf]
  %v964 = vld [vmem:[%s3 + $0xc] sm:$0xf]
  %v965 = vld [vmem:[%s3 + $0x10] sm:$0xf]
  %v966 = vld [vmem:[%s3 + $0x14] sm:$0xf]
  %v967 = vld [vmem:[%s3 + $0x18] sm:$0xf]
  %v968 = vld [vmem:[%s3 + $0x1c] sm:$0xf]
  %v969 = vld [vmem:[%s3 + $0x20] sm:$0xf]
  %v970 = vld [vmem:[%s3 + $0x24] sm:$0xf]
  %v971 = vld [vmem:[%s3 + $0x28] sm:$0xf]
  %v972 = vld [vmem:[%s3 + $0x2c] sm:$0xf]
  %v973 = vld [vmem:[%s3 + $0x30] sm:$0xf]
  %v974 = vld [vmem:[%s3 + $0x34] sm:$0xf]
  %v975 = vld [vmem:[%s3 + $0x38] sm:$0xf]
  %v976 = vld [vmem:[%s3 + $0x3c] sm:$0xf]
  %v977 = vld [vmem:[%s3 + $0x40] sm:$0xf]
  %v978 = vld [vmem:[%s3 + $0x44] sm:$0xf]
  %v979 = vld [vmem:[%s3 + $0x48] sm:$0xf]
  %v980 = vld [vmem:[%s3 + $0x4c] sm:$0xf]
  %v981 = vld [vmem:[%s3 + $0x50] sm:$0xf]
  %v982 = vld [vmem:[%s3 + $0x54] sm:$0xf]
  %v983 = vld [vmem:[%s3 + $0x58] sm:$0xf]
  %v984 = vld [vmem:[%s3 + $0x5c] sm:$0xf]
  %v1009 = vunpack.c.l.b16 %v961
  %v1010 = vunpack.c.l.b16 %v962
  %v1011 = vunpack.c.l.b16 %v963
  %v1012 = vunpack.c.l.b16 %v964
  %v1013 = vunpack.c.l.b16 %v965
  %v1014 = vunpack.c.l.b16 %v966
  %v1015 = vunpack.c.l.b16 %v967
  %v1016 = vunpack.c.l.b16 %v968
  %v1017 = vunpack.c.l.b16 %v969
  %v1018 = vunpack.c.l.b16 %v970
  %v1019 = vunpack.c.l.b16 %v971
  %v1020 = vunpack.c.l.b16 %v972
  %v1021 = vunpack.c.l.b16 %v973
  %v1022 = vunpack.c.l.b16 %v974
  %v1023 = vunpack.c.l.b16 %v975
  %v1024 = vunpack.c.l.b16 %v976
  %v1025 = vunpack.c.l.b16 %v977
  %v1026 = vunpack.c.l.b16 %v978
  %v1027 = vunpack.c.l.b16 %v979
  %v1028 = vunpack.c.l.b16 %v980
  %v1029 = vunpack.c.l.b16 %v981
  %v1030 = vunpack.c.l.b16 %v982
  %v1031 = vunpack.c.l.b16 %v983
  %v1032 = vunpack.c.l.b16 %v984
  %v1033 = vpack.c.b16 %v1010, %v1009
  %v1034 = vpack.c.b16 %v1012, %v1011
  %v1035 = vpack.c.b16 %v1014, %v1013
  %v1036 = vpack.c.b16 %v1016, %v1015
  %v1037 = vpack.c.b16 %v1018, %v1017
  %v1038 = vpack.c.b16 %v1020, %v1019
  %v1039 = vpack.c.b16 %v1022, %v1021
  %v1040 = vpack.c.b16 %v1024, %v1023
  %v1041 = vpack.c.b16 %v1026, %v1025
  %v1042 = vpack.c.b16 %v1028, %v1027
  %v1043 = vpack.c.b16 %v1030, %v1029
  %v1044 = vpack.c.b16 %v1032, %v1031
  %v1058 = vsel %vm635, %v950, 0
  %v1061 = vsel %vm635, %v952, 0
  %v1064 = vsel %vm635, %v954, 0
  %v1067 = vsel %vm635, %v956, 0
  %v1070 = vsel %vm635, %v958, 0
  %v1073 = vsel %vm635, %v960, 0
  %1075 = vmatprep.subr.bf16.mxu0 0
  %1076 = vmatpush1.bf16.msra.mxu0 %v1040
  %1077 = vmatprep.subr.bf16.mxu0 0
  %1078 = vmatpush1.bf16.msra.mxu0 %v1039
  %1079 = vmatprep.subr.bf16.mxu0 0
  %1080 = vmatpush1.bf16.msra.mxu0 %v1038
  %1081 = vmatprep.subr.bf16.mxu0 0
  %1082 = vmatpush1.bf16.msra.mxu0 %v1037
  %1083 = vmatprep.subr.bf16.mxu0 0
  %1084 = vmatpush1.bf16.msra.mxu0 %v1036
  %1085 = vmatprep.subr.bf16.mxu0 0
  %1086 = vmatpush1.bf16.msra.mxu0 %v1035
  %1087 = vmatprep.subr.bf16.mxu0 0
  %1088 = vmatpush1.bf16.msra.mxu0 %v1034
  %1089 = vmatprep.subr.bf16.mxu0 0
  %1090 = vmatpush1.bf16.msra.mxu0 %v1033
  %1091 = vmatprep.subr.bf16.mxu0 0
  %1092 = vmatpush2.bf16.msra.mxu0 0
  %1093 = vmatprep.subr.bf16.mxu0 0
  %1094 = vmatpush2.bf16.msra.mxu0 0
  %1095 = vmatprep.subr.bf16.mxu0 0
  %1096 = vmatpush2.bf16.msra.mxu0 0
  %1097 = vmatprep.subr.bf16.mxu0 0
  %1098 = vmatpush2.bf16.msra.mxu0 0
  %1099 = vmatprep.subr.bf16.mxu0 0
  %1100 = vmatpush2.bf16.msra.mxu0 %v1044
  %1101 = vmatprep.subr.bf16.mxu0 0
  %1102 = vmatpush2.bf16.msra.mxu0 %v1043
  %1103 = vmatprep.subr.bf16.mxu0 0
  %1104 = vmatpush2.bf16.msra.mxu0 %v1042
  %1105 = vmatprep.subr.bf16.mxu0 0
  %1106 = vmatpush2.bf16.msra.mxu0 %v1041
  %1107 = vmatprep.mubr.bf16.mxu0 %v1058
  %1108 = vmatmul.mubr.bf16.gmra.mxu0 %v949
  %v1109 = vpop.f32.mrf.mxu0
  %v1110 = vadd.f32 0.0, %v1109
  %v1111 = vpop.f32.mrf.mxu0
  %v1112 = vpop.f32.mrf.mxu0
  %v1113 = vadd.f32 0.0, %v1112
  %v1114 = vpop.f32.mrf.mxu0
  %1115 = vmatprep.mubr.bf16.mxu0 %v1061
  %1116 = vmatmul.mubr.bf16.gmra.mxu0 %v951
  %v1117 = vpop.f32.mrf.mxu0
  %v1118 = vadd.f32 0.0, %v1117
  %v1119 = vpop.f32.mrf.mxu0
  %v1120 = vpop.f32.mrf.mxu0
  %v1121 = vadd.f32 0.0, %v1120
  %v1122 = vpop.f32.mrf.mxu0
  %1123 = vmatprep.mubr.bf16.mxu0 %v1064
  %1124 = vmatmul.mubr.bf16.gmra.mxu0 %v953
  %v1125 = vpop.f32.mrf.mxu0
  %v1126 = vadd.f32 0.0, %v1125
  %v1127 = vpop.f32.mrf.mxu0
  %v1128 = vpop.f32.mrf.mxu0
  %v1129 = vadd.f32 0.0, %v1128
  %v1130 = vpop.f32.mrf.mxu0
  %1131 = vmatprep.mubr.bf16.mxu0 %v1067
  %1132 = vmatmul.mubr.bf16.gmra.mxu0 %v955
  %v1133 = vpop.f32.mrf.mxu0
  %v1134 = vadd.f32 0.0, %v1133
  %v1135 = vpop.f32.mrf.mxu0
  %v1136 = vpop.f32.mrf.mxu0
  %v1137 = vadd.f32 0.0, %v1136
  %v1138 = vpop.f32.mrf.mxu0
  %1139 = vmatprep.mubr.bf16.mxu0 %v1070
  %1140 = vmatmul.mubr.bf16.gmra.mxu0 %v957
  %v1141 = vpop.f32.mrf.mxu0
  %v1142 = vadd.f32 0.0, %v1141
  %v1143 = vpop.f32.mrf.mxu0
  %v1144 = vpop.f32.mrf.mxu0
  %v1145 = vadd.f32 0.0, %v1144
  %v1146 = vpop.f32.mrf.mxu0
  %1147 = vmatprep.mubr.bf16.mxu0 %v1073
  %1148 = vmatmul.mubr.bf16.gmra.mxu0 %v959
  %v1149 = vpop.f32.mrf.mxu0
  %v1150 = vadd.f32 0.0, %v1149
  %v1151 = vpop.f32.mrf.mxu0
  %v1152 = vpop.f32.mrf.mxu0
  %v1153 = vadd.f32 0.0, %v1152
  %v1154 = vpop.f32.mrf.mxu0
  %1155 = vdwg.mxu0
  %s1156 = scalar_lea.vmem %s3, 96
  %v1157 = vld [vmem:[%s1156] sm:$0xf]
  %v1158 = vld [vmem:[%s1156 + $0x4] sm:$0xf]
  %v1159 = vld [vmem:[%s1156 + $0x8] sm:$0xf]
  %v1160 = vld [vmem:[%s1156 + $0xc] sm:$0xf]
  %v1161 = vld [vmem:[%s1156 + $0x10] sm:$0xf]
  %v1162 = vld [vmem:[%s1156 + $0x14] sm:$0xf]
  %v1163 = vld [vmem:[%s1156 + $0x18] sm:$0xf]
  %v1164 = vld [vmem:[%s1156 + $0x1c] sm:$0xf]
  %v1165 = vld [vmem:[%s1156 + $0x20] sm:$0xf]
  %v1166 = vld [vmem:[%s1156 + $0x24] sm:$0xf]
  %v1167 = vld [vmem:[%s1156 + $0x28] sm:$0xf]
  %v1168 = vld [vmem:[%s1156 + $0x2c] sm:$0xf]
  %v1169 = vld [vmem:[%s1156 + $0x30] sm:$0xf]
  %v1170 = vld [vmem:[%s1156 + $0x34] sm:$0xf]
  %v1171 = vld [vmem:[%s1156 + $0x38] sm:$0xf]
  %v1172 = vld [vmem:[%s1156 + $0x3c] sm:$0xf]
  %v1173 = vld [vmem:[%s1156 + $0x40] sm:$0xf]
  %v1174 = vld [vmem:[%s1156 + $0x44] sm:$0xf]
  %v1175 = vld [vmem:[%s1156 + $0x48] sm:$0xf]
  %v1176 = vld [vmem:[%s1156 + $0x4c] sm:$0xf]
  %v1177 = vld [vmem:[%s1156 + $0x50] sm:$0xf]
  %v1178 = vld [vmem:[%s1156 + $0x54] sm:$0xf]
  %v1179 = vld [vmem:[%s1156 + $0x58] sm:$0xf]
  %v1180 = vld [vmem:[%s1156 + $0x5c] sm:$0xf]
  %v1205 = vunpack.c.l.b16 %v1157
  %v1206 = vunpack.c.l.b16 %v1158
  %v1207 = vunpack.c.l.b16 %v1159
  %v1208 = vunpack.c.l.b16 %v1160
  %v1209 = vunpack.c.l.b16 %v1161
  %v1210 = vunpack.c.l.b16 %v1162
  %v1211 = vunpack.c.l.b16 %v1163
  %v1212 = vunpack.c.l.b16 %v1164
  %v1213 = vunpack.c.l.b16 %v1165
  %v1214 = vunpack.c.l.b16 %v1166
  %v1215 = vunpack.c.l.b16 %v1167
  %v1216 = vunpack.c.l.b16 %v1168
  %v1217 = vunpack.c.l.b16 %v1169
  %v1218 = vunpack.c.l.b16 %v1170
  %v1219 = vunpack.c.l.b16 %v1171
  %v1220 = vunpack.c.l.b16 %v1172
  %v1221 = vunpack.c.l.b16 %v1173
  %v1222 = vunpack.c.l.b16 %v1174
  %v1223 = vunpack.c.l.b16 %v1175
  %v1224 = vunpack.c.l.b16 %v1176
  %v1225 = vunpack.c.l.b16 %v1177
  %v1226 = vunpack.c.l.b16 %v1178
  %v1227 = vunpack.c.l.b16 %v1179
  %v1228 = vunpack.c.l.b16 %v1180
  %v1229 = vpack.c.b16 %v1206, %v1205
  %v1230 = vpack.c.b16 %v1208, %v1207
  %v1231 = vpack.c.b16 %v1210, %v1209
  %v1232 = vpack.c.b16 %v1212, %v1211
  %v1233 = vpack.c.b16 %v1214, %v1213
  %v1234 = vpack.c.b16 %v1216, %v1215
  %v1235 = vpack.c.b16 %v1218, %v1217
  %v1236 = vpack.c.b16 %v1220, %v1219
  %v1237 = vpack.c.b16 %v1222, %v1221
  %v1238 = vpack.c.b16 %v1224, %v1223
  %v1239 = vpack.c.b16 %v1226, %v1225
  %v1240 = vpack.c.b16 %v1228, %v1227
  %1253 = vmatprep.subr.bf16.mxu0 0
  %1254 = vmatpush1.bf16.msra.mxu0 %v1236
  %1255 = vmatprep.subr.bf16.mxu0 0
  %1256 = vmatpush1.bf16.msra.mxu0 %v1235
  %1257 = vmatprep.subr.bf16.mxu0 0
  %1258 = vmatpush1.bf16.msra.mxu0 %v1234
  %1259 = vmatprep.subr.bf16.mxu0 0
  %1260 = vmatpush1.bf16.msra.mxu0 %v1233
  %1261 = vmatprep.subr.bf16.mxu0 0
  %1262 = vmatpush1.bf16.msra.mxu0 %v1232
  %1263 = vmatprep.subr.bf16.mxu0 0
  %1264 = vmatpush1.bf16.msra.mxu0 %v1231
  %1265 = vmatprep.subr.bf16.mxu0 0
  %1266 = vmatpush1.bf16.msra.mxu0 %v1230
  %1267 = vmatprep.subr.bf16.mxu0 0
  %1268 = vmatpush1.bf16.msra.mxu0 %v1229
  %1269 = vmatprep.subr.bf16.mxu0 0
  %1270 = vmatpush2.bf16.msra.mxu0 0
  %1271 = vmatprep.subr.bf16.mxu0 0
  %1272 = vmatpush2.bf16.msra.mxu0 0
  %1273 = vmatprep.subr.bf16.mxu0 0
  %1274 = vmatpush2.bf16.msra.mxu0 0
  %1275 = vmatprep.subr.bf16.mxu0 0
  %1276 = vmatpush2.bf16.msra.mxu0 0
  %1277 = vmatprep.subr.bf16.mxu0 0
  %1278 = vmatpush2.bf16.msra.mxu0 %v1240
  %1279 = vmatprep.subr.bf16.mxu0 0
  %1280 = vmatpush2.bf16.msra.mxu0 %v1239
  %1281 = vmatprep.subr.bf16.mxu0 0
  %1282 = vmatpush2.bf16.msra.mxu0 %v1238
  %1283 = vmatprep.subr.bf16.mxu0 0
  %1284 = vmatpush2.bf16.msra.mxu0 %v1237
  %1285 = vmatprep.mubr.bf16.mxu0 %v1058
  %1286 = vmatmul.mubr.bf16.gmra.mxu0 %v949
  %v1287 = vpop.f32.mrf.mxu0
  %v1288 = vadd.f32 0.0, %v1287
  %v1289 = vpop.f32.mrf.mxu0
  %v1290 = vpop.f32.mrf.mxu0
  %v1291 = vadd.f32 0.0, %v1290
  %v1292 = vpop.f32.mrf.mxu0
  %1293 = vmatprep.mubr.bf16.mxu0 %v1061
  %1294 = vmatmul.mubr.bf16.gmra.mxu0 %v951
  %v1295 = vpop.f32.mrf.mxu0
  %v1296 = vadd.f32 0.0, %v1295
  %v1297 = vpop.f32.mrf.mxu0
  %v1298 = vpop.f32.mrf.mxu0
  %v1299 = vadd.f32 0.0, %v1298
  %v1300 = vpop.f32.mrf.mxu0
  %1301 = vmatprep.mubr.bf16.mxu0 %v1064
  %1302 = vmatmul.mubr.bf16.gmra.mxu0 %v953
  %v1303 = vpop.f32.mrf.mxu0
  %v1304 = vadd.f32 0.0, %v1303
  %v1305 = vpop.f32.mrf.mxu0
  %v1306 = vpop.f32.mrf.mxu0
  %v1307 = vadd.f32 0.0, %v1306
  %v1308 = vpop.f32.mrf.mxu0
  %1309 = vmatprep.mubr.bf16.mxu0 %v1067
  %1310 = vmatmul.mubr.bf16.gmra.mxu0 %v955
  %v1311 = vpop.f32.mrf.mxu0
  %v1312 = vadd.f32 0.0, %v1311
  %v1313 = vpop.f32.mrf.mxu0
  %v1314 = vpop.f32.mrf.mxu0
  %v1315 = vadd.f32 0.0, %v1314
  %v1316 = vpop.f32.mrf.mxu0
  %1317 = vmatprep.mubr.bf16.mxu0 %v1070
  %1318 = vmatmul.mubr.bf16.gmra.mxu0 %v957
  %v1319 = vpop.f32.mrf.mxu0
  %v1320 = vadd.f32 0.0, %v1319
  %v1321 = vpop.f32.mrf.mxu0
  %v1322 = vpop.f32.mrf.mxu0
  %v1323 = vadd.f32 0.0, %v1322
  %v1324 = vpop.f32.mrf.mxu0
  %1325 = vmatprep.mubr.bf16.mxu0 %v1073
  %1326 = vmatmul.mubr.bf16.gmra.mxu0 %v959
  %v1327 = vpop.f32.mrf.mxu0
  %v1328 = vadd.f32 0.0, %v1327
  %v1329 = vpop.f32.mrf.mxu0
  %v1330 = vpop.f32.mrf.mxu0
  %v1331 = vadd.f32 0.0, %v1330
  %v1332 = vpop.f32.mrf.mxu0
  %1333 = vdwg.mxu0
  %v1334 = vmax.f32 %v1110, %v1288
  %v1335 = vmax.f32 %v1113, %v1291
  %v1336 = vmax.f32 %v1118, %v1296
  %v1337 = vmax.f32 %v1121, %v1299
  %v1338 = vmax.f32 %v1126, %v1304
  %v1339 = vmax.f32 %v1129, %v1307
  %v1340 = vmax.f32 %v1134, %v1312
  %v1341 = vmax.f32 %v1137, %v1315
  %v1342 = vmax.f32 %v1142, %v1320
  %v1343 = vmax.f32 %v1145, %v1323
  %v1344 = vmax.f32 %v1150, %v1328
  %v1345 = vmax.f32 %v1153, %v1331
  %v1346 = vpack.c.bf16 %v1335, %v1334
  %v1347 = vpack.c.bf16 %v1337, %v1336
  %v1348 = vpack.c.bf16 %v1339, %v1338
  %v1349 = vpack.c.bf16 %v1341, %v1340
  %v1350 = vpack.c.bf16 %v1343, %v1342
  %v1351 = vpack.c.bf16 %v1345, %v1344
  %v1352 = vld [vmem:[%s4] sm:$0xf]
  %v1353 = vld [vmem:[%s4 + $0x4] sm:$0xf]
  %v1354 = vld [vmem:[%s4 + $0x8] sm:$0xf]
  %v1355 = vld [vmem:[%s4 + $0xc] sm:$0xf]
  %v1356 = vld [vmem:[%s4 + $0x10] sm:$0xf]
  %v1357 = vld [vmem:[%s4 + $0x14] sm:$0xf]
  %v1358 = vld [vmem:[%s4 + $0x18] sm:$0xf]
  %v1359 = vld [vmem:[%s4 + $0x1c] sm:$0xf]
  %v1368 = vunpack.c.l.b16 %v1352
  %v1369 = vunpack.c.l.b16 %v1353
  %v1370 = vunpack.c.l.b16 %v1354
  %v1371 = vunpack.c.l.b16 %v1355
  %v1372 = vunpack.c.l.b16 %v1356
  %v1373 = vunpack.c.l.b16 %v1357
  %v1374 = vunpack.c.l.b16 %v1358
  %v1375 = vunpack.c.l.b16 %v1359
  %v1376 = vpack.c.b16 %v1369, %v1368
  %v1377 = vpack.c.b16 %v1371, %v1370
  %v1378 = vpack.c.b16 %v1373, %v1372
  %v1379 = vpack.c.b16 %v1375, %v1374
  %vm1380 = vcmask 785408
  %v1382 = vsel %vm1380, %v1376, 0
  %v1385 = vsel %vm1380, %v1377, 0
  %v1388 = vsel %vm1380, %v1378, 0
  %v1391 = vsel %vm1380, %v1379, 0
  %1393 = vmatprep.subr.bf16.mxu0 0
  %1394 = vmatpush1.bf16.msra.mxu0 0
  %1395 = vmatprep.subr.bf16.mxu0 0
  %1396 = vmatpush1.bf16.msra.mxu0 0
  %1397 = vmatprep.subr.bf16.mxu0 0
  %1398 = vmatpush1.bf16.msra.mxu0 %v1351
  %1399 = vmatprep.subr.bf16.mxu0 0
  %1400 = vmatpush1.bf16.msra.mxu0 %v1350
  %1401 = vmatprep.subr.bf16.mxu0 0
  %1402 = vmatpush1.bf16.msra.mxu0 %v1349
  %1403 = vmatprep.subr.bf16.mxu0 0
  %1404 = vmatpush1.bf16.msra.mxu0 %v1348
  %1405 = vmatprep.subr.bf16.mxu0 0
  %1406 = vmatpush1.bf16.msra.mxu0 %v1347
  %1407 = vmatprep.subr.bf16.mxu0 0
  %1408 = vmatpush1.bf16.msra.mxu0 %v1346
  %1409 = vmatprep.subr.bf16.mxu0 0
  %1410 = vmatpush2.bf16.msra.mxu0 0
  %1411 = vmatprep.subr.bf16.mxu0 0
  %1412 = vmatpush2.bf16.msra.mxu0 0
  %1413 = vmatprep.subr.bf16.mxu0 0
  %1414 = vmatpush2.bf16.msra.mxu0 0
  %1415 = vmatprep.subr.bf16.mxu0 0
  %1416 = vmatpush2.bf16.msra.mxu0 0
  %1417 = vmatprep.subr.bf16.mxu0 0
  %1418 = vmatpush2.bf16.msra.mxu0 0
  %1419 = vmatprep.subr.bf16.mxu0 0
  %1420 = vmatpush2.bf16.msra.mxu0 0
  %1421 = vmatprep.subr.bf16.mxu0 0
  %1422 = vmatpush2.bf16.msra.mxu0 0
  %1423 = vmatprep.subr.bf16.mxu0 0
  %1424 = vmatpush2.bf16.msra.mxu0 0
  %1425 = vmatprep.mubr.bf16.mxu0 0
  %1426 = vmatmul.mubr.bf16.gmra.mxu0 %v1382
  %v1427 = vpop.f32.mrf.mxu0
  %v1428 = vadd.f32 0.0, %v1427
  %v1429 = vpop.f32.mrf.mxu0
  %v1430 = vpop.f32.mrf.mxu0
  %v1431 = vadd.f32 0.0, %v1430
  %v1432 = vpop.f32.mrf.mxu0
  %1433 = vmatprep.mubr.bf16.mxu0 0
  %1434 = vmatmul.mubr.bf16.gmra.mxu0 %v1385
  %v1435 = vpop.f32.mrf.mxu0
  %v1436 = vadd.f32 0.0, %v1435
  %v1437 = vpop.f32.mrf.mxu0
  %v1438 = vpop.f32.mrf.mxu0
  %v1439 = vadd.f32 0.0, %v1438
  %v1440 = vpop.f32.mrf.mxu0
  %1441 = vmatprep.mubr.bf16.mxu0 0
  %1442 = vmatmul.mubr.bf16.gmra.mxu0 %v1388
  %v1443 = vpop.f32.mrf.mxu0
  %v1444 = vadd.f32 0.0, %v1443
  %v1445 = vpop.f32.mrf.mxu0
  %v1446 = vpop.f32.mrf.mxu0
  %v1447 = vadd.f32 0.0, %v1446
  %v1448 = vpop.f32.mrf.mxu0
  %1449 = vmatprep.mubr.bf16.mxu0 0
  %1450 = vmatmul.mubr.bf16.gmra.mxu0 %v1391
  %v1451 = vpop.f32.mrf.mxu0
  %v1452 = vadd.f32 0.0, %v1451
  %v1453 = vpop.f32.mrf.mxu0
  %v1454 = vpop.f32.mrf.mxu0
  %v1455 = vadd.f32 0.0, %v1454
  %v1456 = vpop.f32.mrf.mxu0
  %1457 = vdwg.mxu0
  %v1458 = vpack.c.bf16 %v1431, %v1428
  %v1459 = vpack.c.bf16 %v1439, %v1436
  %v1460 = vpack.c.bf16 %v1447, %v1444
  %v1461 = vpack.c.bf16 %v1455, %v1452
  %s1462 = scalar_lea.vmem %s4, 32
  %v1463 = vld [vmem:[%s1462] sm:$0xf]
  %v1464 = vld [vmem:[%s1462 + $0x4] sm:$0xf]
  %v1465 = vld [vmem:[%s1462 + $0x8] sm:$0xf]
  %v1466 = vld [vmem:[%s1462 + $0xc] sm:$0xf]
  %v1467 = vld [vmem:[%s1462 + $0x10] sm:$0xf]
  %v1468 = vld [vmem:[%s1462 + $0x14] sm:$0xf]
  %v1469 = vld [vmem:[%s1462 + $0x18] sm:$0xf]
  %v1470 = vld [vmem:[%s1462 + $0x1c] sm:$0xf]
  %v1479 = vunpack.c.l.b16 %v1463
  %v1480 = vunpack.c.l.b16 %v1464
  %v1481 = vunpack.c.l.b16 %v1465
  %v1482 = vunpack.c.l.b16 %v1466
  %v1483 = vunpack.c.l.b16 %v1467
  %v1484 = vunpack.c.l.b16 %v1468
  %v1485 = vunpack.c.l.b16 %v1469
  %v1486 = vunpack.c.l.b16 %v1470
  %v1487 = vpack.c.b16 %v1480, %v1479
  %v1488 = vpack.c.b16 %v1482, %v1481
  %v1489 = vpack.c.b16 %v1484, %v1483
  %v1490 = vpack.c.b16 %v1486, %v1485
  %v1492 = vsel %vm1380, %v1487, 0
  %v1495 = vsel %vm1380, %v1488, 0
  %v1498 = vsel %vm1380, %v1489, 0
  %v1501 = vsel %vm1380, %v1490, 0
  %1503 = vmatprep.subr.bf16.mxu0 0
  %1504 = vmatpush1.bf16.msra.mxu0 0
  %1505 = vmatprep.subr.bf16.mxu0 0
  %1506 = vmatpush1.bf16.msra.mxu0 0
  %1507 = vmatprep.subr.bf16.mxu0 0
  %1508 = vmatpush1.bf16.msra.mxu0 %v1351
  %1509 = vmatprep.subr.bf16.mxu0 0
  %1510 = vmatpush1.bf16.msra.mxu0 %v1350
  %1511 = vmatprep.subr.bf16.mxu0 0
  %1512 = vmatpush1.bf16.msra.mxu0 %v1349
  %1513 = vmatprep.subr.bf16.mxu0 0
  %1514 = vmatpush1.bf16.msra.mxu0 %v1348
  %1515 = vmatprep.subr.bf16.mxu0 0
  %1516 = vmatpush1.bf16.msra.mxu0 %v1347
  %1517 = vmatprep.subr.bf16.mxu0 0
  %1518 = vmatpush1.bf16.msra.mxu0 %v1346
  %1519 = vmatprep.subr.bf16.mxu0 0
  %1520 = vmatpush2.bf16.msra.mxu0 0
  %1521 = vmatprep.subr.bf16.mxu0 0
  %1522 = vmatpush2.bf16.msra.mxu0 0
  %1523 = vmatprep.subr.bf16.mxu0 0
  %1524 = vmatpush2.bf16.msra.mxu0 0
  %1525 = vmatprep.subr.bf16.mxu0 0
  %1526 = vmatpush2.bf16.msra.mxu0 0
  %1527 = vmatprep.subr.bf16.mxu0 0
  %1528 = vmatpush2.bf16.msra.mxu0 0
  %1529 = vmatprep.subr.bf16.mxu0 0
  %1530 = vmatpush2.bf16.msra.mxu0 0
  %1531 = vmatprep.subr.bf16.mxu0 0
  %1532 = vmatpush2.bf16.msra.mxu0 0
  %1533 = vmatprep.subr.bf16.mxu0 0
  %1534 = vmatpush2.bf16.msra.mxu0 0
  %1535 = vmatprep.mubr.bf16.mxu0 0
  %1536 = vmatmul.mubr.bf16.gmra.mxu0 %v1492
  %v1537 = vpop.f32.mrf.mxu0
  %v1538 = vadd.f32 0.0, %v1537
  %v1539 = vpop.f32.mrf.mxu0
  %v1540 = vpop.f32.mrf.mxu0
  %v1541 = vadd.f32 0.0, %v1540
  %v1542 = vpop.f32.mrf.mxu0
  %1543 = vmatprep.mubr.bf16.mxu0 0
  %1544 = vmatmul.mubr.bf16.gmra.mxu0 %v1495
  %v1545 = vpop.f32.mrf.mxu0
  %v1546 = vadd.f32 0.0, %v1545
  %v1547 = vpop.f32.mrf.mxu0
  %v1548 = vpop.f32.mrf.mxu0
  %v1549 = vadd.f32 0.0, %v1548
  %v1550 = vpop.f32.mrf.mxu0
  %1551 = vmatprep.mubr.bf16.mxu0 0
  %1552 = vmatmul.mubr.bf16.gmra.mxu0 %v1498
  %v1553 = vpop.f32.mrf.mxu0
  %v1554 = vadd.f32 0.0, %v1553
  %v1555 = vpop.f32.mrf.mxu0
  %v1556 = vpop.f32.mrf.mxu0
  %v1557 = vadd.f32 0.0, %v1556
  %v1558 = vpop.f32.mrf.mxu0
  %1559 = vmatprep.mubr.bf16.mxu0 0
  %1560 = vmatmul.mubr.bf16.gmra.mxu0 %v1501
  %v1561 = vpop.f32.mrf.mxu0
  %v1562 = vadd.f32 0.0, %v1561
  %v1563 = vpop.f32.mrf.mxu0
  %v1564 = vpop.f32.mrf.mxu0
  %v1565 = vadd.f32 0.0, %v1564
  %v1566 = vpop.f32.mrf.mxu0
  %1567 = vdwg.mxu0
  %v1568 = vpack.c.bf16 %v1541, %v1538
  %v1569 = vpack.c.bf16 %v1549, %v1546
  %v1570 = vpack.c.bf16 %v1557, %v1554
  %v1571 = vpack.c.bf16 %v1565, %v1562
  %s1572 = scalar_lea.vmem %s4, 64
  %v1573 = vld [vmem:[%s1572] sm:$0xf]
  %v1574 = vld [vmem:[%s1572 + $0x4] sm:$0xf]
  %v1575 = vld [vmem:[%s1572 + $0x8] sm:$0xf]
  %v1576 = vld [vmem:[%s1572 + $0xc] sm:$0xf]
  %v1577 = vld [vmem:[%s1572 + $0x10] sm:$0xf]
  %v1578 = vld [vmem:[%s1572 + $0x14] sm:$0xf]
  %v1579 = vld [vmem:[%s1572 + $0x18] sm:$0xf]
  %v1580 = vld [vmem:[%s1572 + $0x1c] sm:$0xf]
  %v1589 = vunpack.c.l.b16 %v1573
  %v1590 = vunpack.c.l.b16 %v1574
  %v1591 = vunpack.c.l.b16 %v1575
  %v1592 = vunpack.c.l.b16 %v1576
  %v1593 = vunpack.c.l.b16 %v1577
  %v1594 = vunpack.c.l.b16 %v1578
  %v1595 = vunpack.c.l.b16 %v1579
  %v1596 = vunpack.c.l.b16 %v1580
  %v1597 = vpack.c.b16 %v1590, %v1589
  %v1598 = vpack.c.b16 %v1592, %v1591
  %v1599 = vpack.c.b16 %v1594, %v1593
  %v1600 = vpack.c.b16 %v1596, %v1595
  %v1602 = vsel %vm1380, %v1597, 0
  %v1605 = vsel %vm1380, %v1598, 0
  %v1608 = vsel %vm1380, %v1599, 0
  %v1611 = vsel %vm1380, %v1600, 0
  %1613 = vmatprep.subr.bf16.mxu0 0
  %1614 = vmatpush1.bf16.msra.mxu0 0
  %1615 = vmatprep.subr.bf16.mxu0 0
  %1616 = vmatpush1.bf16.msra.mxu0 0
  %1617 = vmatprep.subr.bf16.mxu0 0
  %1618 = vmatpush1.bf16.msra.mxu0 %v1351
  %1619 = vmatprep.subr.bf16.mxu0 0
  %1620 = vmatpush1.bf16.msra.mxu0 %v1350
  %1621 = vmatprep.subr.bf16.mxu0 0
  %1622 = vmatpush1.bf16.msra.mxu0 %v1349
  %1623 = vmatprep.subr.bf16.mxu0 0
  %1624 = vmatpush1.bf16.msra.mxu0 %v1348
  %1625 = vmatprep.subr.bf16.mxu0 0
  %1626 = vmatpush1.bf16.msra.mxu0 %v1347
  %1627 = vmatprep.subr.bf16.mxu0 0
  %1628 = vmatpush1.bf16.msra.mxu0 %v1346
  %1629 = vmatprep.subr.bf16.mxu0 0
  %1630 = vmatpush2.bf16.msra.mxu0 0
  %1631 = vmatprep.subr.bf16.mxu0 0
  %1632 = vmatpush2.bf16.msra.mxu0 0
  %1633 = vmatprep.subr.bf16.mxu0 0
  %1634 = vmatpush2.bf16.msra.mxu0 0
  %1635 = vmatprep.subr.bf16.mxu0 0
  %1636 = vmatpush2.bf16.msra.mxu0 0
  %1637 = vmatprep.subr.bf16.mxu0 0
  %1638 = vmatpush2.bf16.msra.mxu0 0
  %1639 = vmatprep.subr.bf16.mxu0 0
  %1640 = vmatpush2.bf16.msra.mxu0 0
  %1641 = vmatprep.subr.bf16.mxu0 0
  %1642 = vmatpush2.bf16.msra.mxu0 0
  %1643 = vmatprep.subr.bf16.mxu0 0
  %1644 = vmatpush2.bf16.msra.mxu0 0
  %1645 = vmatprep.mubr.bf16.mxu0 0
  %1646 = vmatmul.mubr.bf16.gmra.mxu0 %v1602
  %v1647 = vpop.f32.mrf.mxu0
  %v1648 = vadd.f32 0.0, %v1647
  %v1649 = vpop.f32.mrf.mxu0
  %v1650 = vpop.f32.mrf.mxu0
  %v1651 = vadd.f32 0.0, %v1650
  %v1652 = vpop.f32.mrf.mxu0
  %1653 = vmatprep.mubr.bf16.mxu0 0
  %1654 = vmatmul.mubr.bf16.gmra.mxu0 %v1605
  %v1655 = vpop.f32.mrf.mxu0
  %v1656 = vadd.f32 0.0, %v1655
  %v1657 = vpop.f32.mrf.mxu0
  %v1658 = vpop.f32.mrf.mxu0
  %v1659 = vadd.f32 0.0, %v1658
  %v1660 = vpop.f32.mrf.mxu0
  %1661 = vmatprep.mubr.bf16.mxu0 0
  %1662 = vmatmul.mubr.bf16.gmra.mxu0 %v1608
  %v1663 = vpop.f32.mrf.mxu0
  %v1664 = vadd.f32 0.0, %v1663
  %v1665 = vpop.f32.mrf.mxu0
  %v1666 = vpop.f32.mrf.mxu0
  %v1667 = vadd.f32 0.0, %v1666
  %v1668 = vpop.f32.mrf.mxu0
  %1669 = vmatprep.mubr.bf16.mxu0 0
  %1670 = vmatmul.mubr.bf16.gmra.mxu0 %v1611
  %v1671 = vpop.f32.mrf.mxu0
  %v1672 = vadd.f32 0.0, %v1671
  %v1673 = vpop.f32.mrf.mxu0
  %v1674 = vpop.f32.mrf.mxu0
  %v1675 = vadd.f32 0.0, %v1674
  %v1676 = vpop.f32.mrf.mxu0
  %1677 = vdwg.mxu0
  %v1678 = vpack.c.bf16 %v1651, %v1648
  %v1679 = vpack.c.bf16 %v1659, %v1656
  %v1680 = vpack.c.bf16 %v1667, %v1664
  %v1681 = vpack.c.bf16 %v1675, %v1672
  %s1682 = scalar_lea.vmem %s4, 96
  %v1683 = vld [vmem:[%s1682] sm:$0xf]
  %v1684 = vld [vmem:[%s1682 + $0x4] sm:$0xf]
  %v1685 = vld [vmem:[%s1682 + $0x8] sm:$0xf]
  %v1686 = vld [vmem:[%s1682 + $0xc] sm:$0xf]
  %v1687 = vld [vmem:[%s1682 + $0x10] sm:$0xf]
  %v1688 = vld [vmem:[%s1682 + $0x14] sm:$0xf]
  %v1689 = vld [vmem:[%s1682 + $0x18] sm:$0xf]
  %v1690 = vld [vmem:[%s1682 + $0x1c] sm:$0xf]
  %v1699 = vunpack.c.l.b16 %v1683
  %v1700 = vunpack.c.l.b16 %v1684
  %v1701 = vunpack.c.l.b16 %v1685
  %v1702 = vunpack.c.l.b16 %v1686
  %v1703 = vunpack.c.l.b16 %v1687
  %v1704 = vunpack.c.l.b16 %v1688
  %v1705 = vunpack.c.l.b16 %v1689
  %v1706 = vunpack.c.l.b16 %v1690
  %v1707 = vpack.c.b16 %v1700, %v1699
  %v1708 = vpack.c.b16 %v1702, %v1701
  %v1709 = vpack.c.b16 %v1704, %v1703
  %v1710 = vpack.c.b16 %v1706, %v1705
  %v1712 = vsel %vm1380, %v1707, 0
  %v1715 = vsel %vm1380, %v1708, 0
  %v1718 = vsel %vm1380, %v1709, 0
  %v1721 = vsel %vm1380, %v1710, 0
  %1723 = vmatprep.subr.bf16.mxu0 0
  %1724 = vmatpush1.bf16.msra.mxu0 0
  %1725 = vmatprep.subr.bf16.mxu0 0
  %1726 = vmatpush1.bf16.msra.mxu0 0
  %1727 = vmatprep.subr.bf16.mxu0 0
  %1728 = vmatpush1.bf16.msra.mxu0 %v1351
  %1729 = vmatprep.subr.bf16.mxu0 0
  %1730 = vmatpush1.bf16.msra.mxu0 %v1350
  %1731 = vmatprep.subr.bf16.mxu0 0
  %1732 = vmatpush1.bf16.msra.mxu0 %v1349
  %1733 = vmatprep.subr.bf16.mxu0 0
  %1734 = vmatpush1.bf16.msra.mxu0 %v1348
  %1735 = vmatprep.subr.bf16.mxu0 0
  %1736 = vmatpush1.bf16.msra.mxu0 %v1347
  %1737 = vmatprep.subr.bf16.mxu0 0
  %1738 = vmatpush1.bf16.msra.mxu0 %v1346
  %1739 = vmatprep.subr.bf16.mxu0 0
  %1740 = vmatpush2.bf16.msra.mxu0 0
  %1741 = vmatprep.subr.bf16.mxu0 0
  %1742 = vmatpush2.bf16.msra.mxu0 0
  %1743 = vmatprep.subr.bf16.mxu0 0
  %1744 = vmatpush2.bf16.msra.mxu0 0
  %1745 = vmatprep.subr.bf16.mxu0 0
  %1746 = vmatpush2.bf16.msra.mxu0 0
  %1747 = vmatprep.subr.bf16.mxu0 0
  %1748 = vmatpush2.bf16.msra.mxu0 0
  %1749 = vmatprep.subr.bf16.mxu0 0
  %1750 = vmatpush2.bf16.msra.mxu0 0
  %1751 = vmatprep.subr.bf16.mxu0 0
  %1752 = vmatpush2.bf16.msra.mxu0 0
  %1753 = vmatprep.subr.bf16.mxu0 0
  %1754 = vmatpush2.bf16.msra.mxu0 0
  %1755 = vmatprep.mubr.bf16.mxu0 0
  %1756 = vmatmul.mubr.bf16.gmra.mxu0 %v1712
  %v1757 = vpop.f32.mrf.mxu0
  %v1758 = vadd.f32 0.0, %v1757
  %v1759 = vpop.f32.mrf.mxu0
  %v1760 = vpop.f32.mrf.mxu0
  %v1761 = vadd.f32 0.0, %v1760
  %v1762 = vpop.f32.mrf.mxu0
  %1763 = vmatprep.mubr.bf16.mxu0 0
  %1764 = vmatmul.mubr.bf16.gmra.mxu0 %v1715
  %v1765 = vpop.f32.mrf.mxu0
  %v1766 = vadd.f32 0.0, %v1765
  %v1767 = vpop.f32.mrf.mxu0
  %v1768 = vpop.f32.mrf.mxu0
  %v1769 = vadd.f32 0.0, %v1768
  %v1770 = vpop.f32.mrf.mxu0
  %1771 = vmatprep.mubr.bf16.mxu0 0
  %1772 = vmatmul.mubr.bf16.gmra.mxu0 %v1718
  %v1773 = vpop.f32.mrf.mxu0
  %v1774 = vadd.f32 0.0, %v1773
  %v1775 = vpop.f32.mrf.mxu0
  %v1776 = vpop.f32.mrf.mxu0
  %v1777 = vadd.f32 0.0, %v1776
  %v1778 = vpop.f32.mrf.mxu0
  %1779 = vmatprep.mubr.bf16.mxu0 0
  %1780 = vmatmul.mubr.bf16.gmra.mxu0 %v1721
  %v1781 = vpop.f32.mrf.mxu0
  %v1782 = vadd.f32 0.0, %v1781
  %v1783 = vpop.f32.mrf.mxu0
  %v1784 = vpop.f32.mrf.mxu0
  %v1785 = vadd.f32 0.0, %v1784
  %v1786 = vpop.f32.mrf.mxu0
  %1787 = vdwg.mxu0
  %v1788 = vpack.c.bf16 %v1761, %v1758
  %v1789 = vpack.c.bf16 %v1769, %v1766
  %v1790 = vpack.c.bf16 %v1777, %v1774
  %v1791 = vpack.c.bf16 %v1785, %v1782
  %s1792 = scalar_lea.vmem %s4, 128
  %v1793 = vld [vmem:[%s1792] sm:$0xf]
  %v1794 = vld [vmem:[%s1792 + $0x4] sm:$0xf]
  %v1795 = vld [vmem:[%s1792 + $0x8] sm:$0xf]
  %v1796 = vld [vmem:[%s1792 + $0xc] sm:$0xf]
  %v1797 = vld [vmem:[%s1792 + $0x10] sm:$0xf]
  %v1798 = vld [vmem:[%s1792 + $0x14] sm:$0xf]
  %v1799 = vld [vmem:[%s1792 + $0x18] sm:$0xf]
  %v1800 = vld [vmem:[%s1792 + $0x1c] sm:$0xf]
  %v1809 = vunpack.c.l.b16 %v1793
  %v1810 = vunpack.c.l.b16 %v1794
  %v1811 = vunpack.c.l.b16 %v1795
  %v1812 = vunpack.c.l.b16 %v1796
  %v1813 = vunpack.c.l.b16 %v1797
  %v1814 = vunpack.c.l.b16 %v1798
  %v1815 = vunpack.c.l.b16 %v1799
  %v1816 = vunpack.c.l.b16 %v1800
  %v1817 = vpack.c.b16 %v1810, %v1809
  %v1818 = vpack.c.b16 %v1812, %v1811
  %v1819 = vpack.c.b16 %v1814, %v1813
  %v1820 = vpack.c.b16 %v1816, %v1815
  %v1822 = vsel %vm1380, %v1817, 0
  %v1825 = vsel %vm1380, %v1818, 0
  %v1828 = vsel %vm1380, %v1819, 0
  %v1831 = vsel %vm1380, %v1820, 0
  %1833 = vmatprep.subr.bf16.mxu0 0
  %1834 = vmatpush1.bf16.msra.mxu0 0
  %1835 = vmatprep.subr.bf16.mxu0 0
  %1836 = vmatpush1.bf16.msra.mxu0 0
  %1837 = vmatprep.subr.bf16.mxu0 0
  %1838 = vmatpush1.bf16.msra.mxu0 %v1351
  %1839 = vmatprep.subr.bf16.mxu0 0
  %1840 = vmatpush1.bf16.msra.mxu0 %v1350
  %1841 = vmatprep.subr.bf16.mxu0 0
  %1842 = vmatpush1.bf16.msra.mxu0 %v1349
  %1843 = vmatprep.subr.bf16.mxu0 0
  %1844 = vmatpush1.bf16.msra.mxu0 %v1348
  %1845 = vmatprep.subr.bf16.mxu0 0
  %1846 = vmatpush1.bf16.msra.mxu0 %v1347
  %1847 = vmatprep.subr.bf16.mxu0 0
  %1848 = vmatpush1.bf16.msra.mxu0 %v1346
  %1849 = vmatprep.subr.bf16.mxu0 0
  %1850 = vmatpush2.bf16.msra.mxu0 0
  %1851 = vmatprep.subr.bf16.mxu0 0
  %1852 = vmatpush2.bf16.msra.mxu0 0
  %1853 = vmatprep.subr.bf16.mxu0 0
  %1854 = vmatpush2.bf16.msra.mxu0 0
  %1855 = vmatprep.subr.bf16.mxu0 0
  %1856 = vmatpush2.bf16.msra.mxu0 0
  %1857 = vmatprep.subr.bf16.mxu0 0
  %1858 = vmatpush2.bf16.msra.mxu0 0
  %1859 = vmatprep.subr.bf16.mxu0 0
  %1860 = vmatpush2.bf16.msra.mxu0 0
  %1861 = vmatprep.subr.bf16.mxu0 0
  %1862 = vmatpush2.bf16.msra.mxu0 0
  %1863 = vmatprep.subr.bf16.mxu0 0
  %1864 = vmatpush2.bf16.msra.mxu0 0
  %1865 = vmatprep.mubr.bf16.mxu0 0
  %1866 = vmatmul.mubr.bf16.gmra.mxu0 %v1822
  %v1867 = vpop.f32.mrf.mxu0
  %v1868 = vadd.f32 0.0, %v1867
  %v1869 = vpop.f32.mrf.mxu0
  %v1870 = vpop.f32.mrf.mxu0
  %v1871 = vadd.f32 0.0, %v1870
  %v1872 = vpop.f32.mrf.mxu0
  %1873 = vmatprep.mubr.bf16.mxu0 0
  %1874 = vmatmul.mubr.bf16.gmra.mxu0 %v1825
  %v1875 = vpop.f32.mrf.mxu0
  %v1876 = vadd.f32 0.0, %v1875
  %v1877 = vpop.f32.mrf.mxu0
  %v1878 = vpop.f32.mrf.mxu0
  %v1879 = vadd.f32 0.0, %v1878
  %v1880 = vpop.f32.mrf.mxu0
  %1881 = vmatprep.mubr.bf16.mxu0 0
  %1882 = vmatmul.mubr.bf16.gmra.mxu0 %v1828
  %v1883 = vpop.f32.mrf.mxu0
  %v1884 = vadd.f32 0.0, %v1883
  %v1885 = vpop.f32.mrf.mxu0
  %v1886 = vpop.f32.mrf.mxu0
  %v1887 = vadd.f32 0.0, %v1886
  %v1888 = vpop.f32.mrf.mxu0
  %1889 = vmatprep.mubr.bf16.mxu0 0
  %1890 = vmatmul.mubr.bf16.gmra.mxu0 %v1831
  %v1891 = vpop.f32.mrf.mxu0
  %v1892 = vadd.f32 0.0, %v1891
  %v1893 = vpop.f32.mrf.mxu0
  %v1894 = vpop.f32.mrf.mxu0
  %v1895 = vadd.f32 0.0, %v1894
  %v1896 = vpop.f32.mrf.mxu0
  %1897 = vdwg.mxu0
  %v1898 = vpack.c.bf16 %v1871, %v1868
  %v1899 = vpack.c.bf16 %v1879, %v1876
  %v1900 = vpack.c.bf16 %v1887, %v1884
  %v1901 = vpack.c.bf16 %v1895, %v1892
  %v1902 = vld [vmem:[%s5] sm:$0xf]
  %v1903 = vld [vmem:[%s5 + $0x4] sm:$0xf]
  %v1904 = vld [vmem:[%s5 + $0x8] sm:$0xf]
  %v1905 = vld [vmem:[%s5 + $0xc] sm:$0xf]
  %v1906 = vld [vmem:[%s5 + $0x10] sm:$0xf]
  %v1907 = vld [vmem:[%s5 + $0x14] sm:$0xf]
  %v1908 = vld [vmem:[%s5 + $0x18] sm:$0xf]
  %v1909 = vld [vmem:[%s5 + $0x1c] sm:$0xf]
  %v1910 = vld [vmem:[%s5 + $0x20] sm:$0xf]
  %v1911 = vld [vmem:[%s5 + $0x24] sm:$0xf]
  %v1912 = vld [vmem:[%s5 + $0x28] sm:$0xf]
  %v1913 = vld [vmem:[%s5 + $0x2c] sm:$0xf]
  %v1914 = vld [vmem:[%s5 + $0x30] sm:$0xf]
  %v1915 = vld [vmem:[%s5 + $0x34] sm:$0xf]
  %v1916 = vld [vmem:[%s5 + $0x38] sm:$0xf]
  %v1917 = vld [vmem:[%s5 + $0x3c] sm:$0xf]
  %v1918 = vld [vmem:[%s5 + $0x40] sm:$0xf]
  %v1919 = vld [vmem:[%s5 + $0x44] sm:$0xf]
  %v1920 = vld [vmem:[%s5 + $0x48] sm:$0xf]
  %v1921 = vld [vmem:[%s5 + $0x4c] sm:$0xf]
  %v1922 = vld [vmem:[%s5 + $0x50] sm:$0xf]
  %v1923 = vld [vmem:[%s5 + $0x54] sm:$0xf]
  %v1924 = vld [vmem:[%s5 + $0x58] sm:$0xf]
  %v1925 = vld [vmem:[%s5 + $0x5c] sm:$0xf]
  %v1926 = vld [vmem:[%s5 + $0x60] sm:$0xf]
  %v1927 = vld [vmem:[%s5 + $0x64] sm:$0xf]
  %v1928 = vld [vmem:[%s5 + $0x68] sm:$0xf]
  %v1929 = vld [vmem:[%s5 + $0x6c] sm:$0xf]
  %v1930 = vld [vmem:[%s5 + $0x70] sm:$0xf]
  %v1931 = vld [vmem:[%s5 + $0x74] sm:$0xf]
  %v1932 = vld [vmem:[%s5 + $0x78] sm:$0xf]
  %v1933 = vld [vmem:[%s5 + $0x7c] sm:$0xf]
  %v1934 = vld [vmem:[%s5 + $0x80] sm:$0xf]
  %v1935 = vld [vmem:[%s5 + $0x84] sm:$0xf]
  %v1936 = vld [vmem:[%s5 + $0x88] sm:$0xf]
  %v1937 = vld [vmem:[%s5 + $0x8c] sm:$0xf]
  %v1938 = vld [vmem:[%s5 + $0x90] sm:$0xf]
  %v1939 = vld [vmem:[%s5 + $0x94] sm:$0xf]
  %v1940 = vld [vmem:[%s5 + $0x98] sm:$0xf]
  %v1941 = vld [vmem:[%s5 + $0x9c] sm:$0xf]
  %v1942 = vld [vmem:[%s5 + $0xa0] sm:$0xf]
  %v1943 = vld [vmem:[%s5 + $0xa4] sm:$0xf]
  %v1944 = vld [vmem:[%s5 + $0xa8] sm:$0xf]
  %v1945 = vld [vmem:[%s5 + $0xac] sm:$0xf]
  %v1946 = vld [vmem:[%s5 + $0xb0] sm:$0xf]
  %v1947 = vld [vmem:[%s5 + $0xb4] sm:$0xf]
  %v1948 = vld [vmem:[%s5 + $0xb8] sm:$0xf]
  %v1949 = vld [vmem:[%s5 + $0xbc] sm:$0xf]
  %v1950 = vld [vmem:[%s5 + $0xc0] sm:$0xf]
  %v1951 = vld [vmem:[%s5 + $0xc4] sm:$0xf]
  %v1952 = vld [vmem:[%s5 + $0xc8] sm:$0xf]
  %v1953 = vld [vmem:[%s5 + $0xcc] sm:$0xf]
  %v1954 = vld [vmem:[%s5 + $0xd0] sm:$0xf]
  %v1955 = vld [vmem:[%s5 + $0xd4] sm:$0xf]
  %v1956 = vld [vmem:[%s5 + $0xd8] sm:$0xf]
  %v1957 = vld [vmem:[%s5 + $0xdc] sm:$0xf]
  %v1958 = vld [vmem:[%s5 + $0xe0] sm:$0xf]
  %v1959 = vld [vmem:[%s5 + $0xe4] sm:$0xf]
  %v1960 = vld [vmem:[%s5 + $0xe8] sm:$0xf]
  %v1961 = vld [vmem:[%s5 + $0xec] sm:$0xf]
  %v1962 = vld [vmem:[%s5 + $0xf0] sm:$0xf]
  %v1963 = vld [vmem:[%s5 + $0xf4] sm:$0xf]
  %v1964 = vld [vmem:[%s5 + $0xf8] sm:$0xf]
  %v1965 = vld [vmem:[%s5 + $0xfc] sm:$0xf]
  %v1966 = vld [vmem:[%s5 + $0x100] sm:$0xf]
  %v1967 = vld [vmem:[%s5 + $0x104] sm:$0xf]
  %v1968 = vld [vmem:[%s5 + $0x108] sm:$0xf]
  %v1969 = vld [vmem:[%s5 + $0x10c] sm:$0xf]
  %v1970 = vld [vmem:[%s5 + $0x110] sm:$0xf]
  %v1971 = vld [vmem:[%s5 + $0x114] sm:$0xf]
  %v1972 = vld [vmem:[%s5 + $0x118] sm:$0xf]
  %v1973 = vld [vmem:[%s5 + $0x11c] sm:$0xf]
  %v1974 = vld [vmem:[%s5 + $0x120] sm:$0xf]
  %v1975 = vld [vmem:[%s5 + $0x124] sm:$0xf]
  %v1976 = vld [vmem:[%s5 + $0x128] sm:$0xf]
  %v1977 = vld [vmem:[%s5 + $0x12c] sm:$0xf]
  %v1978 = vld [vmem:[%s5 + $0x130] sm:$0xf]
  %v1979 = vld [vmem:[%s5 + $0x134] sm:$0xf]
  %v1980 = vld [vmem:[%s5 + $0x138] sm:$0xf]
  %v1981 = vld [vmem:[%s5 + $0x13c] sm:$0xf]
  %v1982 = vlaneseq
  %v1983 = vshrl.u32 %v1982, 7
  %v1984 = vsub.s32 1, %v1983
  %v1985 = vrot.slane %v42, %v1984
  %v2066 = vunpack.c.l.b16 %v1902
  %v2067 = vunpack.c.l.b16 %v1903
  %v2068 = vunpack.c.l.b16 %v1904
  %v2069 = vunpack.c.l.b16 %v1905
  %v2070 = vunpack.c.l.b16 %v1906
  %v2071 = vunpack.c.l.b16 %v1907
  %v2072 = vunpack.c.l.b16 %v1908
  %v2073 = vunpack.c.l.b16 %v1909
  %v2074 = vunpack.c.l.b16 %v1910
  %v2075 = vunpack.c.l.b16 %v1911
  %v2076 = vunpack.c.l.b16 %v1912
  %v2077 = vunpack.c.l.b16 %v1913
  %v2078 = vunpack.c.l.b16 %v1914
  %v2079 = vunpack.c.l.b16 %v1915
  %v2080 = vunpack.c.l.b16 %v1916
  %v2081 = vunpack.c.l.b16 %v1917
  %v2082 = vunpack.c.l.b16 %v1918
  %v2083 = vunpack.c.l.b16 %v1919
  %v2084 = vunpack.c.l.b16 %v1920
  %v2085 = vunpack.c.l.b16 %v1921
  %v2086 = vunpack.c.l.b16 %v1922
  %v2087 = vunpack.c.l.b16 %v1923
  %v2088 = vunpack.c.l.b16 %v1924
  %v2089 = vunpack.c.l.b16 %v1925
  %v2090 = vunpack.c.l.b16 %v1926
  %v2091 = vunpack.c.l.b16 %v1927
  %v2092 = vunpack.c.l.b16 %v1928
  %v2093 = vunpack.c.l.b16 %v1929
  %v2094 = vunpack.c.l.b16 %v1930
  %v2095 = vunpack.c.l.b16 %v1931
  %v2096 = vunpack.c.l.b16 %v1932
  %v2097 = vunpack.c.l.b16 %v1933
  %v2098 = vunpack.c.l.b16 %v1934
  %v2099 = vunpack.c.l.b16 %v1935
  %v2100 = vunpack.c.l.b16 %v1936
  %v2101 = vunpack.c.l.b16 %v1937
  %v2102 = vunpack.c.l.b16 %v1938
  %v2103 = vunpack.c.l.b16 %v1939
  %v2104 = vunpack.c.l.b16 %v1940
  %v2105 = vunpack.c.l.b16 %v1941
  %v2106 = vunpack.c.l.b16 %v1942
  %v2107 = vunpack.c.l.b16 %v1943
  %v2108 = vunpack.c.l.b16 %v1944
  %v2109 = vunpack.c.l.b16 %v1945
  %v2110 = vunpack.c.l.b16 %v1946
  %v2111 = vunpack.c.l.b16 %v1947
  %v2112 = vunpack.c.l.b16 %v1948
  %v2113 = vunpack.c.l.b16 %v1949
  %v2114 = vunpack.c.l.b16 %v1950
  %v2115 = vunpack.c.l.b16 %v1951
  %v2116 = vunpack.c.l.b16 %v1952
  %v2117 = vunpack.c.l.b16 %v1953
  %v2118 = vunpack.c.l.b16 %v1954
  %v2119 = vunpack.c.l.b16 %v1955
  %v2120 = vunpack.c.l.b16 %v1956
  %v2121 = vunpack.c.l.b16 %v1957
  %v2122 = vunpack.c.l.b16 %v1958
  %v2123 = vunpack.c.l.b16 %v1959
  %v2124 = vunpack.c.l.b16 %v1960
  %v2125 = vunpack.c.l.b16 %v1961
  %v2126 = vunpack.c.l.b16 %v1962
  %v2127 = vunpack.c.l.b16 %v1963
  %v2128 = vunpack.c.l.b16 %v1964
  %v2129 = vunpack.c.l.b16 %v1965
  %v2130 = vunpack.c.l.b16 %v1966
  %v2131 = vunpack.c.l.b16 %v1967
  %v2132 = vunpack.c.l.b16 %v1968
  %v2133 = vunpack.c.l.b16 %v1969
  %v2134 = vunpack.c.l.b16 %v1970
  %v2135 = vunpack.c.l.b16 %v1971
  %v2136 = vunpack.c.l.b16 %v1972
  %v2137 = vunpack.c.l.b16 %v1973
  %v2138 = vunpack.c.l.b16 %v1974
  %v2139 = vunpack.c.l.b16 %v1975
  %v2140 = vunpack.c.l.b16 %v1976
  %v2141 = vunpack.c.l.b16 %v1977
  %v2142 = vunpack.c.l.b16 %v1978
  %v2143 = vunpack.c.l.b16 %v1979
  %v2144 = vunpack.c.l.b16 %v1980
  %v2145 = vunpack.c.l.b16 %v1981
  %v2146 = vpack.c.b16 %v2067, %v2066
  %v2147 = vpack.c.b16 %v2069, %v2068
  %v2148 = vpack.c.b16 %v2071, %v2070
  %v2149 = vpack.c.b16 %v2073, %v2072
  %v2150 = vpack.c.b16 %v2075, %v2074
  %v2151 = vpack.c.b16 %v2077, %v2076
  %v2152 = vpack.c.b16 %v2079, %v2078
  %v2153 = vpack.c.b16 %v2081, %v2080
  %v2154 = vpack.c.b16 %v2083, %v2082
  %v2155 = vpack.c.b16 %v2085, %v2084
  %v2156 = vpack.c.b16 %v2087, %v2086
  %v2157 = vpack.c.b16 %v2089, %v2088
  %v2158 = vpack.c.b16 %v2091, %v2090
  %v2159 = vpack.c.b16 %v2093, %v2092
  %v2160 = vpack.c.b16 %v2095, %v2094
  %v2161 = vpack.c.b16 %v2097, %v2096
  %v2162 = vpack.c.b16 %v2099, %v2098
  %v2163 = vpack.c.b16 %v2101, %v2100
  %v2164 = vpack.c.b16 %v2103, %v2102
  %v2165 = vpack.c.b16 %v2105, %v2104
  %v2166 = vpack.c.b16 %v2107, %v2106
  %v2167 = vpack.c.b16 %v2109, %v2108
  %v2168 = vpack.c.b16 %v2111, %v2110
  %v2169 = vpack.c.b16 %v2113, %v2112
  %v2170 = vpack.c.b16 %v2115, %v2114
  %v2171 = vpack.c.b16 %v2117, %v2116
  %v2172 = vpack.c.b16 %v2119, %v2118
  %v2173 = vpack.c.b16 %v2121, %v2120
  %v2174 = vpack.c.b16 %v2123, %v2122
  %v2175 = vpack.c.b16 %v2125, %v2124
  %v2176 = vpack.c.b16 %v2127, %v2126
  %v2177 = vpack.c.b16 %v2129, %v2128
  %v2178 = vpack.c.b16 %v2131, %v2130
  %v2179 = vpack.c.b16 %v2133, %v2132
  %v2180 = vpack.c.b16 %v2135, %v2134
  %v2181 = vpack.c.b16 %v2137, %v2136
  %v2182 = vpack.c.b16 %v2139, %v2138
  %v2183 = vpack.c.b16 %v2141, %v2140
  %v2184 = vpack.c.b16 %v2143, %v2142
  %v2185 = vpack.c.b16 %v2145, %v2144
  %2226 = vmatprep.subr.bf16.mxu0 0
  %2227 = vmatpush1.bf16.msra.mxu0 %v2153
  %2228 = vmatprep.subr.bf16.mxu0 0
  %2229 = vmatpush1.bf16.msra.mxu0 %v2152
  %2230 = vmatprep.subr.bf16.mxu0 0
  %2231 = vmatpush1.bf16.msra.mxu0 %v2151
  %2232 = vmatprep.subr.bf16.mxu0 0
  %2233 = vmatpush1.bf16.msra.mxu0 %v2150
  %2234 = vmatprep.subr.bf16.mxu0 0
  %2235 = vmatpush1.bf16.msra.mxu0 %v2149
  %2236 = vmatprep.subr.bf16.mxu0 0
  %2237 = vmatpush1.bf16.msra.mxu0 %v2148
  %2238 = vmatprep.subr.bf16.mxu0 0
  %2239 = vmatpush1.bf16.msra.mxu0 %v2147
  %2240 = vmatprep.subr.bf16.mxu0 0
  %2241 = vmatpush1.bf16.msra.mxu0 %v2146
  %2242 = vmatprep.subr.bf16.mxu0 0
  %2243 = vmatpush2.bf16.msra.mxu0 %v2161
  %2244 = vmatprep.subr.bf16.mxu0 0
  %2245 = vmatpush2.bf16.msra.mxu0 %v2160
  %2246 = vmatprep.subr.bf16.mxu0 0
  %2247 = vmatpush2.bf16.msra.mxu0 %v2159
  %2248 = vmatprep.subr.bf16.mxu0 0
  %2249 = vmatpush2.bf16.msra.mxu0 %v2158
  %2250 = vmatprep.subr.bf16.mxu0 0
  %2251 = vmatpush2.bf16.msra.mxu0 %v2157
  %2252 = vmatprep.subr.bf16.mxu0 0
  %2253 = vmatpush2.bf16.msra.mxu0 %v2156
  %2254 = vmatprep.subr.bf16.mxu0 0
  %2255 = vmatpush2.bf16.msra.mxu0 %v2155
  %2256 = vmatprep.subr.bf16.mxu0 0
  %2257 = vmatpush2.bf16.msra.mxu0 %v2154
  %2258 = vmatprep.mubr.bf16.mxu0 %v1568
  %2259 = vmatmul.mubr.bf16.gmra.mxu0 %v1458
  %v2260 = vpop.f32.mrf.mxu0
  %v2261 = vadd.f32 %v1985, %v2260
  %v2262 = vpop.f32.mrf.mxu0
  %v2263 = vpop.f32.mrf.mxu0
  %v2264 = vadd.f32 %v1985, %v2263
  %v2265 = vpop.f32.mrf.mxu0
  %2266 = vmatprep.mubr.bf16.mxu0 %v1569
  %2267 = vmatmul.mubr.bf16.gmra.mxu0 %v1459
  %v2268 = vpop.f32.mrf.mxu0
  %v2269 = vadd.f32 %v1985, %v2268
  %v2270 = vpop.f32.mrf.mxu0
  %v2271 = vpop.f32.mrf.mxu0
  %v2272 = vadd.f32 %v1985, %v2271
  %v2273 = vpop.f32.mrf.mxu0
  %2274 = vmatprep.mubr.bf16.mxu0 %v1570
  %2275 = vmatmul.mubr.bf16.gmra.mxu0 %v1460
  %v2276 = vpop.f32.mrf.mxu0
  %v2277 = vadd.f32 %v1985, %v2276
  %v2278 = vpop.f32.mrf.mxu0
  %v2279 = vpop.f32.mrf.mxu0
  %v2280 = vadd.f32 %v1985, %v2279
  %v2281 = vpop.f32.mrf.mxu0
  %2282 = vmatprep.mubr.bf16.mxu0 %v1571
  %2283 = vmatmul.mubr.bf16.gmra.mxu0 %v1461
  %v2284 = vpop.f32.mrf.mxu0
  %v2285 = vadd.f32 %v1985, %v2284
  %v2286 = vpop.f32.mrf.mxu0
  %v2287 = vpop.f32.mrf.mxu0
  %v2288 = vadd.f32 %v1985, %v2287
  %v2289 = vpop.f32.mrf.mxu0
  %2290 = vdwg.mxu0
  %2291 = vmatprep.subr.bf16.mxu0 0
  %2292 = vmatpush1.bf16.msra.mxu0 %v2169
  %2293 = vmatprep.subr.bf16.mxu0 0
  %2294 = vmatpush1.bf16.msra.mxu0 %v2168
  %2295 = vmatprep.subr.bf16.mxu0 0
  %2296 = vmatpush1.bf16.msra.mxu0 %v2167
  %2297 = vmatprep.subr.bf16.mxu0 0
  %2298 = vmatpush1.bf16.msra.mxu0 %v2166
  %2299 = vmatprep.subr.bf16.mxu0 0
  %2300 = vmatpush1.bf16.msra.mxu0 %v2165
  %2301 = vmatprep.subr.bf16.mxu0 0
  %2302 = vmatpush1.bf16.msra.mxu0 %v2164
  %2303 = vmatprep.subr.bf16.mxu0 0
  %2304 = vmatpush1.bf16.msra.mxu0 %v2163
  %2305 = vmatprep.subr.bf16.mxu0 0
  %2306 = vmatpush1.bf16.msra.mxu0 %v2162
  %2307 = vmatprep.subr.bf16.mxu0 0
  %2308 = vmatpush2.bf16.msra.mxu0 %v2177
  %2309 = vmatprep.subr.bf16.mxu0 0
  %2310 = vmatpush2.bf16.msra.mxu0 %v2176
  %2311 = vmatprep.subr.bf16.mxu0 0
  %2312 = vmatpush2.bf16.msra.mxu0 %v2175
  %2313 = vmatprep.subr.bf16.mxu0 0
  %2314 = vmatpush2.bf16.msra.mxu0 %v2174
  %2315 = vmatprep.subr.bf16.mxu0 0
  %2316 = vmatpush2.bf16.msra.mxu0 %v2173
  %2317 = vmatprep.subr.bf16.mxu0 0
  %2318 = vmatpush2.bf16.msra.mxu0 %v2172
  %2319 = vmatprep.subr.bf16.mxu0 0
  %2320 = vmatpush2.bf16.msra.mxu0 %v2171
  %2321 = vmatprep.subr.bf16.mxu0 0
  %2322 = vmatpush2.bf16.msra.mxu0 %v2170
  %2323 = vmatprep.mubr.bf16.mxu0 %v1788
  %2324 = vmatmul.mubr.bf16.gmra.mxu0 %v1678
  %v2325 = vpop.f32.mrf.mxu0
  %v2326 = vadd.f32 %v2261, %v2325
  %v2327 = vpop.f32.mrf.mxu0
  %v2328 = vpop.f32.mrf.mxu0
  %v2329 = vadd.f32 %v2264, %v2328
  %v2330 = vpop.f32.mrf.mxu0
  %2331 = vmatprep.mubr.bf16.mxu0 %v1789
  %2332 = vmatmul.mubr.bf16.gmra.mxu0 %v1679
  %v2333 = vpop.f32.mrf.mxu0
  %v2334 = vadd.f32 %v2269, %v2333
  %v2335 = vpop.f32.mrf.mxu0
  %v2336 = vpop.f32.mrf.mxu0
  %v2337 = vadd.f32 %v2272, %v2336
  %v2338 = vpop.f32.mrf.mxu0
  %2339 = vmatprep.mubr.bf16.mxu0 %v1790
  %2340 = vmatmul.mubr.bf16.gmra.mxu0 %v1680
  %v2341 = vpop.f32.mrf.mxu0
  %v2342 = vadd.f32 %v2277, %v2341
  %v2343 = vpop.f32.mrf.mxu0
  %v2344 = vpop.f32.mrf.mxu0
  %v2345 = vadd.f32 %v2280, %v2344
  %v2346 = vpop.f32.mrf.mxu0
  %2347 = vmatprep.mubr.bf16.mxu0 %v1791
  %2348 = vmatmul.mubr.bf16.gmra.mxu0 %v1681
  %v2349 = vpop.f32.mrf.mxu0
  %v2350 = vadd.f32 %v2285, %v2349
  %v2351 = vpop.f32.mrf.mxu0
  %v2352 = vpop.f32.mrf.mxu0
  %v2353 = vadd.f32 %v2288, %v2352
  %v2354 = vpop.f32.mrf.mxu0
  %2355 = vdwg.mxu0
  %2356 = vmatprep.subr.bf16.mxu0 0
  %2357 = vmatpush1.bf16.msra.mxu0 %v2185
  %2358 = vmatprep.subr.bf16.mxu0 0
  %2359 = vmatpush1.bf16.msra.mxu0 %v2184
  %2360 = vmatprep.subr.bf16.mxu0 0
  %2361 = vmatpush1.bf16.msra.mxu0 %v2183
  %2362 = vmatprep.subr.bf16.mxu0 0
  %2363 = vmatpush1.bf16.msra.mxu0 %v2182
  %2364 = vmatprep.subr.bf16.mxu0 0
  %2365 = vmatpush1.bf16.msra.mxu0 %v2181
  %2366 = vmatprep.subr.bf16.mxu0 0
  %2367 = vmatpush1.bf16.msra.mxu0 %v2180
  %2368 = vmatprep.subr.bf16.mxu0 0
  %2369 = vmatpush1.bf16.msra.mxu0 %v2179
  %2370 = vmatprep.subr.bf16.mxu0 0
  %2371 = vmatpush1.bf16.msra.mxu0 %v2178
  %2372 = vmatprep.subr.bf16.mxu0 0
  %2373 = vmatpush2.bf16.msra.mxu0 0
  %2374 = vmatprep.subr.bf16.mxu0 0
  %2375 = vmatpush2.bf16.msra.mxu0 0
  %2376 = vmatprep.subr.bf16.mxu0 0
  %2377 = vmatpush2.bf16.msra.mxu0 0
  %2378 = vmatprep.subr.bf16.mxu0 0
  %2379 = vmatpush2.bf16.msra.mxu0 0
  %2380 = vmatprep.subr.bf16.mxu0 0
  %2381 = vmatpush2.bf16.msra.mxu0 0
  %2382 = vmatprep.subr.bf16.mxu0 0
  %2383 = vmatpush2.bf16.msra.mxu0 0
  %2384 = vmatprep.subr.bf16.mxu0 0
  %2385 = vmatpush2.bf16.msra.mxu0 0
  %2386 = vmatprep.subr.bf16.mxu0 0
  %2387 = vmatpush2.bf16.msra.mxu0 0
  %2388 = vmatprep.mubr.bf16.mxu0 0
  %2389 = vmatmul.mubr.bf16.gmra.mxu0 %v1898
  %v2390 = vpop.f32.mrf.mxu0
  %v2391 = vadd.f32 %v2326, %v2390
  %v2392 = vpop.f32.mrf.mxu0
  %v2393 = vpop.f32.mrf.mxu0
  %v2394 = vadd.f32 %v2329, %v2393
  %v2395 = vpop.f32.mrf.mxu0
  %2396 = vmatprep.mubr.bf16.mxu0 0
  %2397 = vmatmul.mubr.bf16.gmra.mxu0 %v1899
  %v2398 = vpop.f32.mrf.mxu0
  %v2399 = vadd.f32 %v2334, %v2398
  %v2400 = vpop.f32.mrf.mxu0
  %v2401 = vpop.f32.mrf.mxu0
  %v2402 = vadd.f32 %v2337, %v2401
  %v2403 = vpop.f32.mrf.mxu0
  %2404 = vmatprep.mubr.bf16.mxu0 0
  %2405 = vmatmul.mubr.bf16.gmra.mxu0 %v1900
  %v2406 = vpop.f32.mrf.mxu0
  %v2407 = vadd.f32 %v2342, %v2406
  %v2408 = vpop.f32.mrf.mxu0
  %v2409 = vpop.f32.mrf.mxu0
  %v2410 = vadd.f32 %v2345, %v2409
  %v2411 = vpop.f32.mrf.mxu0
  %2412 = vmatprep.mubr.bf16.mxu0 0
  %2413 = vmatmul.mubr.bf16.gmra.mxu0 %v1901
  %v2414 = vpop.f32.mrf.mxu0
  %v2415 = vadd.f32 %v2350, %v2414
  %v2416 = vpop.f32.mrf.mxu0
  %v2417 = vpop.f32.mrf.mxu0
  %v2418 = vadd.f32 %v2353, %v2417
  %v2419 = vpop.f32.mrf.mxu0
  %2420 = vdwg.mxu0
  %v2421 = vmax.f32 %v2391, 0.0
  %v2422 = vmax.f32 %v2394, 0.0
  %v2423 = vmax.f32 %v2399, 0.0
  %v2424 = vmax.f32 %v2402, 0.0
  %v2425 = vmax.f32 %v2407, 0.0
  %v2426 = vmax.f32 %v2410, 0.0
  %v2427 = vmax.f32 %v2415, 0.0
  %v2428 = vmax.f32 %v2418, 0.0
  %v2429 = vpack.c.bf16 %v2422, %v2421
  %v2430 = vpack.c.bf16 %v2424, %v2423
  %v2431 = vpack.c.bf16 %v2426, %v2425
  %v2432 = vpack.c.bf16 %v2428, %v2427
  %v2433 = vld [vmem:[%s6] sm:$0xf]
  %v2434 = vld [vmem:[%s6 + $0x4] sm:$0xf]
  %v2435 = vld [vmem:[%s6 + $0x8] sm:$0xf]
  %v2436 = vld [vmem:[%s6 + $0xc] sm:$0xf]
  %v2441 = vunpack.c.l.b16 %v2433
  %v2442 = vunpack.c.l.b16 %v2434
  %v2443 = vunpack.c.l.b16 %v2435
  %v2444 = vunpack.c.l.b16 %v2436
  %v2445 = vpack.c.b16 %v2442, %v2441
  %v2446 = vpack.c.b16 %v2444, %v2443
  %v2448 = vsel %vm635, %v2445, 0
  %v2451 = vsel %vm635, %v2446, 0
  %2453 = vmatprep.subr.bf16.mxu0 0
  %2454 = vmatpush1.bf16.msra.mxu0 0
  %2455 = vmatprep.subr.bf16.mxu0 0
  %2456 = vmatpush1.bf16.msra.mxu0 0
  %2457 = vmatprep.subr.bf16.mxu0 0
  %2458 = vmatpush1.bf16.msra.mxu0 0
  %2459 = vmatprep.subr.bf16.mxu0 0
  %2460 = vmatpush1.bf16.msra.mxu0 0
  %2461 = vmatprep.subr.bf16.mxu0 0
  %2462 = vmatpush1.bf16.msra.mxu0 %v2432
  %2463 = vmatprep.subr.bf16.mxu0 0
  %2464 = vmatpush1.bf16.msra.mxu0 %v2431
  %2465 = vmatprep.subr.bf16.mxu0 0
  %2466 = vmatpush1.bf16.msra.mxu0 %v2430
  %2467 = vmatprep.subr.bf16.mxu0 0
  %2468 = vmatpush1.bf16.msra.mxu0 %v2429
  %2469 = vmatprep.subr.bf16.mxu0 0
  %2470 = vmatpush2.bf16.msra.mxu0 0
  %2471 = vmatprep.subr.bf16.mxu0 0
  %2472 = vmatpush2.bf16.msra.mxu0 0
  %2473 = vmatprep.subr.bf16.mxu0 0
  %2474 = vmatpush2.bf16.msra.mxu0 0
  %2475 = vmatprep.subr.bf16.mxu0 0
  %2476 = vmatpush2.bf16.msra.mxu0 0
  %2477 = vmatprep.subr.bf16.mxu0 0
  %2478 = vmatpush2.bf16.msra.mxu0 0
  %2479 = vmatprep.subr.bf16.mxu0 0
  %2480 = vmatpush2.bf16.msra.mxu0 0
  %2481 = vmatprep.subr.bf16.mxu0 0
  %2482 = vmatpush2.bf16.msra.mxu0 0
  %2483 = vmatprep.subr.bf16.mxu0 0
  %2484 = vmatpush2.bf16.msra.mxu0 0
  %2485 = vmatprep.mubr.bf16.mxu0 0
  %2486 = vmatmul.mubr.bf16.gmra.mxu0 %v2448
  %v2487 = vpop.f32.mrf.mxu0
  %v2488 = vadd.f32 0.0, %v2487
  %v2489 = vpop.f32.mrf.mxu0
  %v2490 = vpop.f32.mrf.mxu0
  %v2491 = vadd.f32 0.0, %v2490
  %v2492 = vpop.f32.mrf.mxu0
  %2493 = vmatprep.mubr.bf16.mxu0 0
  %2494 = vmatmul.mubr.bf16.gmra.mxu0 %v2451
  %v2495 = vpop.f32.mrf.mxu0
  %v2496 = vadd.f32 0.0, %v2495
  %v2497 = vpop.f32.mrf.mxu0
  %v2498 = vpop.f32.mrf.mxu0
  %v2499 = vadd.f32 0.0, %v2498
  %v2500 = vpop.f32.mrf.mxu0
  %2501 = vdwg.mxu0
  %s2502 = scalar_lea.vmem %s6, 16
  %v2503 = vld [vmem:[%s2502] sm:$0xf]
  %v2504 = vld [vmem:[%s2502 + $0x4] sm:$0xf]
  %v2505 = vld [vmem:[%s2502 + $0x8] sm:$0xf]
  %v2506 = vld [vmem:[%s2502 + $0xc] sm:$0xf]
  %v2511 = vunpack.c.l.b16 %v2503
  %v2512 = vunpack.c.l.b16 %v2504
  %v2513 = vunpack.c.l.b16 %v2505
  %v2514 = vunpack.c.l.b16 %v2506
  %v2515 = vpack.c.b16 %v2512, %v2511
  %v2516 = vpack.c.b16 %v2514, %v2513
  %v2518 = vsel %vm635, %v2515, 0
  %v2521 = vsel %vm635, %v2516, 0
  %2523 = vmatprep.subr.bf16.mxu0 0
  %2524 = vmatpush1.bf16.msra.mxu0 0
  %2525 = vmatprep.subr.bf16.mxu0 0
  %2526 = vmatpush1.bf16.msra.mxu0 0
  %2527 = vmatprep.subr.bf16.mxu0 0
  %2528 = vmatpush1.bf16.msra.mxu0 0
  %2529 = vmatprep.subr.bf16.mxu0 0
  %2530 = vmatpush1.bf16.msra.mxu0 0
  %2531 = vmatprep.subr.bf16.mxu0 0
  %2532 = vmatpush1.bf16.msra.mxu0 %v2432
  %2533 = vmatprep.subr.bf16.mxu0 0
  %2534 = vmatpush1.bf16.msra.mxu0 %v2431
  %2535 = vmatprep.subr.bf16.mxu0 0
  %2536 = vmatpush1.bf16.msra.mxu0 %v2430
  %2537 = vmatprep.subr.bf16.mxu0 0
  %2538 = vmatpush1.bf16.msra.mxu0 %v2429
  %2539 = vmatprep.subr.bf16.mxu0 0
  %2540 = vmatpush2.bf16.msra.mxu0 0
  %2541 = vmatprep.subr.bf16.mxu0 0
  %2542 = vmatpush2.bf16.msra.mxu0 0
  %2543 = vmatprep.subr.bf16.mxu0 0
  %2544 = vmatpush2.bf16.msra.mxu0 0
  %2545 = vmatprep.subr.bf16.mxu0 0
  %2546 = vmatpush2.bf16.msra.mxu0 0
  %2547 = vmatprep.subr.bf16.mxu0 0
  %2548 = vmatpush2.bf16.msra.mxu0 0
  %2549 = vmatprep.subr.bf16.mxu0 0
  %2550 = vmatpush2.bf16.msra.mxu0 0
  %2551 = vmatprep.subr.bf16.mxu0 0
  %2552 = vmatpush2.bf16.msra.mxu0 0
  %2553 = vmatprep.subr.bf16.mxu0 0
  %2554 = vmatpush2.bf16.msra.mxu0 0
  %2555 = vmatprep.mubr.bf16.mxu0 0
  %2556 = vmatmul.mubr.bf16.gmra.mxu0 %v2518
  %v2557 = vpop.f32.mrf.mxu0
  %v2558 = vadd.f32 0.0, %v2557
  %v2559 = vpop.f32.mrf.mxu0
  %v2560 = vpop.f32.mrf.mxu0
  %v2561 = vadd.f32 0.0, %v2560
  %v2562 = vpop.f32.mrf.mxu0
  %2563 = vmatprep.mubr.bf16.mxu0 0
  %2564 = vmatmul.mubr.bf16.gmra.mxu0 %v2521
  %v2565 = vpop.f32.mrf.mxu0
  %v2566 = vadd.f32 0.0, %v2565
  %v2567 = vpop.f32.mrf.mxu0
  %v2568 = vpop.f32.mrf.mxu0
  %v2569 = vadd.f32 0.0, %v2568
  %v2570 = vpop.f32.mrf.mxu0
  %2571 = vdwg.mxu0
  %v2572 = vmax.f32 %v2488, %v2558
  %v2573 = vmax.f32 %v2491, %v2561
  %v2574 = vmax.f32 %v2496, %v2566
  %v2575 = vmax.f32 %v2499, %v2569
  %v2576 = vpack.c.bf16 %v2573, %v2572
  %v2577 = vpack.c.bf16 %v2575, %v2574
  %v2578 = vld [vmem:[%s7] sm:$0xf]
  %v2579 = vld [vmem:[%s7 + $0x4] sm:$0xf]
  %v2580 = vld [vmem:[%s7 + $0x8] sm:$0xf]
  %v2581 = vld [vmem:[%s7 + $0xc] sm:$0xf]
  %v2582 = vld [vmem:[%s7 + $0x10] sm:$0xf]
  %v2583 = vld [vmem:[%s7 + $0x14] sm:$0xf]
  %v2584 = vld [vmem:[%s7 + $0x18] sm:$0xf]
  %v2585 = vld [vmem:[%s7 + $0x1c] sm:$0xf]
  %v2586 = vld [vmem:[%s7 + $0x20] sm:$0xf]
  %v2587 = vld [vmem:[%s7 + $0x24] sm:$0xf]
  %v2588 = vld [vmem:[%s7 + $0x28] sm:$0xf]
  %v2589 = vld [vmem:[%s7 + $0x2c] sm:$0xf]
  %v2590 = vld [vmem:[%s7 + $0x30] sm:$0xf]
  %v2591 = vld [vmem:[%s7 + $0x34] sm:$0xf]
  %v2592 = vld [vmem:[%s7 + $0x38] sm:$0xf]
  %v2593 = vld [vmem:[%s7 + $0x3c] sm:$0xf]
  %v2610 = vunpack.c.l.b16 %v2578
  %v2611 = vunpack.c.l.b16 %v2579
  %v2612 = vunpack.c.l.b16 %v2580
  %v2613 = vunpack.c.l.b16 %v2581
  %v2614 = vunpack.c.l.b16 %v2582
  %v2615 = vunpack.c.l.b16 %v2583
  %v2616 = vunpack.c.l.b16 %v2584
  %v2617 = vunpack.c.l.b16 %v2585
  %v2618 = vunpack.c.l.b16 %v2586
  %v2619 = vunpack.c.l.b16 %v2587
  %v2620 = vunpack.c.l.b16 %v2588
  %v2621 = vunpack.c.l.b16 %v2589
  %v2622 = vunpack.c.l.b16 %v2590
  %v2623 = vunpack.c.l.b16 %v2591
  %v2624 = vunpack.c.l.b16 %v2592
  %v2625 = vunpack.c.l.b16 %v2593
  %v2626 = vpack.c.b16 %v2611, %v2610
  %v2627 = vpack.c.b16 %v2613, %v2612
  %v2628 = vpack.c.b16 %v2615, %v2614
  %v2629 = vpack.c.b16 %v2617, %v2616
  %v2630 = vpack.c.b16 %v2619, %v2618
  %v2631 = vpack.c.b16 %v2621, %v2620
  %v2632 = vpack.c.b16 %v2623, %v2622
  %v2633 = vpack.c.b16 %v2625, %v2624
  %2642 = vmatprep.subr.bf16.mxu0 0
  %2643 = vmatpush1.bf16.msra.mxu0 %v2633
  %2644 = vmatprep.subr.bf16.mxu0 0
  %2645 = vmatpush1.bf16.msra.mxu0 %v2632
  %2646 = vmatprep.subr.bf16.mxu0 0
  %2647 = vmatpush1.bf16.msra.mxu0 %v2631
  %2648 = vmatprep.subr.bf16.mxu0 0
  %2649 = vmatpush1.bf16.msra.mxu0 %v2630
  %2650 = vmatprep.subr.bf16.mxu0 0
  %2651 = vmatpush1.bf16.msra.mxu0 %v2629
  %2652 = vmatprep.subr.bf16.mxu0 0
  %2653 = vmatpush1.bf16.msra.mxu0 %v2628
  %2654 = vmatprep.subr.bf16.mxu0 0
  %2655 = vmatpush1.bf16.msra.mxu0 %v2627
  %2656 = vmatprep.subr.bf16.mxu0 0
  %2657 = vmatpush1.bf16.msra.mxu0 %v2626
  %2658 = vmatprep.subr.bf16.mxu0 0
  %2659 = vmatpush2.bf16.msra.mxu0 0
  %2660 = vmatprep.subr.bf16.mxu0 0
  %2661 = vmatpush2.bf16.msra.mxu0 0
  %2662 = vmatprep.subr.bf16.mxu0 0
  %2663 = vmatpush2.bf16.msra.mxu0 0
  %2664 = vmatprep.subr.bf16.mxu0 0
  %2665 = vmatpush2.bf16.msra.mxu0 0
  %2666 = vmatprep.subr.bf16.mxu0 0
  %2667 = vmatpush2.bf16.msra.mxu0 0
  %2668 = vmatprep.subr.bf16.mxu0 0
  %2669 = vmatpush2.bf16.msra.mxu0 0
  %2670 = vmatprep.subr.bf16.mxu0 0
  %2671 = vmatpush2.bf16.msra.mxu0 0
  %2672 = vmatprep.subr.bf16.mxu0 0
  %2673 = vmatpush2.bf16.msra.mxu0 0
  %2674 = vmatprep.mubr.bf16.mxu0 0
  %2675 = vmatmul.mubr.bf16.gmra.mxu0 %v2576
  %v2676 = vpop.f32.mrf.mxu0
  %v2677 = vadd.f32 0.0, %v2676
  %v2678 = vpop.f32.mrf.mxu0
  %v2679 = vpop.f32.mrf.mxu0
  %v2680 = vadd.f32 0.0, %v2679
  %v2681 = vpop.f32.mrf.mxu0
  %2682 = vmatprep.mubr.bf16.mxu0 0
  %2683 = vmatmul.mubr.bf16.gmra.mxu0 %v2577
  %v2684 = vpop.f32.mrf.mxu0
  %v2685 = vadd.f32 0.0, %v2684
  %v2686 = vpop.f32.mrf.mxu0
  %v2687 = vpop.f32.mrf.mxu0
  %v2688 = vadd.f32 0.0, %v2687
  %v2689 = vpop.f32.mrf.mxu0
  %2690 = vdwg.mxu0
  %s2691 = scalar_lea.vmem %s7, 64
  %v2692 = vld [vmem:[%s2691] sm:$0xf]
  %v2693 = vld [vmem:[%s2691 + $0x4] sm:$0xf]
  %v2694 = vld [vmem:[%s2691 + $0x8] sm:$0xf]
  %v2695 = vld [vmem:[%s2691 + $0xc] sm:$0xf]
  %v2696 = vld [vmem:[%s2691 + $0x10] sm:$0xf]
  %v2697 = vld [vmem:[%s2691 + $0x14] sm:$0xf]
  %v2698 = vld [vmem:[%s2691 + $0x18] sm:$0xf]
  %v2699 = vld [vmem:[%s2691 + $0x1c] sm:$0xf]
  %v2700 = vld [vmem:[%s2691 + $0x20] sm:$0xf]
  %v2701 = vld [vmem:[%s2691 + $0x24] sm:$0xf]
  %v2702 = vld [vmem:[%s2691 + $0x28] sm:$0xf]
  %v2703 = vld [vmem:[%s2691 + $0x2c] sm:$0xf]
  %v2704 = vld [vmem:[%s2691 + $0x30] sm:$0xf]
  %v2705 = vld [vmem:[%s2691 + $0x34] sm:$0xf]
  %v2706 = vld [vmem:[%s2691 + $0x38] sm:$0xf]
  %v2707 = vld [vmem:[%s2691 + $0x3c] sm:$0xf]
  %v2724 = vunpack.c.l.b16 %v2692
  %v2725 = vunpack.c.l.b16 %v2693
  %v2726 = vunpack.c.l.b16 %v2694
  %v2727 = vunpack.c.l.b16 %v2695
  %v2728 = vunpack.c.l.b16 %v2696
  %v2729 = vunpack.c.l.b16 %v2697
  %v2730 = vunpack.c.l.b16 %v2698
  %v2731 = vunpack.c.l.b16 %v2699
  %v2732 = vunpack.c.l.b16 %v2700
  %v2733 = vunpack.c.l.b16 %v2701
  %v2734 = vunpack.c.l.b16 %v2702
  %v2735 = vunpack.c.l.b16 %v2703
  %v2736 = vunpack.c.l.b16 %v2704
  %v2737 = vunpack.c.l.b16 %v2705
  %v2738 = vunpack.c.l.b16 %v2706
  %v2739 = vunpack.c.l.b16 %v2707
  %v2740 = vpack.c.b16 %v2725, %v2724
  %v2741 = vpack.c.b16 %v2727, %v2726
  %v2742 = vpack.c.b16 %v2729, %v2728
  %v2743 = vpack.c.b16 %v2731, %v2730
  %v2744 = vpack.c.b16 %v2733, %v2732
  %v2745 = vpack.c.b16 %v2735, %v2734
  %v2746 = vpack.c.b16 %v2737, %v2736
  %v2747 = vpack.c.b16 %v2739, %v2738
  %2756 = vmatprep.subr.bf16.mxu0 0
  %2757 = vmatpush1.bf16.msra.mxu0 %v2747
  %2758 = vmatprep.subr.bf16.mxu0 0
  %2759 = vmatpush1.bf16.msra.mxu0 %v2746
  %2760 = vmatprep.subr.bf16.mxu0 0
  %2761 = vmatpush1.bf16.msra.mxu0 %v2745
  %2762 = vmatprep.subr.bf16.mxu0 0
  %2763 = vmatpush1.bf16.msra.mxu0 %v2744
  %2764 = vmatprep.subr.bf16.mxu0 0
  %2765 = vmatpush1.bf16.msra.mxu0 %v2743
  %2766 = vmatprep.subr.bf16.mxu0 0
  %2767 = vmatpush1.bf16.msra.mxu0 %v2742
  %2768 = vmatprep.subr.bf16.mxu0 0
  %2769 = vmatpush1.bf16.msra.mxu0 %v2741
  %2770 = vmatprep.subr.bf16.mxu0 0
  %2771 = vmatpush1.bf16.msra.mxu0 %v2740
  %2772 = vmatprep.subr.bf16.mxu0 0
  %2773 = vmatpush2.bf16.msra.mxu0 0
  %2774 = vmatprep.subr.bf16.mxu0 0
  %2775 = vmatpush2.bf16.msra.mxu0 0
  %2776 = vmatprep.subr.bf16.mxu0 0
  %2777 = vmatpush2.bf16.msra.mxu0 0
  %2778 = vmatprep.subr.bf16.mxu0 0
  %2779 = vmatpush2.bf16.msra.mxu0 0
  %2780 = vmatprep.subr.bf16.mxu0 0
  %2781 = vmatpush2.bf16.msra.mxu0 0
  %2782 = vmatprep.subr.bf16.mxu0 0
  %2783 = vmatpush2.bf16.msra.mxu0 0
  %2784 = vmatprep.subr.bf16.mxu0 0
  %2785 = vmatpush2.bf16.msra.mxu0 0
  %2786 = vmatprep.subr.bf16.mxu0 0
  %2787 = vmatpush2.bf16.msra.mxu0 0
  %2788 = vmatprep.mubr.bf16.mxu0 0
  %2789 = vmatmul.mubr.bf16.gmra.mxu0 %v2576
  %v2790 = vpop.f32.mrf.mxu0
  %v2791 = vadd.f32 0.0, %v2790
  %v2792 = vpop.f32.mrf.mxu0
  %v2793 = vpop.f32.mrf.mxu0
  %v2794 = vadd.f32 0.0, %v2793
  %v2795 = vpop.f32.mrf.mxu0
  %2796 = vmatprep.mubr.bf16.mxu0 0
  %2797 = vmatmul.mubr.bf16.gmra.mxu0 %v2577
  %v2798 = vpop.f32.mrf.mxu0
  %v2799 = vadd.f32 0.0, %v2798
  %v2800 = vpop.f32.mrf.mxu0
  %v2801 = vpop.f32.mrf.mxu0
  %v2802 = vadd.f32 0.0, %v2801
  %v2803 = vpop.f32.mrf.mxu0
  %2804 = vdwg.mxu0
  %v2805 = vmax.f32 %v2677, %v2791
  %v2806 = vmax.f32 %v2680, %v2794
  %v2807 = vmax.f32 %v2685, %v2799
  %v2808 = vmax.f32 %v2688, %v2802
  %v2809 = vpack.c.bf16 %v2806, %v2805
  %v2810 = vpack.c.bf16 %v2808, %v2807
  %v2811 = vld [vmem:[%s8] sm:$0xf]
  %vm2812 = vcmask 261120
  %v2814 = vsel %vm2812, %v2811, 0
  %2816 = vmatprep.subr.bf16.mxu0 0
  %2817 = vmatpush1.bf16.msra.mxu0 0
  %2818 = vmatprep.subr.bf16.mxu0 0
  %2819 = vmatpush1.bf16.msra.mxu0 0
  %2820 = vmatprep.subr.bf16.mxu0 0
  %2821 = vmatpush1.bf16.msra.mxu0 0
  %2822 = vmatprep.subr.bf16.mxu0 0
  %2823 = vmatpush1.bf16.msra.mxu0 0
  %2824 = vmatprep.subr.bf16.mxu0 0
  %2825 = vmatpush1.bf16.msra.mxu0 0
  %2826 = vmatprep.subr.bf16.mxu0 0
  %2827 = vmatpush1.bf16.msra.mxu0 0
  %2828 = vmatprep.subr.bf16.mxu0 0
  %2829 = vmatpush1.bf16.msra.mxu0 %v2810
  %2830 = vmatprep.subr.bf16.mxu0 0
  %2831 = vmatpush1.bf16.msra.mxu0 %v2809
  %2832 = vmatprep.subr.bf16.mxu0 0
  %2833 = vmatpush2.bf16.msra.mxu0 0
  %2834 = vmatprep.subr.bf16.mxu0 0
  %2835 = vmatpush2.bf16.msra.mxu0 0
  %2836 = vmatprep.subr.bf16.mxu0 0
  %2837 = vmatpush2.bf16.msra.mxu0 0
  %2838 = vmatprep.subr.bf16.mxu0 0
  %2839 = vmatpush2.bf16.msra.mxu0 0
  %2840 = vmatprep.subr.bf16.mxu0 0
  %2841 = vmatpush2.bf16.msra.mxu0 0
  %2842 = vmatprep.subr.bf16.mxu0 0
  %2843 = vmatpush2.bf16.msra.mxu0 0
  %2844 = vmatprep.subr.bf16.mxu0 0
  %2845 = vmatpush2.bf16.msra.mxu0 0
  %2846 = vmatprep.subr.bf16.mxu0 0
  %2847 = vmatpush2.bf16.msra.mxu0 0
  %2848 = vmatprep.mubr.bf16.mxu0 0
  %2849 = vmatmul.mubr.bf16.gmra.mxu0 %v2814
  %v2850 = vpop.f32.mrf.mxu0
  %v2851 = vadd.f32 0.0, %v2850
  %v2852 = vpop.f32.mrf.mxu0
  %v2853 = vpop.f32.mrf.mxu0
  %v2854 = vpop.f32.mrf.mxu0
  %2855 = vdwg.mxu0
  %v2856 = vpack.c.bf16 %v2851, %v2851
  %s2857 = scalar_lea.vmem %s8, 4
  %v2858 = vld [vmem:[%s2857] sm:$0xf]
  %v2860 = vsel %vm2812, %v2858, 0
  %2862 = vmatprep.subr.bf16.mxu0 0
  %2863 = vmatpush1.bf16.msra.mxu0 0
  %2864 = vmatprep.subr.bf16.mxu0 0
  %2865 = vmatpush1.bf16.msra.mxu0 0
  %2866 = vmatprep.subr.bf16.mxu0 0
  %2867 = vmatpush1.bf16.msra.mxu0 0
  %2868 = vmatprep.subr.bf16.mxu0 0
  %2869 = vmatpush1.bf16.msra.mxu0 0
  %2870 = vmatprep.subr.bf16.mxu0 0
  %2871 = vmatpush1.bf16.msra.mxu0 0
  %2872 = vmatprep.subr.bf16.mxu0 0
  %2873 = vmatpush1.bf16.msra.mxu0 0
  %2874 = vmatprep.subr.bf16.mxu0 0
  %2875 = vmatpush1.bf16.msra.mxu0 %v2810
  %2876 = vmatprep.subr.bf16.mxu0 0
  %2877 = vmatpush1.bf16.msra.mxu0 %v2809
  %2878 = vmatprep.subr.bf16.mxu0 0
  %2879 = vmatpush2.bf16.msra.mxu0 0
  %2880 = vmatprep.subr.bf16.mxu0 0
  %2881 = vmatpush2.bf16.msra.mxu0 0
  %2882 = vmatprep.subr.bf16.mxu0 0
  %2883 = vmatpush2.bf16.msra.mxu0 0
  %2884 = vmatprep.subr.bf16.mxu0 0
  %2885 = vmatpush2.bf16.msra.mxu0 0
  %2886 = vmatprep.subr.bf16.mxu0 0
  %2887 = vmatpush2.bf16.msra.mxu0 0
  %2888 = vmatprep.subr.bf16.mxu0 0
  %2889 = vmatpush2.bf16.msra.mxu0 0
  %2890 = vmatprep.subr.bf16.mxu0 0
  %2891 = vmatpush2.bf16.msra.mxu0 0
  %2892 = vmatprep.subr.bf16.mxu0 0
  %2893 = vmatpush2.bf16.msra.mxu0 0
  %2894 = vmatprep.mubr.bf16.mxu0 0
  %2895 = vmatmul.mubr.bf16.gmra.mxu0 %v2860
  %v2896 = vpop.f32.mrf.mxu0
  %v2897 = vadd.f32 0.0, %v2896
  %v2898 = vpop.f32.mrf.mxu0
  %v2899 = vpop.f32.mrf.mxu0
  %v2900 = vpop.f32.mrf.mxu0
  %2901 = vdwg.mxu0
  %v2902 = vpack.c.bf16 %v2897, %v2897
  %s2903 = scalar_lea.vmem %s8, 8
  %v2904 = vld [vmem:[%s2903] sm:$0xf]
  %v2906 = vsel %vm2812, %v2904, 0
  %2908 = vmatprep.subr.bf16.mxu0 0
  %2909 = vmatpush1.bf16.msra.mxu0 0
  %2910 = vmatprep.subr.bf16.mxu0 0
  %2911 = vmatpush1.bf16.msra.mxu0 0
  %2912 = vmatprep.subr.bf16.mxu0 0
  %2913 = vmatpush1.bf16.msra.mxu0 0
  %2914 = vmatprep.subr.bf16.mxu0 0
  %2915 = vmatpush1.bf16.msra.mxu0 0
  %2916 = vmatprep.subr.bf16.mxu0 0
  %2917 = vmatpush1.bf16.msra.mxu0 0
  %2918 = vmatprep.subr.bf16.mxu0 0
  %2919 = vmatpush1.bf16.msra.mxu0 0
  %2920 = vmatprep.subr.bf16.mxu0 0
  %2921 = vmatpush1.bf16.msra.mxu0 %v2810
  %2922 = vmatprep.subr.bf16.mxu0 0
  %2923 = vmatpush1.bf16.msra.mxu0 %v2809
  %2924 = vmatprep.subr.bf16.mxu0 0
  %2925 = vmatpush2.bf16.msra.mxu0 0
  %2926 = vmatprep.subr.bf16.mxu0 0
  %2927 = vmatpush2.bf16.msra.mxu0 0
  %2928 = vmatprep.subr.bf16.mxu0 0
  %2929 = vmatpush2.bf16.msra.mxu0 0
  %2930 = vmatprep.subr.bf16.mxu0 0
  %2931 = vmatpush2.bf16.msra.mxu0 0
  %2932 = vmatprep.subr.bf16.mxu0 0
  %2933 = vmatpush2.bf16.msra.mxu0 0
  %2934 = vmatprep.subr.bf16.mxu0 0
  %2935 = vmatpush2.bf16.msra.mxu0 0
  %2936 = vmatprep.subr.bf16.mxu0 0
  %2937 = vmatpush2.bf16.msra.mxu0 0
  %2938 = vmatprep.subr.bf16.mxu0 0
  %2939 = vmatpush2.bf16.msra.mxu0 0
  %2940 = vmatprep.mubr.bf16.mxu0 0
  %2941 = vmatmul.mubr.bf16.gmra.mxu0 %v2906
  %v2942 = vpop.f32.mrf.mxu0
  %v2943 = vadd.f32 0.0, %v2942
  %v2944 = vpop.f32.mrf.mxu0
  %v2945 = vpop.f32.mrf.mxu0
  %v2946 = vpop.f32.mrf.mxu0
  %2947 = vdwg.mxu0
  %v2948 = vpack.c.bf16 %v2943, %v2943
  %s2949 = scalar_lea.vmem %s8, 12
  %v2950 = vld [vmem:[%s2949] sm:$0xf]
  %v2952 = vsel %vm2812, %v2950, 0
  %2954 = vmatprep.subr.bf16.mxu0 0
  %2955 = vmatpush1.bf16.msra.mxu0 0
  %2956 = vmatprep.subr.bf16.mxu0 0
  %2957 = vmatpush1.bf16.msra.mxu0 0
  %2958 = vmatprep.subr.bf16.mxu0 0
  %2959 = vmatpush1.bf16.msra.mxu0 0
  %2960 = vmatprep.subr.bf16.mxu0 0
  %2961 = vmatpush1.bf16.msra.mxu0 0
  %2962 = vmatprep.subr.bf16.mxu0 0
  %2963 = vmatpush1.bf16.msra.mxu0 0
  %2964 = vmatprep.subr.bf16.mxu0 0
  %2965 = vmatpush1.bf16.msra.mxu0 0
  %2966 = vmatprep.subr.bf16.mxu0 0
  %2967 = vmatpush1.bf16.msra.mxu0 %v2810
  %2968 = vmatprep.subr.bf16.mxu0 0
  %2969 = vmatpush1.bf16.msra.mxu0 %v2809
  %2970 = vmatprep.subr.bf16.mxu0 0
  %2971 = vmatpush2.bf16.msra.mxu0 0
  %2972 = vmatprep.subr.bf16.mxu0 0
  %2973 = vmatpush2.bf16.msra.mxu0 0
  %2974 = vmatprep.subr.bf16.mxu0 0
  %2975 = vmatpush2.bf16.msra.mxu0 0
  %2976 = vmatprep.subr.bf16.mxu0 0
  %2977 = vmatpush2.bf16.msra.mxu0 0
  %2978 = vmatprep.subr.bf16.mxu0 0
  %2979 = vmatpush2.bf16.msra.mxu0 0
  %2980 = vmatprep.subr.bf16.mxu0 0
  %2981 = vmatpush2.bf16.msra.mxu0 0
  %2982 = vmatprep.subr.bf16.mxu0 0
  %2983 = vmatpush2.bf16.msra.mxu0 0
  %2984 = vmatprep.subr.bf16.mxu0 0
  %2985 = vmatpush2.bf16.msra.mxu0 0
  %2986 = vmatprep.mubr.bf16.mxu0 0
  %2987 = vmatmul.mubr.bf16.gmra.mxu0 %v2952
  %v2988 = vpop.f32.mrf.mxu0
  %v2989 = vadd.f32 0.0, %v2988
  %v2990 = vpop.f32.mrf.mxu0
  %v2991 = vpop.f32.mrf.mxu0
  %v2992 = vpop.f32.mrf.mxu0
  %2993 = vdwg.mxu0
  %v2994 = vpack.c.bf16 %v2989, %v2989
  %v2995 = vld [vmem:[%s9] sm:$0xf]
  %v2996 = vld [vmem:[%s9 + $0x4] sm:$0xf]
  %v2997 = vld [vmem:[%s9 + $0x8] sm:$0xf]
  %v2998 = vld [vmem:[%s9 + $0xc] sm:$0xf]
  %v2999 = vld [vmem:[%s9 + $0x10] sm:$0xf]
  %v3000 = vld [vmem:[%s9 + $0x14] sm:$0xf]
  %v3001 = vld [vmem:[%s9 + $0x18] sm:$0xf]
  %v3002 = vld [vmem:[%s9 + $0x1c] sm:$0xf]
  %v3003 = vld [vmem:[%s9 + $0x20] sm:$0xf]
  %v3004 = vld [vmem:[%s9 + $0x24] sm:$0xf]
  %v3005 = vld [vmem:[%s9 + $0x28] sm:$0xf]
  %v3006 = vld [vmem:[%s9 + $0x2c] sm:$0xf]
  %v3007 = vld [vmem:[%s9 + $0x30] sm:$0xf]
  %v3008 = vld [vmem:[%s9 + $0x34] sm:$0xf]
  %v3009 = vld [vmem:[%s9 + $0x38] sm:$0xf]
  %v3010 = vld [vmem:[%s9 + $0x3c] sm:$0xf]
  %v3011 = vld [vmem:[%s9 + $0x40] sm:$0xf]
  %v3012 = vld [vmem:[%s9 + $0x44] sm:$0xf]
  %v3013 = vld [vmem:[%s9 + $0x48] sm:$0xf]
  %v3014 = vld [vmem:[%s9 + $0x4c] sm:$0xf]
  %v3015 = vld [vmem:[%s9 + $0x50] sm:$0xf]
  %v3016 = vld [vmem:[%s9 + $0x54] sm:$0xf]
  %v3017 = vld [vmem:[%s9 + $0x58] sm:$0xf]
  %v3018 = vld [vmem:[%s9 + $0x5c] sm:$0xf]
  %v3019 = vld [vmem:[%s9 + $0x60] sm:$0xf]
  %v3020 = vld [vmem:[%s9 + $0x64] sm:$0xf]
  %v3021 = vld [vmem:[%s9 + $0x68] sm:$0xf]
  %v3022 = vld [vmem:[%s9 + $0x6c] sm:$0xf]
  %v3023 = vld [vmem:[%s9 + $0x70] sm:$0xf]
  %v3024 = vld [vmem:[%s9 + $0x74] sm:$0xf]
  %v3025 = vld [vmem:[%s9 + $0x78] sm:$0xf]
  %v3026 = vld [vmem:[%s9 + $0x7c] sm:$0xf]
  %v3027 = vld [vmem:[%s9 + $0x80] sm:$0xf]
  %v3028 = vld [vmem:[%s9 + $0x84] sm:$0xf]
  %v3029 = vld [vmem:[%s9 + $0x88] sm:$0xf]
  %v3030 = vld [vmem:[%s9 + $0x8c] sm:$0xf]
  %v3031 = vld [vmem:[%s9 + $0x90] sm:$0xf]
  %v3032 = vld [vmem:[%s9 + $0x94] sm:$0xf]
  %v3033 = vld [vmem:[%s9 + $0x98] sm:$0xf]
  %v3034 = vld [vmem:[%s9 + $0x9c] sm:$0xf]
  %v3035 = vld [vmem:[%s9 + $0xa0] sm:$0xf]
  %v3036 = vld [vmem:[%s9 + $0xa4] sm:$0xf]
  %v3037 = vld [vmem:[%s9 + $0xa8] sm:$0xf]
  %v3038 = vld [vmem:[%s9 + $0xac] sm:$0xf]
  %v3039 = vld [vmem:[%s9 + $0xb0] sm:$0xf]
  %v3040 = vld [vmem:[%s9 + $0xb4] sm:$0xf]
  %v3041 = vld [vmem:[%s9 + $0xb8] sm:$0xf]
  %v3042 = vld [vmem:[%s9 + $0xbc] sm:$0xf]
  %v3043 = vld [vmem:[%s9 + $0xc0] sm:$0xf]
  %v3044 = vld [vmem:[%s9 + $0xc4] sm:$0xf]
  %v3045 = vld [vmem:[%s9 + $0xc8] sm:$0xf]
  %v3046 = vld [vmem:[%s9 + $0xcc] sm:$0xf]
  %v3047 = vld [vmem:[%s9 + $0xd0] sm:$0xf]
  %v3048 = vld [vmem:[%s9 + $0xd4] sm:$0xf]
  %v3049 = vld [vmem:[%s9 + $0xd8] sm:$0xf]
  %v3050 = vld [vmem:[%s9 + $0xdc] sm:$0xf]
  %v3051 = vld [vmem:[%s9 + $0xe0] sm:$0xf]
  %v3052 = vld [vmem:[%s9 + $0xe4] sm:$0xf]
  %v3053 = vld [vmem:[%s9 + $0xe8] sm:$0xf]
  %v3054 = vld [vmem:[%s9 + $0xec] sm:$0xf]
  %v3055 = vld [vmem:[%s9 + $0xf0] sm:$0xf]
  %v3056 = vld [vmem:[%s9 + $0xf4] sm:$0xf]
  %v3057 = vld [vmem:[%s9 + $0xf8] sm:$0xf]
  %v3058 = vld [vmem:[%s9 + $0xfc] sm:$0xf]
  %v3059 = vlaneseq
  %v3060 = vshrl.u32 %v3059, 7
  %v3061 = vsub.s32 2, %v3060
  %v3062 = vrot.slane %v42, %v3061
  %v3127 = vunpack.c.l.b16 %v2995
  %v3128 = vunpack.c.l.b16 %v2996
  %v3129 = vunpack.c.l.b16 %v2997
  %v3130 = vunpack.c.l.b16 %v2998
  %v3131 = vunpack.c.l.b16 %v2999
  %v3132 = vunpack.c.l.b16 %v3000
  %v3133 = vunpack.c.l.b16 %v3001
  %v3134 = vunpack.c.l.b16 %v3002
  %v3135 = vunpack.c.l.b16 %v3003
  %v3136 = vunpack.c.l.b16 %v3004
  %v3137 = vunpack.c.l.b16 %v3005
  %v3138 = vunpack.c.l.b16 %v3006
  %v3139 = vunpack.c.l.b16 %v3007
  %v3140 = vunpack.c.l.b16 %v3008
  %v3141 = vunpack.c.l.b16 %v3009
  %v3142 = vunpack.c.l.b16 %v3010
  %v3143 = vunpack.c.l.b16 %v3011
  %v3144 = vunpack.c.l.b16 %v3012
  %v3145 = vunpack.c.l.b16 %v3013
  %v3146 = vunpack.c.l.b16 %v3014
  %v3147 = vunpack.c.l.b16 %v3015
  %v3148 = vunpack.c.l.b16 %v3016
  %v3149 = vunpack.c.l.b16 %v3017
  %v3150 = vunpack.c.l.b16 %v3018
  %v3151 = vunpack.c.l.b16 %v3019
  %v3152 = vunpack.c.l.b16 %v3020
  %v3153 = vunpack.c.l.b16 %v3021
  %v3154 = vunpack.c.l.b16 %v3022
  %v3155 = vunpack.c.l.b16 %v3023
  %v3156 = vunpack.c.l.b16 %v3024
  %v3157 = vunpack.c.l.b16 %v3025
  %v3158 = vunpack.c.l.b16 %v3026
  %v3159 = vunpack.c.l.b16 %v3027
  %v3160 = vunpack.c.l.b16 %v3028
  %v3161 = vunpack.c.l.b16 %v3029
  %v3162 = vunpack.c.l.b16 %v3030
  %v3163 = vunpack.c.l.b16 %v3031
  %v3164 = vunpack.c.l.b16 %v3032
  %v3165 = vunpack.c.l.b16 %v3033
  %v3166 = vunpack.c.l.b16 %v3034
  %v3167 = vunpack.c.l.b16 %v3035
  %v3168 = vunpack.c.l.b16 %v3036
  %v3169 = vunpack.c.l.b16 %v3037
  %v3170 = vunpack.c.l.b16 %v3038
  %v3171 = vunpack.c.l.b16 %v3039
  %v3172 = vunpack.c.l.b16 %v3040
  %v3173 = vunpack.c.l.b16 %v3041
  %v3174 = vunpack.c.l.b16 %v3042
  %v3175 = vunpack.c.l.b16 %v3043
  %v3176 = vunpack.c.l.b16 %v3044
  %v3177 = vunpack.c.l.b16 %v3045
  %v3178 = vunpack.c.l.b16 %v3046
  %v3179 = vunpack.c.l.b16 %v3047
  %v3180 = vunpack.c.l.b16 %v3048
  %v3181 = vunpack.c.l.b16 %v3049
  %v3182 = vunpack.c.l.b16 %v3050
  %v3183 = vunpack.c.l.b16 %v3051
  %v3184 = vunpack.c.l.b16 %v3052
  %v3185 = vunpack.c.l.b16 %v3053
  %v3186 = vunpack.c.l.b16 %v3054
  %v3187 = vunpack.c.l.b16 %v3055
  %v3188 = vunpack.c.l.b16 %v3056
  %v3189 = vunpack.c.l.b16 %v3057
  %v3190 = vunpack.c.l.b16 %v3058
  %v3191 = vpack.c.b16 %v3128, %v3127
  %v3192 = vpack.c.b16 %v3130, %v3129
  %v3193 = vpack.c.b16 %v3132, %v3131
  %v3194 = vpack.c.b16 %v3134, %v3133
  %v3195 = vpack.c.b16 %v3136, %v3135
  %v3196 = vpack.c.b16 %v3138, %v3137
  %v3197 = vpack.c.b16 %v3140, %v3139
  %v3198 = vpack.c.b16 %v3142, %v3141
  %v3199 = vpack.c.b16 %v3144, %v3143
  %v3200 = vpack.c.b16 %v3146, %v3145
  %v3201 = vpack.c.b16 %v3148, %v3147
  %v3202 = vpack.c.b16 %v3150, %v3149
  %v3203 = vpack.c.b16 %v3152, %v3151
  %v3204 = vpack.c.b16 %v3154, %v3153
  %v3205 = vpack.c.b16 %v3156, %v3155
  %v3206 = vpack.c.b16 %v3158, %v3157
  %v3207 = vpack.c.b16 %v3160, %v3159
  %v3208 = vpack.c.b16 %v3162, %v3161
  %v3209 = vpack.c.b16 %v3164, %v3163
  %v3210 = vpack.c.b16 %v3166, %v3165
  %v3211 = vpack.c.b16 %v3168, %v3167
  %v3212 = vpack.c.b16 %v3170, %v3169
  %v3213 = vpack.c.b16 %v3172, %v3171
  %v3214 = vpack.c.b16 %v3174, %v3173
  %v3215 = vpack.c.b16 %v3176, %v3175
  %v3216 = vpack.c.b16 %v3178, %v3177
  %v3217 = vpack.c.b16 %v3180, %v3179
  %v3218 = vpack.c.b16 %v3182, %v3181
  %v3219 = vpack.c.b16 %v3184, %v3183
  %v3220 = vpack.c.b16 %v3186, %v3185
  %v3221 = vpack.c.b16 %v3188, %v3187
  %v3222 = vpack.c.b16 %v3190, %v3189
  %3255 = vmatprep.subr.bf16.mxu0 0
  %3256 = vmatpush1.bf16.msra.mxu0 %v3198
  %3257 = vmatprep.subr.bf16.mxu0 0
  %3258 = vmatpush1.bf16.msra.mxu0 %v3197
  %3259 = vmatprep.subr.bf16.mxu0 0
  %3260 = vmatpush1.bf16.msra.mxu0 %v3196
  %3261 = vmatprep.subr.bf16.mxu0 0
  %3262 = vmatpush1.bf16.msra.mxu0 %v3195
  %3263 = vmatprep.subr.bf16.mxu0 0
  %3264 = vmatpush1.bf16.msra.mxu0 %v3194
  %3265 = vmatprep.subr.bf16.mxu0 0
  %3266 = vmatpush1.bf16.msra.mxu0 %v3193
  %3267 = vmatprep.subr.bf16.mxu0 0
  %3268 = vmatpush1.bf16.msra.mxu0 %v3192
  %3269 = vmatprep.subr.bf16.mxu0 0
  %3270 = vmatpush1.bf16.msra.mxu0 %v3191
  %3271 = vmatprep.subr.bf16.mxu0 0
  %3272 = vmatpush2.bf16.msra.mxu0 %v3206
  %3273 = vmatprep.subr.bf16.mxu0 0
  %3274 = vmatpush2.bf16.msra.mxu0 %v3205
  %3275 = vmatprep.subr.bf16.mxu0 0
  %3276 = vmatpush2.bf16.msra.mxu0 %v3204
  %3277 = vmatprep.subr.bf16.mxu0 0
  %3278 = vmatpush2.bf16.msra.mxu0 %v3203
  %3279 = vmatprep.subr.bf16.mxu0 0
  %3280 = vmatpush2.bf16.msra.mxu0 %v3202
  %3281 = vmatprep.subr.bf16.mxu0 0
  %3282 = vmatpush2.bf16.msra.mxu0 %v3201
  %3283 = vmatprep.subr.bf16.mxu0 0
  %3284 = vmatpush2.bf16.msra.mxu0 %v3200
  %3285 = vmatprep.subr.bf16.mxu0 0
  %3286 = vmatpush2.bf16.msra.mxu0 %v3199
  %3287 = vmatprep.mubr.bf16.mxu0 %v2902
  %3288 = vmatmul.mubr.bf16.gmra.mxu0 %v2856
  %v3289 = vpop.f32.mrf.mxu0
  %v3290 = vadd.f32 %v3062, %v3289
  %v3291 = vpop.f32.mrf.mxu0
  %v3292 = vpop.f32.mrf.mxu0
  %v3293 = vpop.f32.mrf.mxu0
  %3294 = vdwg.mxu0
  %3295 = vmatprep.subr.bf16.mxu0 0
  %3296 = vmatpush1.bf16.msra.mxu0 %v3214
  %3297 = vmatprep.subr.bf16.mxu0 0
  %3298 = vmatpush1.bf16.msra.mxu0 %v3213
  %3299 = vmatprep.subr.bf16.mxu0 0
  %3300 = vmatpush1.bf16.msra.mxu0 %v3212
  %3301 = vmatprep.subr.bf16.mxu0 0
  %3302 = vmatpush1.bf16.msra.mxu0 %v3211
  %3303 = vmatprep.subr.bf16.mxu0 0
  %3304 = vmatpush1.bf16.msra.mxu0 %v3210
  %3305 = vmatprep.subr.bf16.mxu0 0
  %3306 = vmatpush1.bf16.msra.mxu0 %v3209
  %3307 = vmatprep.subr.bf16.mxu0 0
  %3308 = vmatpush1.bf16.msra.mxu0 %v3208
  %3309 = vmatprep.subr.bf16.mxu0 0
  %3310 = vmatpush1.bf16.msra.mxu0 %v3207
  %3311 = vmatprep.subr.bf16.mxu0 0
  %3312 = vmatpush2.bf16.msra.mxu0 %v3222
  %3313 = vmatprep.subr.bf16.mxu0 0
  %3314 = vmatpush2.bf16.msra.mxu0 %v3221
  %3315 = vmatprep.subr.bf16.mxu0 0
  %3316 = vmatpush2.bf16.msra.mxu0 %v3220
  %3317 = vmatprep.subr.bf16.mxu0 0
  %3318 = vmatpush2.bf16.msra.mxu0 %v3219
  %3319 = vmatprep.subr.bf16.mxu0 0
  %3320 = vmatpush2.bf16.msra.mxu0 %v3218
  %3321 = vmatprep.subr.bf16.mxu0 0
  %3322 = vmatpush2.bf16.msra.mxu0 %v3217
  %3323 = vmatprep.subr.bf16.mxu0 0
  %3324 = vmatpush2.bf16.msra.mxu0 %v3216
  %3325 = vmatprep.subr.bf16.mxu0 0
  %3326 = vmatpush2.bf16.msra.mxu0 %v3215
  %3327 = vmatprep.mubr.bf16.mxu0 %v2994
  %3328 = vmatmul.mubr.bf16.gmra.mxu0 %v2948
  %v3329 = vpop.f32.mrf.mxu0
  %v3330 = vadd.f32 %v3290, %v3329
  %v3331 = vpop.f32.mrf.mxu0
  %v3332 = vpop.f32.mrf.mxu0
  %v3333 = vpop.f32.mrf.mxu0
  %3334 = vdwg.mxu0
  %v3335 = vmax.f32 %v3330, 0.0
  %v3336 = vpack.c.bf16 %v3335, %v3335
  %v3337 = vld [vmem:[%s10] sm:$0xf]
  %v3338 = vld [vmem:[%s10 + $0x4] sm:$0xf]
  %v3339 = vld [vmem:[%s10 + $0x8] sm:$0xf]
  %v3340 = vld [vmem:[%s10 + $0xc] sm:$0xf]
  %v3341 = vlaneseq
  %v3342 = vshrl.u32 %v3341, 7
  %v3343 = vsub.s32 3, %v3342
  %v3344 = vrot.slane %v42, %v3343
  %v3349 = vunpack.c.l.b16 %v3337
  %v3350 = vunpack.c.l.b16 %v3338
  %v3351 = vunpack.c.l.b16 %v3339
  %v3352 = vunpack.c.l.b16 %v3340
  %v3353 = vpack.c.b16 %v3350, %v3349
  %v3354 = vpack.c.b16 %v3352, %v3351
  %v3358 = vsel %vm2812, %v3336, 0
  %3360 = vmatprep.subr.bf16.mxu0 0
  %3361 = vmatpush1.bf16.msra.mxu0 0
  %3362 = vmatprep.subr.bf16.mxu0 0
  %3363 = vmatpush1.bf16.msra.mxu0 0
  %3364 = vmatprep.subr.bf16.mxu0 0
  %3365 = vmatpush1.bf16.msra.mxu0 0
  %3366 = vmatprep.subr.bf16.mxu0 0
  %3367 = vmatpush1.bf16.msra.mxu0 0
  %3368 = vmatprep.subr.bf16.mxu0 0
  %3369 = vmatpush1.bf16.msra.mxu0 0
  %3370 = vmatprep.subr.bf16.mxu0 0
  %3371 = vmatpush1.bf16.msra.mxu0 0
  %3372 = vmatprep.subr.bf16.mxu0 0
  %3373 = vmatpush1.bf16.msra.mxu0 %v3354
  %3374 = vmatprep.subr.bf16.mxu0 0
  %3375 = vmatpush1.bf16.msra.mxu0 %v3353
  %3376 = vmatprep.subr.bf16.mxu0 0
  %3377 = vmatpush2.bf16.msra.mxu0 0
  %3378 = vmatprep.subr.bf16.mxu0 0
  %3379 = vmatpush2.bf16.msra.mxu0 0
  %3380 = vmatprep.subr.bf16.mxu0 0
  %3381 = vmatpush2.bf16.msra.mxu0 0
  %3382 = vmatprep.subr.bf16.mxu0 0
  %3383 = vmatpush2.bf16.msra.mxu0 0
  %3384 = vmatprep.subr.bf16.mxu0 0
  %3385 = vmatpush2.bf16.msra.mxu0 0
  %3386 = vmatprep.subr.bf16.mxu0 0
  %3387 = vmatpush2.bf16.msra.mxu0 0
  %3388 = vmatprep.subr.bf16.mxu0 0
  %3389 = vmatpush2.bf16.msra.mxu0 0
  %3390 = vmatprep.subr.bf16.mxu0 0
  %3391 = vmatpush2.bf16.msra.mxu0 0
  %3392 = vmatprep.mubr.bf16.mxu0 0
  %3393 = vmatmul.mubr.bf16.gmra.mxu0 %v3358
  %v3394 = vpop.f32.mrf.mxu0
  %v3395 = vadd.f32 %v3344, %v3394
  %v3396 = vpop.f32.mrf.mxu0
  %v3397 = vpop.f32.mrf.mxu0
  %v3398 = vpop.f32.mrf.mxu0
  %3399 = vdwg.mxu0
  %v3400 = vmax.f32 %v3395, 0.0
  %3401 = vst [vmem:[%s12] sm:$0xff] %v3400
  // Predicated region
  $region50: #{cnn_net0_forward.1} parent=0 // pred_check
    _
  $region51: #{cnn_net0_forward.1} parent=0 // pred_check_branch
    %3403 = sbr.rel (0) target = $region53
  $region52: #{cnn_net0_forward.1} parent=0 // pred_region
    _
  $region53: #{cnn_net0_forward.1} parent=0 // pred_fallthru
    _
  // Predicated region
  $region54: #{cnn_net0_forward.1} parent=0 // pred_check
    _
  $region55: #{cnn_net0_forward.1} parent=0 // pred_check_branch
    %3405 = sbr.rel (0) target = $region57
  $region56: #{cnn_net0_forward.1} parent=0 // pred_region
    _
  $region57: #{cnn_net0_forward.1} parent=0 // pred_fallthru
    _

</llo_original>
